<compile_context>
chip_gen: v7x
topology: tpu7x:2x2x1
jax: 0.10.0
libtpu: 0.0.40
codegen_flags: <defaults>
</compile_context>

<pallas_src>
import functools
import math

import jax
import jax.numpy as jnp
from jax import lax
from jax.experimental import pallas as pl
from jax.experimental.pallas import tpu as pltpu


# ------------------------------ fused kernel ------------------------------- #

def _qcnn_fused_kernel(x_ref, w1_ref, b1_ref, w2_ref, b2_ref,
                       w3_ref, b3_ref, w4_ref, b4_ref, o_ref):
    """One batch tile through conv1/conv2 (as Toeplitz matmuls), fc1, fc2.

    w1/w2/w3 arrive as bf16 (halved HBM stream, native MXU dtype); every dot
    accumulates in f32 on the MXU and bias + ReLU run on the VPU in f32.
    fc2 stays f32 and its N is lane-padded to 128 so the output store is dense.
    """
    # conv1 (Toeplitz matmul) + bias + ReLU
    h = jnp.dot(x_ref[...].astype(jnp.bfloat16), w1_ref[...],
                preferred_element_type=jnp.float32)
    h = jnp.maximum(h + b1_ref[...], 0.0)
    # conv2
    h = jnp.dot(h.astype(jnp.bfloat16), w2_ref[...],
                preferred_element_type=jnp.float32)
    h = jnp.maximum(h + b2_ref[...], 0.0)
    # fc1
    h = jnp.dot(h.astype(jnp.bfloat16), w3_ref[...],
                preferred_element_type=jnp.float32)
    h = jnp.maximum(h + b3_ref[...], 0.0)
    # fc2 (no ReLU), kept in f32; lane-dense store
    o_ref[...] = (jnp.dot(h, w4_ref[...], preferred_element_type=jnp.float32)
                  + b4_ref[...])


def _round_up(x, m):
    return (x + m - 1) // m * m


def _fused_forward(x2d, kp, bm):
    padded_batch, k_in = x2d.shape
    grid_m = padded_batch // bm
    n_pad = kp["w4"].shape[1]
    weights = (kp["w1"], kp["b1"], kp["w2"], kp["b2"],
               kp["w3"], kp["b3"], kp["w4"], kp["b4"])

    def const_spec(op):
        # Constant block index -> fetched into VMEM once per call (per core)
        # and kept resident across all batch tiles.
        return pl.BlockSpec(op.shape, lambda m: (0, 0))

    return pl.pallas_call(
        _qcnn_fused_kernel,
        out_shape=jax.ShapeDtypeStruct((padded_batch, n_pad), jnp.float32),
        grid=(grid_m,),
        in_specs=[pl.BlockSpec((bm, k_in), lambda m: (m, 0))]
                 + [const_spec(op) for op in weights],
        out_specs=pl.BlockSpec((bm, n_pad), lambda m: (m, 0)),
        compiler_params=pltpu.CompilerParams(
            # Independent batch tiles -> shard across v7x's 2 TensorCores.
            dimension_semantics=("parallel",),
            # Estimated peak VMEM ~<=14 MiB at bm=256; 32 MiB leaves headroom
            # on every generation (v7x: 64 MiB physical).
            vmem_limit_bytes=32 * 1024 * 1024),
    )(x2d, *weights)


# --------------------------- parameter construction ------------------------ #

def _scale_noise(key, size):
    x = jax.random.normal(key, (size,), dtype=jnp.float32)
    return jnp.sign(x) * jnp.sqrt(jnp.abs(x))


def init_noisy_linear(key, in_features, out_features, std_init=0.4):
    """Deterministic NoisyLinear params -> training-mode effective (W, b)."""
    k_w, k_b, k_in, k_out = jax.random.split(key, 4)
    mu_range = 1.0 / math.sqrt(in_features)
    weight_mu = jax.random.uniform(k_w, (out_features, in_features),
                                   minval=-mu_range, maxval=mu_range, dtype=jnp.float32)
    bias_mu = jax.random.uniform(k_b, (out_features,),
                                 minval=-mu_range, maxval=mu_range, dtype=jnp.float32)
    weight_sigma = jnp.full((out_features, in_features),
                            std_init / math.sqrt(in_features), jnp.float32)
    bias_sigma = jnp.full((out_features,), std_init / math.sqrt(out_features), jnp.float32)
    eps_in = _scale_noise(k_in, in_features)
    eps_out = _scale_noise(k_out, out_features)
    weight = weight_mu + weight_sigma * jnp.outer(eps_out, eps_in)
    bias = bias_mu + bias_sigma * eps_out
    return weight, bias


def init_noisy_conv2d(key, in_ch, out_ch, k):
    # TODO(synk): NoisyConv2d source is not provided; assume NoisyLinear-style
    # factored noise over fan_in = in_ch*k*k, reshaped to PyTorch OIHW layout.
    fan_in = in_ch * k * k
    w, b = init_noisy_linear(key, fan_in, out_ch)
    return w.reshape(out_ch, in_ch, k, k), b


def _conv_to_toeplitz(weight, H, W, *, stride, pad, row_order):
    """Expand a [Cout, Cin, k, k] conv (stride / zero-pad) into the exact dense
    matrix of the linear map flat_in -> flat_out.

    row_order='chw': rows indexed c*H*W + h*W + w   (PyTorch NCHW flatten).
    row_order='hwc': rows indexed h*W*Cin + w*Cin + c (channels-last flatten).
    Columns are always (oh, ow, cout) channels-last.
    """
    Cout, Cin, k, _ = weight.shape
    Ho = (H + 2 * pad - k) // stride + 1
    Wo = (W + 2 * pad - k) // stride + 1
    h = jnp.arange(H)[:, None, None]
    oh = jnp.arange(Ho)[None, :, None]
    kh = jnp.arange(k)[None, None, :]
    sel_h = (h == stride * oh + kh - pad).astype(jnp.float32)      # [H, Ho, k]
    w = jnp.arange(W)[:, None, None]
    ow = jnp.arange(Wo)[None, :, None]
    kw = jnp.arange(k)[None, None, :]
    sel_w = (w == stride * ow + kw - pad).astype(jnp.float32)      # [W, Wo, k]
    if row_order == "chw":
        big = jnp.einsum("hpi,wqj,ocij->chwpqo", sel_h, sel_w, weight)
    elif row_order == "hwc":
        big = jnp.einsum("hpi,wqj,ocij->hwcpqo", sel_h, sel_w, weight)
    else:
        raise ValueError(row_order)
    return big.reshape(H * W * Cin, Ho * Wo * Cout), (Ho, Wo)


def init_qcnn_params(key, input_channels=4, gridsize=15, output_dim=5):
    """Returns (raw torch-layout f32 params, pre-packed kernel operands)."""
    conv_out = (int(gridsize) + 1) // 4
    flatten_size = 32 * conv_out * conv_out
    k1, k2, k3, k4 = jax.random.split(key, 4)
    c1_w, c1_b = init_noisy_conv2d(k1, input_channels, 16, 3)
    c2_w, c2_b = init_noisy_conv2d(k2, 16, 32, 3)
    f1_w, f1_b = init_noisy_linear(k3, flatten_size, 128)
    f2_w, f2_b = init_noisy_linear(k4, 128, output_dim)
    raw = dict(conv1_w=c1_w, conv1_b=c1_b, conv2_w=c2_w, conv2_b=c2_b,
               fc1_w=f1_w, fc1_b=f1_b, fc2_w=f2_w, fc2_b=f2_b)

    H = W = int(gridsize)
    # conv1: rows follow the raw NCHW input flatten, cols are (oh, ow, cout).
    w1, (H1, W1) = _conv_to_toeplitz(c1_w, H, W, stride=2, pad=1, row_order="chw")
    b1 = jnp.tile(c1_b, H1 * W1).reshape(1, -1)
    # conv2: rows follow conv1's channels-last output flatten.
    w2, (H2, W2) = _conv_to_toeplitz(c2_w, H1, W1, stride=2, pad=1, row_order="hwc")
    b2 = jnp.tile(c2_b, H2 * W2).reshape(1, -1)
    assert H2 == conv_out and W2 == conv_out

    # fc1: permute weight rows from PyTorch's (c, h, w) flatten order to the
    # kernel's channels-last (h, w, c) activation order; pre-transpose to [K, N].
    w3 = (f1_w.reshape(128, 32, conv_out, conv_out)
              .transpose(2, 3, 1, 0)
              .reshape(flatten_size, 128))
    b3 = f1_b.reshape(1, 128)

    # fc2: pre-transpose and lane-pad N (output_dim -> multiple of 128), f32.
    n_pad = ((output_dim + 127) // 128) * 128
    w4 = jnp.zeros((128, n_pad), jnp.float32).at[:, :output_dim].set(f2_w.T)
    b4 = jnp.zeros((1, n_pad), jnp.float32).at[0, :output_dim].set(f2_b)

    # Store the big matmul weights in bf16 (halves the dominant HBM stream);
    # biases and fc2 stay f32.
    kernel_params = dict(
        w1=w1.astype(jnp.bfloat16), b1=b1,
        w2=w2.astype(jnp.bfloat16), b2=b2,
        w3=w3.astype(jnp.bfloat16), b3=b3,
        w4=w4, b4=b4)
    return raw, kernel_params


# ------------------------------- forward pass ------------------------------ #

@functools.partial(jax.jit, static_argnames=("output_dim",))
def qcnn_noisy_net_forward(kernel_params, x, output_dim=5):
    if x.ndim == 3:
        x = x[None]                        # torch: unsqueeze(0)
    x = x.astype(jnp.float32)
    batch = x.shape[0]
    x2d = x.reshape(batch, -1)
    # Batch (M) tile: up to 256 rows per grid step (amortizes the one-time
    # weight fetch and fills MXU sublanes); tiny batches round up to 8.
    bm = min(256, _round_up(batch, 8))
    padded = _round_up(batch, bm)
    if padded != batch:
        x2d = jnp.pad(x2d, ((0, padded - batch), (0, 0)))
    logits_padded = _fused_forward(x2d, kernel_params, bm)
    return logits_padded[:batch, :output_dim]


# --------------------------- pure-JAX references ---------------------------- #

def _kernel_math_reference(kp, x2d):
    """Exact (non-Pallas) replica of the fused kernel math, for a tight check."""
    h = jnp.dot(x2d.astype(jnp.bfloat16), kp["w1"], preferred_element_type=jnp.float32)
    h = jnp.maximum(h + kp["b1"], 0.0)
    h = jnp.dot(h.astype(jnp.bfloat16), kp["w2"], preferred_element_type=jnp.float32)
    h = jnp.maximum(h + kp["b2"], 0.0)
    h = jnp.dot(h.astype(jnp.bfloat16), kp["w3"], preferred_element_type=jnp.float32)
    h = jnp.maximum(h + kp["b3"], 0.0)
    return (jnp.dot(h, kp["w4"], preferred_element_type=jnp.float32,
                    precision=jax.lax.Precision.HIGHEST) + kp["b4"])


def _reference_forward(raw, x):
    """Plain XLA f32 reference of the original module forward."""
    if x.ndim == 3:
        x = x[None]
    x = x.astype(jnp.float32)
    dn = ("NCHW", "OIHW", "NCHW")
    y = lax.conv_general_dilated(x, raw["conv1_w"], (2, 2), ((1, 1), (1, 1)),
                                 dimension_numbers=dn)
    y = jax.nn.relu(y + raw["conv1_b"][None, :, None, None])
    y = lax.conv_general_dilated(y, raw["conv2_w"], (2, 2), ((1, 1), (1, 1)),
                                 dimension_numbers=dn)
    y = jax.nn.relu(y + raw["conv2_b"][None, :, None, None])
    y = y.reshape(y.shape[0], -1)
    y = jax.nn.relu(y @ raw["fc1_w"].T + raw["fc1_b"])
    return y @ raw["fc2_w"].T + raw["fc2_b"]


# ----------------------------------- main ---------------------------------- #

if __name__ == "__main__":
    key = jax.random.PRNGKey(0)
    k_params, k_x1, k_x2 = jax.random.split(key, 3)

    input_channels, gridsize, output_dim = 4, 15, 5
    raw_params, kernel_params = init_qcnn_params(k_params, input_channels,
                                                 gridsize, output_dim)

    # Small per-step batch (typical RL use).
    x_small = jax.random.normal(k_x1, (2, input_channels, gridsize, gridsize),
                                dtype=jnp.float32)
    out_small = jax.block_until_ready(
        qcnn_noisy_net_forward(kernel_params, x_small, output_dim=output_dim))
    assert out_small.shape == (2, output_dim) and out_small.dtype == jnp.float32

    # Batched call: exercises the multi-tile batch grid (bm=256, grid=(2,)),
    # i.e. the weight fetch amortized across tiles / megacore sharding path.
    x_big = jax.random.normal(k_x2, (384, input_channels, gridsize, gridsize),
                              dtype=jnp.float32)
    out_big = jax.block_until_ready(
        qcnn_noisy_net_forward(kernel_params, x_big, output_dim=output_dim))
    assert out_big.shape == (384, output_dim)

    for x_in, out in ((x_small, out_small), (x_big, out_big)):
        b = x_in.shape[0]
        # (1) tight check: the Pallas kernel exactly implements its fused math.
        ref_q = _kernel_math_reference(kernel_params,
                                       x_in.reshape(b, -1))[:, :output_dim]
        err_q = float(jnp.max(jnp.abs(out - ref_q)))
        assert jnp.allclose(out, ref_q, rtol=5e-3, atol=5e-3), err_q
        # (2) semantics check vs. the original f32 module forward; slack covers
        #     the deliberate bf16 weight/activation storage (expected ~1e-3).
        ref_f = _reference_forward(raw_params, x_in)
        err_f = float(jnp.max(jnp.abs(out - ref_f)))
        assert jnp.allclose(out, ref_f, rtol=3e-2, atol=3e-2), err_f

    print("KERNEL_OK")
</pallas_src>

<mosaic_0001>
module attributes {stable_mosaic.version = 11 : i64} {
  func.func @_qcnn_fused_kernel(%arg0: i32, %arg1: memref<8x900xf32, #tpu.memory_space<vmem>>, %arg2: memref<900x1024xbf16, #tpu.memory_space<vmem>>, %arg3: memref<1x1024xf32, #tpu.memory_space<vmem>>, %arg4: memref<1024x512xbf16, #tpu.memory_space<vmem>>, %arg5: memref<1x512xf32, #tpu.memory_space<vmem>>, %arg6: memref<512x128xbf16, #tpu.memory_space<vmem>>, %arg7: memref<1x128xf32, #tpu.memory_space<vmem>>, %arg8: memref<128x128xf32, #tpu.memory_space<vmem>>, %arg9: memref<1x128xf32, #tpu.memory_space<vmem>>, %arg10: memref<8x128xf32, #tpu.memory_space<vmem>>) attributes {dimension_semantics = [#tpu.dimension_semantics<parallel>], iteration_bounds = array<i64: 1>, scalar_prefetch = 0 : i64, scratch_operands = 0 : i64, tpu.core_type = #tpu.core_type<tc>, window_params = [{transform_indices = @transform_0, window_bounds = array<i64: 8, 900>}, {pipeline_mode = #tpu.pipeline_mode<synchronous>, transform_indices = @transform_1, window_bounds = array<i64: 900, 1024>}, {pipeline_mode = #tpu.pipeline_mode<synchronous>, transform_indices = @transform_2, window_bounds = array<i64: 1, 1024>}, {pipeline_mode = #tpu.pipeline_mode<synchronous>, transform_indices = @transform_3, window_bounds = array<i64: 1024, 512>}, {pipeline_mode = #tpu.pipeline_mode<synchronous>, transform_indices = @transform_4, window_bounds = array<i64: 1, 512>}, {pipeline_mode = #tpu.pipeline_mode<synchronous>, transform_indices = @transform_5, window_bounds = array<i64: 512, 128>}, {pipeline_mode = #tpu.pipeline_mode<synchronous>, transform_indices = @transform_6, window_bounds = array<i64: 1, 128>}, {pipeline_mode = #tpu.pipeline_mode<synchronous>, transform_indices = @transform_7, window_bounds = array<i64: 128, 128>}, {pipeline_mode = #tpu.pipeline_mode<synchronous>, transform_indices = @transform_8, window_bounds = array<i64: 1, 128>}, {transform_indices = @transform_9, window_bounds = array<i64: 8, 128>}]} {
    %c0 = arith.constant 0 : index
    %c0_0 = arith.constant 0 : index
    %0 = vector.load %arg1[%c0, %c0_0] : memref<8x900xf32, #tpu.memory_space<vmem>>, vector<8x900xf32>
    %1 = arith.truncf %0 : vector<8x900xf32> to vector<8x900xbf16>
    %c0_1 = arith.constant 0 : index
    %c0_2 = arith.constant 0 : index
    %2 = vector.load %arg2[%c0_1, %c0_2] : memref<900x1024xbf16, #tpu.memory_space<vmem>>, vector<900x1024xbf16>
    %cst = arith.constant dense<0.000000e+00> : vector<8x1024xf32>
    %3 = tpu.matmul %1, %2, %cst {dimension_numbers = #tpu.dot_dimension_numbers<[1], [0], [0], [1], [0, 0, 1, 1], [], []>} : vector<8x900xbf16>, vector<900x1024xbf16>, vector<8x1024xf32> -> vector<8x1024xf32>
    %c0_3 = arith.constant 0 : index
    %c0_4 = arith.constant 0 : index
    %4 = vector.load %arg3[%c0_3, %c0_4] : memref<1x1024xf32, #tpu.memory_space<vmem>>, vector<1x1024xf32>
    %5 = vector.broadcast %4 : vector<1x1024xf32> to vector<8x1024xf32>
    %6 = arith.addf %3, %5 : vector<8x1024xf32>
    %cst_5 = arith.constant 0.000000e+00 : f32
    %7 = vector.broadcast %cst_5 : f32 to vector<8x1024xf32>
    %8 = arith.maximumf %6, %7 : vector<8x1024xf32>
    %9 = arith.truncf %8 : vector<8x1024xf32> to vector<8x1024xbf16>
    %c0_6 = arith.constant 0 : index
    %c0_7 = arith.constant 0 : index
    %10 = vector.load %arg4[%c0_6, %c0_7] : memref<1024x512xbf16, #tpu.memory_space<vmem>>, vector<1024x512xbf16>
    %cst_8 = arith.constant dense<0.000000e+00> : vector<8x512xf32>
    %11 = tpu.matmul %9, %10, %cst_8 {dimension_numbers = #tpu.dot_dimension_numbers<[1], [0], [0], [1], [0, 0, 1, 1], [], []>} : vector<8x1024xbf16>, vector<1024x512xbf16>, vector<8x512xf32> -> vector<8x512xf32>
    %c0_9 = arith.constant 0 : index
    %c0_10 = arith.constant 0 : index
    %12 = vector.load %arg5[%c0_9, %c0_10] : memref<1x512xf32, #tpu.memory_space<vmem>>, vector<1x512xf32>
    %13 = vector.broadcast %12 : vector<1x512xf32> to vector<8x512xf32>
    %14 = arith.addf %11, %13 : vector<8x512xf32>
    %cst_11 = arith.constant 0.000000e+00 : f32
    %15 = vector.broadcast %cst_11 : f32 to vector<8x512xf32>
    %16 = arith.maximumf %14, %15 : vector<8x512xf32>
    %17 = arith.truncf %16 : vector<8x512xf32> to vector<8x512xbf16>
    %c0_12 = arith.constant 0 : index
    %c0_13 = arith.constant 0 : index
    %18 = vector.load %arg6[%c0_12, %c0_13] : memref<512x128xbf16, #tpu.memory_space<vmem>>, vector<512x128xbf16>
    %cst_14 = arith.constant dense<0.000000e+00> : vector<8x128xf32>
    %19 = tpu.matmul %17, %18, %cst_14 {dimension_numbers = #tpu.dot_dimension_numbers<[1], [0], [0], [1], [0, 0, 1, 1], [], []>} : vector<8x512xbf16>, vector<512x128xbf16>, vector<8x128xf32> -> vector<8x128xf32>
    %c0_15 = arith.constant 0 : index
    %c0_16 = arith.constant 0 : index
    %20 = vector.load %arg7[%c0_15, %c0_16] : memref<1x128xf32, #tpu.memory_space<vmem>>, vector<1x128xf32>
    %21 = vector.broadcast %20 : vector<1x128xf32> to vector<8x128xf32>
    %22 = arith.addf %19, %21 : vector<8x128xf32>
    %cst_17 = arith.constant 0.000000e+00 : f32
    %23 = vector.broadcast %cst_17 : f32 to vector<8x128xf32>
    %24 = arith.maximumf %22, %23 : vector<8x128xf32>
    %c0_18 = arith.constant 0 : index
    %c0_19 = arith.constant 0 : index
    %25 = vector.load %arg8[%c0_18, %c0_19] : memref<128x128xf32, #tpu.memory_space<vmem>>, vector<128x128xf32>
    %cst_20 = arith.constant dense<0.000000e+00> : vector<8x128xf32>
    %26 = tpu.matmul %24, %25, %cst_20 {dimension_numbers = #tpu.dot_dimension_numbers<[1], [0], [0], [1], [0, 0, 1, 1], [], []>} : vector<8x128xf32>, vector<128x128xf32>, vector<8x128xf32> -> vector<8x128xf32>
    %c0_21 = arith.constant 0 : index
    %c0_22 = arith.constant 0 : index
    %27 = vector.load %arg9[%c0_21, %c0_22] : memref<1x128xf32, #tpu.memory_space<vmem>>, vector<1x128xf32>
    %28 = vector.broadcast %27 : vector<1x128xf32> to vector<8x128xf32>
    %29 = arith.addf %26, %28 : vector<8x128xf32>
    %c0_23 = arith.constant 0 : index
    %c0_24 = arith.constant 0 : index
    %30 = vector.load %arg10[%c0_23, %c0_24] : memref<8x128xf32, #tpu.memory_space<vmem>>, vector<8x128xf32>
    tpu.vector_store %arg10[%c0_23, %c0_24], %29 {strides = array<i32>} : memref<8x128xf32, #tpu.memory_space<vmem>>, vector<8x128xf32>,
    return
  }
  func.func @transform_0(%arg0: i32) -> (i32, i32) {
    %c0_i32 = arith.constant 0 : i32
    %c0_i32_0 = arith.constant 0 : i32
    return %arg0, %c0_i32 : i32, i32
  }
  func.func @transform_1(%arg0: i32) -> (i32, i32) {
    %c0_i32 = arith.constant 0 : i32
    %c0_i32_0 = arith.constant 0 : i32
    %c0_i32_1 = arith.constant 0 : i32
    return %c0_i32, %c0_i32_0 : i32, i32
  }
  func.func @transform_2(%arg0: i32) -> (i32, i32) {
    %c0_i32 = arith.constant 0 : i32
    %c0_i32_0 = arith.constant 0 : i32
    %c0_i32_1 = arith.constant 0 : i32
    return %c0_i32, %c0_i32_0 : i32, i32
  }
  func.func @transform_3(%arg0: i32) -> (i32, i32) {
    %c0_i32 = arith.constant 0 : i32
    %c0_i32_0 = arith.constant 0 : i32
    %c0_i32_1 = arith.constant 0 : i32
    return %c0_i32, %c0_i32_0 : i32, i32
  }
  func.func @transform_4(%arg0: i32) -> (i32, i32) {
    %c0_i32 = arith.constant 0 : i32
    %c0_i32_0 = arith.constant 0 : i32
    %c0_i32_1 = arith.constant 0 : i32
    return %c0_i32, %c0_i32_0 : i32, i32
  }
  func.func @transform_5(%arg0: i32) -> (i32, i32) {
    %c0_i32 = arith.constant 0 : i32
    %c0_i32_0 = arith.constant 0 : i32
    %c0_i32_1 = arith.constant 0 : i32
    return %c0_i32, %c0_i32_0 : i32, i32
  }
  func.func @transform_6(%arg0: i32) -> (i32, i32) {
    %c0_i32 = arith.constant 0 : i32
    %c0_i32_0 = arith.constant 0 : i32
    %c0_i32_1 = arith.constant 0 : i32
    return %c0_i32, %c0_i32_0 : i32, i32
  }
  func.func @transform_7(%arg0: i32) -> (i32, i32) {
    %c0_i32 = arith.constant 0 : i32
    %c0_i32_0 = arith.constant 0 : i32
    %c0_i32_1 = arith.constant 0 : i32
    return %c0_i32, %c0_i32_0 : i32, i32
  }
  func.func @transform_8(%arg0: i32) -> (i32, i32) {
    %c0_i32 = arith.constant 0 : i32
    %c0_i32_0 = arith.constant 0 : i32
    %c0_i32_1 = arith.constant 0 : i32
    return %c0_i32, %c0_i32_0 : i32, i32
  }
  func.func @transform_9(%arg0: i32) -> (i32, i32) {
    %c0_i32 = arith.constant 0 : i32
    %c0_i32_0 = arith.constant 0 : i32
    return %arg0, %c0_i32 : i32, i32
  }
}

</mosaic_0001>

<llo_original>
// kernel: qcnn_noisy_net_forward.1
$region0: #{qcnn_noisy_net_forward.1}
  #allocation0 [shape = 'u32[]', space=smem, size = 0x4, offset = 0x4, fixed_abs, tag = 'smem constant byte address 0x4 - core index']
  #allocation1 [shape = 'u32[144,128]{1,0:T(1,128)}', space=vmem, size = 0x12000, scoped, tag = 'internal scratch']
  %s0 = inlined_call_operand.vmem [shape: f32[8,900], index: 0, kind: input, shape index: {}]
  %s1 = inlined_call_operand.hbm [shape: bf16[900,1024], index: 1, kind: input, shape index: {}]
  %s2 = inlined_call_operand.hbm [shape: f32[1,1024], index: 2, kind: input, shape index: {}]
  %s3 = inlined_call_operand.hbm [shape: bf16[1024,512], index: 3, kind: input, shape index: {}]
  %s4 = inlined_call_operand.hbm [shape: f32[1,512], index: 4, kind: input, shape index: {}]
  %s5 = inlined_call_operand.hbm [shape: bf16[512,128], index: 5, kind: input, shape index: {}]
  %s6 = inlined_call_operand.hbm [shape: f32[1,128], index: 6, kind: input, shape index: {}]
  %s7 = inlined_call_operand.hbm [shape: f32[128,128], index: 7, kind: input, shape index: {}]
  %s8 = inlined_call_operand.hbm [shape: f32[1,128], index: 8, kind: input, shape index: {}]
  %s9 = inlined_call_operand.vmem [shape: f32[8,128], index: 9, kind: output, shape index: {}]
  %s10 = sld [smem:[#allocation0]]
  $region78: #{qcnn_noisy_net_forward.1} parent=0
    _
  %s12 = ssub.s32 1, %s10
  %s13 = scalar_select 0, %s12, %s10
  $region1: #{qcnn_noisy_net_forward.1} parent=0
    #allocation2 [shape = 'u8[1851392]{0}', space=vmem, size = 0x1c4000, scoped, tag = 'input window, operand 1, single buffered']
    #allocation3 [shape = 's32[1]{0}', space=sflag, size = 0x4, scoped, tag = 'scoped memory for qcnn_noisy_net_forward.1']
    #allocation4 [shape = 'u8[4096]{0}', space=vmem, size = 0x1000, scoped, tag = 'input window, operand 2, single buffered']
    #allocation5 [shape = 's32[1]{0}', space=sflag, size = 0x4, scoped, tag = 'scoped memory for qcnn_noisy_net_forward.1']
    #allocation6 [shape = 'u8[1048576]{0}', space=vmem, size = 0x100000, scoped, tag = 'input window, operand 3, single buffered']
    #allocation7 [shape = 'u8[2048]{0}', space=vmem, size = 0x800, scoped, tag = 'input window, operand 4, single buffered']
    #allocation8 [shape = 's32[1]{0}', space=sflag, size = 0x4, scoped, tag = 'scoped memory for qcnn_noisy_net_forward.1']
    #allocation9 [shape = 'u8[131072]{0}', space=vmem, size = 0x20000, scoped, tag = 'input window, operand 5, single buffered']
    #allocation10 [shape = 'u8[512]{0}', space=vmem, size = 0x400, scoped, tag = 'input window, operand 6, single buffered']
    #allocation11 [shape = 's32[1]{0}', space=sflag, size = 0x4, scoped, tag = 'scoped memory for qcnn_noisy_net_forward.1']
    #allocation12 [shape = 'u8[65536]{0}', space=vmem, size = 0x10000, scoped, tag = 'input window, operand 7, single buffered']
    #allocation13 [shape = 'u8[512]{0}', space=vmem, size = 0x400, scoped, tag = 'input window, operand 8, single buffered']
    #allocation14 [shape = 's32[1]{0}', space=sflag, size = 0x4, scoped, tag = 'scoped memory for qcnn_noisy_net_forward.1']
    %14 = vsyncpa [#allocation3], 0
    %15 = vsyncpa [#allocation5], 0
    %16 = vsyncpa [#allocation8], 0
    %17 = vsyncpa [#allocation11], 0
    %18 = vsyncpa [#allocation14], 0
    // Predicated region
    $region2: #{qcnn_noisy_net_forward.1} parent=1 // pred_check
      _
    $region3: #{qcnn_noisy_net_forward.1} parent=1 // pred_check_branch
      %20 = sbr.rel (0) target = $region5
    $region4: #{qcnn_noisy_net_forward.1} parent=1 // pred_region
      _
    $region5: #{qcnn_noisy_net_forward.1} parent=1 // pred_fallthru
      _
    // Predicated region
    $region6: #{qcnn_noisy_net_forward.1} parent=1 // pred_check
      _
    $region7: #{qcnn_noisy_net_forward.1} parent=1 // pred_check_branch
      %22 = sbr.rel (0) target = $region9
    $region8: #{qcnn_noisy_net_forward.1} parent=1 // pred_region
      %s24 = ssub.s32 57856, 57856
      %25 = vsyncadd [#allocation3], %s24
      %s26 = sshll.u32 [#allocation2], 4
      %s27 = int_to_ptr.vmem [resolvable:$true] %s26
      %32 = dma.hbm_to_vmem [thread:$0]  %s1, 57856, %s27, [#allocation3], 512, 512, 32
    $region9: #{qcnn_noisy_net_forward.1} parent=1 // pred_fallthru
      _
    // Predicated region
    $region10: #{qcnn_noisy_net_forward.1} parent=1 // pred_check
      _
    $region11: #{qcnn_noisy_net_forward.1} parent=1 // pred_check_branch
      %34 = sbr.rel (0) target = $region13
    $region12: #{qcnn_noisy_net_forward.1} parent=1 // pred_region
      %s36 = ssub.s32 128, 128
      %37 = vsyncadd [#allocation5], %s36
      %s39 = sshll.u32 [#allocation4], 4
      %s40 = int_to_ptr.vmem [resolvable:$true] %s39
      %42 = dma.hbm_to_vmem [thread:$0]  %s2, 128, %s40, [#allocation5]
    $region13: #{qcnn_noisy_net_forward.1} parent=1 // pred_fallthru
      _
    // Predicated region
    $region14: #{qcnn_noisy_net_forward.1} parent=1 // pred_check
      _
    $region15: #{qcnn_noisy_net_forward.1} parent=1 // pred_check_branch
      %44 = sbr.rel (0) target = $region17
    $region16: #{qcnn_noisy_net_forward.1} parent=1 // pred_region
      %s46 = ssub.s32 32768, 32768
      %47 = vsyncadd [#allocation5], %s46
      %s48 = sshll.u32 [#allocation6], 4
      %s49 = int_to_ptr.vmem [resolvable:$true] %s48
      %54 = dma.hbm_to_vmem [thread:$0]  %s3, 32768, %s49, [#allocation5], 256, 256, 16
    $region17: #{qcnn_noisy_net_forward.1} parent=1 // pred_fallthru
      _
    // Predicated region
    $region18: #{qcnn_noisy_net_forward.1} parent=1 // pred_check
      _
    $region19: #{qcnn_noisy_net_forward.1} parent=1 // pred_check_branch
      %56 = sbr.rel (0) target = $region21
    $region20: #{qcnn_noisy_net_forward.1} parent=1 // pred_region
      %s58 = ssub.s32 64, 64
      %59 = vsyncadd [#allocation8], %s58
      %s61 = sshll.u32 [#allocation7], 4
      %s62 = int_to_ptr.vmem [resolvable:$true] %s61
      %64 = dma.hbm_to_vmem [thread:$0]  %s4, 64, %s62, [#allocation8]
    $region21: #{qcnn_noisy_net_forward.1} parent=1 // pred_fallthru
      _
    // Predicated region
    $region22: #{qcnn_noisy_net_forward.1} parent=1 // pred_check
      _
    $region23: #{qcnn_noisy_net_forward.1} parent=1 // pred_check_branch
      %66 = sbr.rel (0) target = $region25
    $region24: #{qcnn_noisy_net_forward.1} parent=1 // pred_region
      %s68 = ssub.s32 4096, 4096
      %69 = vsyncadd [#allocation8], %s68
      %s70 = sshll.u32 [#allocation9], 4
      %s71 = int_to_ptr.vmem [resolvable:$true] %s70
      %76 = dma.hbm_to_vmem [thread:$0]  %s5, 4096, %s71, [#allocation8], 64, 64, 4
    $region25: #{qcnn_noisy_net_forward.1} parent=1 // pred_fallthru
      _
    // Predicated region
    $region26: #{qcnn_noisy_net_forward.1} parent=1 // pred_check
      _
    $region27: #{qcnn_noisy_net_forward.1} parent=1 // pred_check_branch
      %78 = sbr.rel (0) target = $region29
    $region28: #{qcnn_noisy_net_forward.1} parent=1 // pred_region
      %s80 = ssub.s32 16, 16
      %81 = vsyncadd [#allocation11], %s80
      %s83 = sshll.u32 [#allocation10], 4
      %s84 = int_to_ptr.vmem [resolvable:$true] %s83
      %86 = dma.hbm_to_vmem [thread:$0]  %s6, 16, %s84, [#allocation11]
    $region29: #{qcnn_noisy_net_forward.1} parent=1 // pred_fallthru
      _
    // Predicated region
    $region30: #{qcnn_noisy_net_forward.1} parent=1 // pred_check
      _
    $region31: #{qcnn_noisy_net_forward.1} parent=1 // pred_check_branch
      %88 = sbr.rel (0) target = $region33
    $region32: #{qcnn_noisy_net_forward.1} parent=1 // pred_region
      %s90 = ssub.s32 2048, 2048
      %91 = vsyncadd [#allocation11], %s90
      %s92 = sshll.u32 [#allocation12], 4
      %s93 = int_to_ptr.vmem [resolvable:$true] %s92
      %98 = dma.hbm_to_vmem [thread:$0]  %s7, 2048, %s93, [#allocation11], 128, 128, 8
    $region33: #{qcnn_noisy_net_forward.1} parent=1 // pred_fallthru
      _
    // Predicated region
    $region34: #{qcnn_noisy_net_forward.1} parent=1 // pred_check
      _
    $region35: #{qcnn_noisy_net_forward.1} parent=1 // pred_check_branch
      %100 = sbr.rel (0) target = $region37
    $region36: #{qcnn_noisy_net_forward.1} parent=1 // pred_region
      %s102 = ssub.s32 16, 16
      %103 = vsyncadd [#allocation14], %s102
      %s105 = sshll.u32 [#allocation13], 4
      %s106 = int_to_ptr.vmem [resolvable:$true] %s105
      %108 = dma.hbm_to_vmem [thread:$0]  %s8, 16, %s106, [#allocation14]
    $region37: #{qcnn_noisy_net_forward.1} parent=1 // pred_fallthru
      _
    // Predicated region
    $region38: #{qcnn_noisy_net_forward.1} parent=1 // pred_check
      _
    $region39: #{qcnn_noisy_net_forward.1} parent=1 // pred_check_branch
      %110 = sbr.rel (0) target = $region41
    $region40: #{qcnn_noisy_net_forward.1} parent=1 // pred_region
      %111 = dma.done [#allocation3], 57856
    $region41: #{qcnn_noisy_net_forward.1} parent=1 // pred_fallthru
      _
    // Predicated region
    $region42: #{qcnn_noisy_net_forward.1} parent=1 // pred_check
      _
    $region43: #{qcnn_noisy_net_forward.1} parent=1 // pred_check_branch
      %113 = sbr.rel (0) target = $region45
    $region44: #{qcnn_noisy_net_forward.1} parent=1 // pred_region
      %114 = dma.done [#allocation5], 128
    $region45: #{qcnn_noisy_net_forward.1} parent=1 // pred_fallthru
      _
    // Predicated region
    $region46: #{qcnn_noisy_net_forward.1} parent=1 // pred_check
      _
    $region47: #{qcnn_noisy_net_forward.1} parent=1 // pred_check_branch
      %116 = sbr.rel (0) target = $region49
    $region48: #{qcnn_noisy_net_forward.1} parent=1 // pred_region
      %117 = dma.done [#allocation5], 32768
    $region49: #{qcnn_noisy_net_forward.1} parent=1 // pred_fallthru
      _
    // Predicated region
    $region50: #{qcnn_noisy_net_forward.1} parent=1 // pred_check
      _
    $region51: #{qcnn_noisy_net_forward.1} parent=1 // pred_check_branch
      %119 = sbr.rel (0) target = $region53
    $region52: #{qcnn_noisy_net_forward.1} parent=1 // pred_region
      %120 = dma.done [#allocation8], 64
    $region53: #{qcnn_noisy_net_forward.1} parent=1 // pred_fallthru
      _
    // Predicated region
    $region54: #{qcnn_noisy_net_forward.1} parent=1 // pred_check
      _
    $region55: #{qcnn_noisy_net_forward.1} parent=1 // pred_check_branch
      %122 = sbr.rel (0) target = $region57
    $region56: #{qcnn_noisy_net_forward.1} parent=1 // pred_region
      %123 = dma.done [#allocation8], 4096
    $region57: #{qcnn_noisy_net_forward.1} parent=1 // pred_fallthru
      _
    // Predicated region
    $region58: #{qcnn_noisy_net_forward.1} parent=1 // pred_check
      _
    $region59: #{qcnn_noisy_net_forward.1} parent=1 // pred_check_branch
      %125 = sbr.rel (0) target = $region61
    $region60: #{qcnn_noisy_net_forward.1} parent=1 // pred_region
      %126 = dma.done [#allocation11], 16
    $region61: #{qcnn_noisy_net_forward.1} parent=1 // pred_fallthru
      _
    // Predicated region
    $region62: #{qcnn_noisy_net_forward.1} parent=1 // pred_check
      _
    $region63: #{qcnn_noisy_net_forward.1} parent=1 // pred_check_branch
      %128 = sbr.rel (0) target = $region65
    $region64: #{qcnn_noisy_net_forward.1} parent=1 // pred_region
      %129 = dma.done [#allocation11], 2048
    $region65: #{qcnn_noisy_net_forward.1} parent=1 // pred_fallthru
      _
    // Predicated region
    $region66: #{qcnn_noisy_net_forward.1} parent=1 // pred_check
      _
    $region67: #{qcnn_noisy_net_forward.1} parent=1 // pred_check_branch
      %131 = sbr.rel (0) target = $region69
    $region68: #{qcnn_noisy_net_forward.1} parent=1 // pred_region
      %132 = dma.done [#allocation14], 16
    $region69: #{qcnn_noisy_net_forward.1} parent=1 // pred_fallthru
      _
    %v134 = vld [vmem:[%s0] sm:$0xff]
    %v135 = vld [vmem:[%s0 + $0x8] sm:$0xff]
    %v136 = vld [vmem:[%s0 + $0x10] sm:$0xff]
    %v137 = vld [vmem:[%s0 + $0x18] sm:$0xff]
    %v138 = vld [vmem:[%s0 + $0x20] sm:$0xff]
    %v139 = vld [vmem:[%s0 + $0x28] sm:$0xff]
    %v140 = vld [vmem:[%s0 + $0x30] sm:$0xff]
    %v141 = vld [vmem:[%s0 + $0x38] sm:$0xff]
    %v142 = vpack.c.bf16 %v134, %v134
    %v143 = vpack.c.bf16 %v135, %v135
    %v144 = vpack.c.bf16 %v136, %v136
    %v145 = vpack.c.bf16 %v137, %v137
    %v146 = vpack.c.bf16 %v138, %v138
    %v147 = vpack.c.bf16 %v139, %v139
    %v148 = vpack.c.bf16 %v140, %v140
    %v149 = vpack.c.bf16 %v141, %v141
    %v150 = vld [vmem:[#allocation2] sm:$0xff]
    %v151 = vld [vmem:[#allocation2 + $0x8] sm:$0xff]
    %v152 = vld [vmem:[#allocation2 + $0x10] sm:$0xff]
    %v153 = vld [vmem:[#allocation2 + $0x18] sm:$0xff]
    %v154 = vld [vmem:[#allocation2 + $0x20] sm:$0xff]
    %v155 = vld [vmem:[#allocation2 + $0x28] sm:$0xff]
    %v156 = vld [vmem:[#allocation2 + $0x30] sm:$0xff]
    %v157 = vld [vmem:[#allocation2 + $0x38] sm:$0xff]
    %v158 = vld [vmem:[#allocation2 + $0x40] sm:$0xff]
    %v159 = vld [vmem:[#allocation2 + $0x48] sm:$0xff]
    %v160 = vld [vmem:[#allocation2 + $0x50] sm:$0xff]
    %v161 = vld [vmem:[#allocation2 + $0x58] sm:$0xff]
    %v162 = vld [vmem:[#allocation2 + $0x60] sm:$0xff]
    %v163 = vld [vmem:[#allocation2 + $0x68] sm:$0xff]
    %v164 = vld [vmem:[#allocation2 + $0x70] sm:$0xff]
    %v165 = vld [vmem:[#allocation2 + $0x78] sm:$0xff]
    %v166 = vld [vmem:[#allocation2 + $0x80] sm:$0xff]
    %v167 = vld [vmem:[#allocation2 + $0x88] sm:$0xff]
    %v168 = vld [vmem:[#allocation2 + $0x90] sm:$0xff]
    %v169 = vld [vmem:[#allocation2 + $0x98] sm:$0xff]
    %v170 = vld [vmem:[#allocation2 + $0xa0] sm:$0xff]
    %v171 = vld [vmem:[#allocation2 + $0xa8] sm:$0xff]
    %v172 = vld [vmem:[#allocation2 + $0xb0] sm:$0xff]
    %v173 = vld [vmem:[#allocation2 + $0xb8] sm:$0xff]
    %v174 = vld [vmem:[#allocation2 + $0xc0] sm:$0xff]
    %v175 = vld [vmem:[#allocation2 + $0xc8] sm:$0xff]
    %v176 = vld [vmem:[#allocation2 + $0xd0] sm:$0xff]
    %v177 = vld [vmem:[#allocation2 + $0xd8] sm:$0xff]
    %v178 = vld [vmem:[#allocation2 + $0xe0] sm:$0xff]
    %v179 = vld [vmem:[#allocation2 + $0xe8] sm:$0xff]
    %v180 = vld [vmem:[#allocation2 + $0xf0] sm:$0xff]
    %v181 = vld [vmem:[#allocation2 + $0xf8] sm:$0xff]
    %v182 = vld [vmem:[#allocation2 + $0x100] sm:$0xff]
    %v183 = vld [vmem:[#allocation2 + $0x108] sm:$0xff]
    %v184 = vld [vmem:[#allocation2 + $0x110] sm:$0xff]
    %v185 = vld [vmem:[#allocation2 + $0x118] sm:$0xff]
    %v186 = vld [vmem:[#allocation2 + $0x120] sm:$0xff]
    %v187 = vld [vmem:[#allocation2 + $0x128] sm:$0xff]
    %v188 = vld [vmem:[#allocation2 + $0x130] sm:$0xff]
    %v189 = vld [vmem:[#allocation2 + $0x138] sm:$0xff]
    %v190 = vld [vmem:[#allocation2 + $0x140] sm:$0xff]
    %v191 = vld [vmem:[#allocation2 + $0x148] sm:$0xff]
    %v192 = vld [vmem:[#allocation2 + $0x150] sm:$0xff]
    %v193 = vld [vmem:[#allocation2 + $0x158] sm:$0xff]
    %v194 = vld [vmem:[#allocation2 + $0x160] sm:$0xff]
    %v195 = vld [vmem:[#allocation2 + $0x168] sm:$0xff]
    %v196 = vld [vmem:[#allocation2 + $0x170] sm:$0xff]
    %v197 = vld [vmem:[#allocation2 + $0x178] sm:$0xff]
    %v198 = vld [vmem:[#allocation2 + $0x180] sm:$0xff]
    %v199 = vld [vmem:[#allocation2 + $0x188] sm:$0xff]
    %v200 = vld [vmem:[#allocation2 + $0x190] sm:$0xff]
    %v201 = vld [vmem:[#allocation2 + $0x198] sm:$0xff]
    %v202 = vld [vmem:[#allocation2 + $0x1a0] sm:$0xff]
    %v203 = vld [vmem:[#allocation2 + $0x1a8] sm:$0xff]
    %v204 = vld [vmem:[#allocation2 + $0x1b0] sm:$0xff]
    %v205 = vld [vmem:[#allocation2 + $0x1b8] sm:$0xff]
    %v206 = vld [vmem:[#allocation2 + $0x1c0] sm:$0xff]
    %v207 = vld [vmem:[#allocation2 + $0x1c8] sm:$0xff]
    %v208 = vld [vmem:[#allocation2 + $0x1d0] sm:$0xff]
    %v209 = vld [vmem:[#allocation2 + $0x1d8] sm:$0xff]
    %v210 = vld [vmem:[#allocation2 + $0x1e0] sm:$0xff]
    %v211 = vld [vmem:[#allocation2 + $0x1e8] sm:$0xff]
    %v212 = vld [vmem:[#allocation2 + $0x1f0] sm:$0xff]
    %v213 = vld [vmem:[#allocation2 + $0x1f8] sm:$0xff]
    %v214 = vld [vmem:[#allocation2 + $0x200] sm:$0xff]
    %v215 = vld [vmem:[#allocation2 + $0x208] sm:$0xff]
    %v216 = vld [vmem:[#allocation2 + $0x210] sm:$0xff]
    %v217 = vld [vmem:[#allocation2 + $0x218] sm:$0xff]
    %v218 = vld [vmem:[#allocation2 + $0x220] sm:$0xff]
    %v219 = vld [vmem:[#allocation2 + $0x228] sm:$0xff]
    %v220 = vld [vmem:[#allocation2 + $0x230] sm:$0xff]
    %v221 = vld [vmem:[#allocation2 + $0x238] sm:$0xff]
    %v222 = vld [vmem:[#allocation2 + $0x240] sm:$0xff]
    %v223 = vld [vmem:[#allocation2 + $0x248] sm:$0xff]
    %v224 = vld [vmem:[#allocation2 + $0x250] sm:$0xff]
    %v225 = vld [vmem:[#allocation2 + $0x258] sm:$0xff]
    %v226 = vld [vmem:[#allocation2 + $0x260] sm:$0xff]
    %v227 = vld [vmem:[#allocation2 + $0x268] sm:$0xff]
    %v228 = vld [vmem:[#allocation2 + $0x270] sm:$0xff]
    %v229 = vld [vmem:[#allocation2 + $0x278] sm:$0xff]
    %v230 = vld [vmem:[#allocation2 + $0x280] sm:$0xff]
    %v231 = vld [vmem:[#allocation2 + $0x288] sm:$0xff]
    %v232 = vld [vmem:[#allocation2 + $0x290] sm:$0xff]
    %v233 = vld [vmem:[#allocation2 + $0x298] sm:$0xff]
    %v234 = vld [vmem:[#allocation2 + $0x2a0] sm:$0xff]
    %v235 = vld [vmem:[#allocation2 + $0x2a8] sm:$0xff]
    %v236 = vld [vmem:[#allocation2 + $0x2b0] sm:$0xff]
    %v237 = vld [vmem:[#allocation2 + $0x2b8] sm:$0xff]
    %v238 = vld [vmem:[#allocation2 + $0x2c0] sm:$0xff]
    %v239 = vld [vmem:[#allocation2 + $0x2c8] sm:$0xff]
    %v240 = vld [vmem:[#allocation2 + $0x2d0] sm:$0xff]
    %v241 = vld [vmem:[#allocation2 + $0x2d8] sm:$0xff]
    %v242 = vld [vmem:[#allocation2 + $0x2e0] sm:$0xff]
    %v243 = vld [vmem:[#allocation2 + $0x2e8] sm:$0xff]
    %v244 = vld [vmem:[#allocation2 + $0x2f0] sm:$0xff]
    %v245 = vld [vmem:[#allocation2 + $0x2f8] sm:$0xff]
    %v246 = vld [vmem:[#allocation2 + $0x300] sm:$0xff]
    %v247 = vld [vmem:[#allocation2 + $0x308] sm:$0xff]
    %v248 = vld [vmem:[#allocation2 + $0x310] sm:$0xff]
    %v249 = vld [vmem:[#allocation2 + $0x318] sm:$0xff]
    %v250 = vld [vmem:[#allocation2 + $0x320] sm:$0xff]
    %v251 = vld [vmem:[#allocation2 + $0x328] sm:$0xff]
    %v252 = vld [vmem:[#allocation2 + $0x330] sm:$0xff]
    %v253 = vld [vmem:[#allocation2 + $0x338] sm:$0xff]
    %v254 = vld [vmem:[#allocation2 + $0x340] sm:$0xff]
    %v255 = vld [vmem:[#allocation2 + $0x348] sm:$0xff]
    %v256 = vld [vmem:[#allocation2 + $0x350] sm:$0xff]
    %v257 = vld [vmem:[#allocation2 + $0x358] sm:$0xff]
    %v258 = vld [vmem:[#allocation2 + $0x360] sm:$0xff]
    %v259 = vld [vmem:[#allocation2 + $0x368] sm:$0xff]
    %v260 = vld [vmem:[#allocation2 + $0x370] sm:$0xff]
    %v261 = vld [vmem:[#allocation2 + $0x378] sm:$0xff]
    %v262 = vld [vmem:[#allocation2 + $0x380] sm:$0xff]
    %v263 = vld [vmem:[#allocation2 + $0x388] sm:$0xff]
    %v264 = vld [vmem:[#allocation2 + $0x390] sm:$0xff]
    %v265 = vld [vmem:[#allocation2 + $0x398] sm:$0xff]
    %v266 = vld [vmem:[#allocation2 + $0x3a0] sm:$0xff]
    %v267 = vld [vmem:[#allocation2 + $0x3a8] sm:$0xff]
    %v268 = vld [vmem:[#allocation2 + $0x3b0] sm:$0xff]
    %v269 = vld [vmem:[#allocation2 + $0x3b8] sm:$0xff]
    %v270 = vld [vmem:[#allocation2 + $0x3c0] sm:$0xff]
    %v271 = vld [vmem:[#allocation2 + $0x3c8] sm:$0xff]
    %v272 = vld [vmem:[#allocation2 + $0x3d0] sm:$0xff]
    %v273 = vld [vmem:[#allocation2 + $0x3d8] sm:$0xff]
    %v274 = vld [vmem:[#allocation2 + $0x3e0] sm:$0xff]
    %v275 = vld [vmem:[#allocation2 + $0x3e8] sm:$0xff]
    %v276 = vld [vmem:[#allocation2 + $0x3f0] sm:$0xff]
    %v277 = vld [vmem:[#allocation2 + $0x3f8] sm:$0xff]
    %v278 = vld [vmem:[#allocation2 + $0x400] sm:$0xff]
    %v279 = vld [vmem:[#allocation2 + $0x408] sm:$0xff]
    %v280 = vld [vmem:[#allocation2 + $0x410] sm:$0xff]
    %v281 = vld [vmem:[#allocation2 + $0x418] sm:$0xff]
    %v282 = vld [vmem:[#allocation2 + $0x420] sm:$0xff]
    %v283 = vld [vmem:[#allocation2 + $0x428] sm:$0xff]
    %v284 = vld [vmem:[#allocation2 + $0x430] sm:$0xff]
    %v285 = vld [vmem:[#allocation2 + $0x438] sm:$0xff]
    %v286 = vld [vmem:[#allocation2 + $0x440] sm:$0xff]
    %v287 = vld [vmem:[#allocation2 + $0x448] sm:$0xff]
    %v288 = vld [vmem:[#allocation2 + $0x450] sm:$0xff]
    %v289 = vld [vmem:[#allocation2 + $0x458] sm:$0xff]
    %v290 = vld [vmem:[#allocation2 + $0x460] sm:$0xff]
    %v291 = vld [vmem:[#allocation2 + $0x468] sm:$0xff]
    %v292 = vld [vmem:[#allocation2 + $0x470] sm:$0xff]
    %v293 = vld [vmem:[#allocation2 + $0x478] sm:$0xff]
    %v294 = vld [vmem:[#allocation2 + $0x480] sm:$0xff]
    %v295 = vld [vmem:[#allocation2 + $0x488] sm:$0xff]
    %v296 = vld [vmem:[#allocation2 + $0x490] sm:$0xff]
    %v297 = vld [vmem:[#allocation2 + $0x498] sm:$0xff]
    %v298 = vld [vmem:[#allocation2 + $0x4a0] sm:$0xff]
    %v299 = vld [vmem:[#allocation2 + $0x4a8] sm:$0xff]
    %v300 = vld [vmem:[#allocation2 + $0x4b0] sm:$0xff]
    %v301 = vld [vmem:[#allocation2 + $0x4b8] sm:$0xff]
    %v302 = vld [vmem:[#allocation2 + $0x4c0] sm:$0xff]
    %v303 = vld [vmem:[#allocation2 + $0x4c8] sm:$0xff]
    %v304 = vld [vmem:[#allocation2 + $0x4d0] sm:$0xff]
    %v305 = vld [vmem:[#allocation2 + $0x4d8] sm:$0xff]
    %v306 = vld [vmem:[#allocation2 + $0x4e0] sm:$0xff]
    %v307 = vld [vmem:[#allocation2 + $0x4e8] sm:$0xff]
    %v308 = vld [vmem:[#allocation2 + $0x4f0] sm:$0xff]
    %v309 = vld [vmem:[#allocation2 + $0x4f8] sm:$0xff]
    %v310 = vld [vmem:[#allocation2 + $0x500] sm:$0xff]
    %v311 = vld [vmem:[#allocation2 + $0x508] sm:$0xff]
    %v312 = vld [vmem:[#allocation2 + $0x510] sm:$0xff]
    %v313 = vld [vmem:[#allocation2 + $0x518] sm:$0xff]
    %v314 = vld [vmem:[#allocation2 + $0x520] sm:$0xff]
    %v315 = vld [vmem:[#allocation2 + $0x528] sm:$0xff]
    %v316 = vld [vmem:[#allocation2 + $0x530] sm:$0xff]
    %v317 = vld [vmem:[#allocation2 + $0x538] sm:$0xff]
    %v318 = vld [vmem:[#allocation2 + $0x540] sm:$0xff]
    %v319 = vld [vmem:[#allocation2 + $0x548] sm:$0xff]
    %v320 = vld [vmem:[#allocation2 + $0x550] sm:$0xff]
    %v321 = vld [vmem:[#allocation2 + $0x558] sm:$0xff]
    %v322 = vld [vmem:[#allocation2 + $0x560] sm:$0xff]
    %v323 = vld [vmem:[#allocation2 + $0x568] sm:$0xff]
    %v324 = vld [vmem:[#allocation2 + $0x570] sm:$0xff]
    %v325 = vld [vmem:[#allocation2 + $0x578] sm:$0xff]
    %v326 = vld [vmem:[#allocation2 + $0x580] sm:$0xff]
    %v327 = vld [vmem:[#allocation2 + $0x588] sm:$0xff]
    %v328 = vld [vmem:[#allocation2 + $0x590] sm:$0xff]
    %v329 = vld [vmem:[#allocation2 + $0x598] sm:$0xff]
    %v330 = vld [vmem:[#allocation2 + $0x5a0] sm:$0xff]
    %v331 = vld [vmem:[#allocation2 + $0x5a8] sm:$0xff]
    %v332 = vld [vmem:[#allocation2 + $0x5b0] sm:$0xff]
    %v333 = vld [vmem:[#allocation2 + $0x5b8] sm:$0xff]
    %v334 = vld [vmem:[#allocation2 + $0x5c0] sm:$0xff]
    %v335 = vld [vmem:[#allocation2 + $0x5c8] sm:$0xff]
    %v336 = vld [vmem:[#allocation2 + $0x5d0] sm:$0xff]
    %v337 = vld [vmem:[#allocation2 + $0x5d8] sm:$0xff]
    %v338 = vld [vmem:[#allocation2 + $0x5e0] sm:$0xff]
    %v339 = vld [vmem:[#allocation2 + $0x5e8] sm:$0xff]
    %v340 = vld [vmem:[#allocation2 + $0x5f0] sm:$0xff]
    %v341 = vld [vmem:[#allocation2 + $0x5f8] sm:$0xff]
    %v342 = vld [vmem:[#allocation2 + $0x600] sm:$0xff]
    %v343 = vld [vmem:[#allocation2 + $0x608] sm:$0xff]
    %v344 = vld [vmem:[#allocation2 + $0x610] sm:$0xff]
    %v345 = vld [vmem:[#allocation2 + $0x618] sm:$0xff]
    %v346 = vld [vmem:[#allocation2 + $0x620] sm:$0xff]
    %v347 = vld [vmem:[#allocation2 + $0x628] sm:$0xff]
    %v348 = vld [vmem:[#allocation2 + $0x630] sm:$0xff]
    %v349 = vld [vmem:[#allocation2 + $0x638] sm:$0xff]
    %v350 = vld [vmem:[#allocation2 + $0x640] sm:$0xff]
    %v351 = vld [vmem:[#allocation2 + $0x648] sm:$0xff]
    %v352 = vld [vmem:[#allocation2 + $0x650] sm:$0xff]
    %v353 = vld [vmem:[#allocation2 + $0x658] sm:$0xff]
    %v354 = vld [vmem:[#allocation2 + $0x660] sm:$0xff]
    %v355 = vld [vmem:[#allocation2 + $0x668] sm:$0xff]
    %v356 = vld [vmem:[#allocation2 + $0x670] sm:$0xff]
    %v357 = vld [vmem:[#allocation2 + $0x678] sm:$0xff]
    %v358 = vld [vmem:[#allocation2 + $0x680] sm:$0xff]
    %v359 = vld [vmem:[#allocation2 + $0x688] sm:$0xff]
    %v360 = vld [vmem:[#allocation2 + $0x690] sm:$0xff]
    %v361 = vld [vmem:[#allocation2 + $0x698] sm:$0xff]
    %v362 = vld [vmem:[#allocation2 + $0x6a0] sm:$0xff]
    %v363 = vld [vmem:[#allocation2 + $0x6a8] sm:$0xff]
    %v364 = vld [vmem:[#allocation2 + $0x6b0] sm:$0xff]
    %v365 = vld [vmem:[#allocation2 + $0x6b8] sm:$0xff]
    %v366 = vld [vmem:[#allocation2 + $0x6c0] sm:$0xff]
    %v367 = vld [vmem:[#allocation2 + $0x6c8] sm:$0xff]
    %v368 = vld [vmem:[#allocation2 + $0x6d0] sm:$0xff]
    %v369 = vld [vmem:[#allocation2 + $0x6d8] sm:$0xff]
    %v370 = vld [vmem:[#allocation2 + $0x6e0] sm:$0xff]
    %v371 = vld [vmem:[#allocation2 + $0x6e8] sm:$0xff]
    %v372 = vld [vmem:[#allocation2 + $0x6f0] sm:$0xff]
    %v373 = vld [vmem:[#allocation2 + $0x6f8] sm:$0xff]
    %v374 = vld [vmem:[#allocation2 + $0x700] sm:$0xff]
    %v375 = vld [vmem:[#allocation2 + $0x708] sm:$0xff]
    %v376 = vld [vmem:[#allocation2 + $0x710] sm:$0xff]
    %v377 = vld [vmem:[#allocation2 + $0x718] sm:$0xff]
    %v378 = vld [vmem:[#allocation2 + $0x720] sm:$0xff]
    %v379 = vld [vmem:[#allocation2 + $0x728] sm:$0xff]
    %v380 = vld [vmem:[#allocation2 + $0x730] sm:$0xff]
    %v381 = vld [vmem:[#allocation2 + $0x738] sm:$0xff]
    %v382 = vld [vmem:[#allocation2 + $0x740] sm:$0xff]
    %v383 = vld [vmem:[#allocation2 + $0x748] sm:$0xff]
    %v384 = vld [vmem:[#allocation2 + $0x750] sm:$0xff]
    %v385 = vld [vmem:[#allocation2 + $0x758] sm:$0xff]
    %v386 = vld [vmem:[#allocation2 + $0x760] sm:$0xff]
    %v387 = vld [vmem:[#allocation2 + $0x768] sm:$0xff]
    %v388 = vld [vmem:[#allocation2 + $0x770] sm:$0xff]
    %v389 = vld [vmem:[#allocation2 + $0x778] sm:$0xff]
    %v390 = vld [vmem:[#allocation2 + $0x780] sm:$0xff]
    %v391 = vld [vmem:[#allocation2 + $0x788] sm:$0xff]
    %v392 = vld [vmem:[#allocation2 + $0x790] sm:$0xff]
    %v393 = vld [vmem:[#allocation2 + $0x798] sm:$0xff]
    %v394 = vld [vmem:[#allocation2 + $0x7a0] sm:$0xff]
    %v395 = vld [vmem:[#allocation2 + $0x7a8] sm:$0xff]
    %v396 = vld [vmem:[#allocation2 + $0x7b0] sm:$0xff]
    %v397 = vld [vmem:[#allocation2 + $0x7b8] sm:$0xff]
    %v398 = vld [vmem:[#allocation2 + $0x7c0] sm:$0xff]
    %v399 = vld [vmem:[#allocation2 + $0x7c8] sm:$0xff]
    %v400 = vld [vmem:[#allocation2 + $0x7d0] sm:$0xff]
    %v401 = vld [vmem:[#allocation2 + $0x7d8] sm:$0xff]
    %v402 = vld [vmem:[#allocation2 + $0x7e0] sm:$0xff]
    %v403 = vld [vmem:[#allocation2 + $0x7e8] sm:$0xff]
    %v404 = vld [vmem:[#allocation2 + $0x7f0] sm:$0xff]
    %v405 = vld [vmem:[#allocation2 + $0x7f8] sm:$0xff]
    %v406 = vld [vmem:[#allocation2 + $0x800] sm:$0xff]
    %v407 = vld [vmem:[#allocation2 + $0x808] sm:$0xff]
    %v408 = vld [vmem:[#allocation2 + $0x810] sm:$0xff]
    %v409 = vld [vmem:[#allocation2 + $0x818] sm:$0xff]
    %v410 = vld [vmem:[#allocation2 + $0x820] sm:$0xff]
    %v411 = vld [vmem:[#allocation2 + $0x828] sm:$0xff]
    %v412 = vld [vmem:[#allocation2 + $0x830] sm:$0xff]
    %v413 = vld [vmem:[#allocation2 + $0x838] sm:$0xff]
    %v414 = vld [vmem:[#allocation2 + $0x840] sm:$0xff]
    %v415 = vld [vmem:[#allocation2 + $0x848] sm:$0xff]
    %v416 = vld [vmem:[#allocation2 + $0x850] sm:$0xff]
    %v417 = vld [vmem:[#allocation2 + $0x858] sm:$0xff]
    %v418 = vld [vmem:[#allocation2 + $0x860] sm:$0xff]
    %v419 = vld [vmem:[#allocation2 + $0x868] sm:$0xff]
    %v420 = vld [vmem:[#allocation2 + $0x870] sm:$0xff]
    %v421 = vld [vmem:[#allocation2 + $0x878] sm:$0xff]
    %v422 = vld [vmem:[#allocation2 + $0x880] sm:$0xff]
    %v423 = vld [vmem:[#allocation2 + $0x888] sm:$0xff]
    %v424 = vld [vmem:[#allocation2 + $0x890] sm:$0xff]
    %v425 = vld [vmem:[#allocation2 + $0x898] sm:$0xff]
    %v426 = vld [vmem:[#allocation2 + $0x8a0] sm:$0xff]
    %v427 = vld [vmem:[#allocation2 + $0x8a8] sm:$0xff]
    %v428 = vld [vmem:[#allocation2 + $0x8b0] sm:$0xff]
    %v429 = vld [vmem:[#allocation2 + $0x8b8] sm:$0xff]
    %v430 = vld [vmem:[#allocation2 + $0x8c0] sm:$0xff]
    %v431 = vld [vmem:[#allocation2 + $0x8c8] sm:$0xff]
    %v432 = vld [vmem:[#allocation2 + $0x8d0] sm:$0xff]
    %v433 = vld [vmem:[#allocation2 + $0x8d8] sm:$0xff]
    %v434 = vld [vmem:[#allocation2 + $0x8e0] sm:$0xff]
    %v435 = vld [vmem:[#allocation2 + $0x8e8] sm:$0xff]
    %v436 = vld [vmem:[#allocation2 + $0x8f0] sm:$0xff]
    %v437 = vld [vmem:[#allocation2 + $0x8f8] sm:$0xff]
    %v438 = vld [vmem:[#allocation2 + $0x900] sm:$0xff]
    %v439 = vld [vmem:[#allocation2 + $0x908] sm:$0xff]
    %v440 = vld [vmem:[#allocation2 + $0x910] sm:$0xff]
    %v441 = vld [vmem:[#allocation2 + $0x918] sm:$0xff]
    %v442 = vld [vmem:[#allocation2 + $0x920] sm:$0xff]
    %v443 = vld [vmem:[#allocation2 + $0x928] sm:$0xff]
    %v444 = vld [vmem:[#allocation2 + $0x930] sm:$0xff]
    %v445 = vld [vmem:[#allocation2 + $0x938] sm:$0xff]
    %v446 = vld [vmem:[#allocation2 + $0x940] sm:$0xff]
    %v447 = vld [vmem:[#allocation2 + $0x948] sm:$0xff]
    %v448 = vld [vmem:[#allocation2 + $0x950] sm:$0xff]
    %v449 = vld [vmem:[#allocation2 + $0x958] sm:$0xff]
    %v450 = vld [vmem:[#allocation2 + $0x960] sm:$0xff]
    %v451 = vld [vmem:[#allocation2 + $0x968] sm:$0xff]
    %v452 = vld [vmem:[#allocation2 + $0x970] sm:$0xff]
    %v453 = vld [vmem:[#allocation2 + $0x978] sm:$0xff]
    %v454 = vld [vmem:[#allocation2 + $0x980] sm:$0xff]
    %v455 = vld [vmem:[#allocation2 + $0x988] sm:$0xff]
    %v456 = vld [vmem:[#allocation2 + $0x990] sm:$0xff]
    %v457 = vld [vmem:[#allocation2 + $0x998] sm:$0xff]
    %v458 = vld [vmem:[#allocation2 + $0x9a0] sm:$0xff]
    %v459 = vld [vmem:[#allocation2 + $0x9a8] sm:$0xff]
    %v460 = vld [vmem:[#allocation2 + $0x9b0] sm:$0xff]
    %v461 = vld [vmem:[#allocation2 + $0x9b8] sm:$0xff]
    %v462 = vld [vmem:[#allocation2 + $0x9c0] sm:$0xff]
    %v463 = vld [vmem:[#allocation2 + $0x9c8] sm:$0xff]
    %v464 = vld [vmem:[#allocation2 + $0x9d0] sm:$0xff]
    %v465 = vld [vmem:[#allocation2 + $0x9d8] sm:$0xff]
    %v466 = vld [vmem:[#allocation2 + $0x9e0] sm:$0xff]
    %v467 = vld [vmem:[#allocation2 + $0x9e8] sm:$0xff]
    %v468 = vld [vmem:[#allocation2 + $0x9f0] sm:$0xff]
    %v469 = vld [vmem:[#allocation2 + $0x9f8] sm:$0xff]
    %v470 = vld [vmem:[#allocation2 + $0xa00] sm:$0xff]
    %v471 = vld [vmem:[#allocation2 + $0xa08] sm:$0xff]
    %v472 = vld [vmem:[#allocation2 + $0xa10] sm:$0xff]
    %v473 = vld [vmem:[#allocation2 + $0xa18] sm:$0xff]
    %v474 = vld [vmem:[#allocation2 + $0xa20] sm:$0xff]
    %v475 = vld [vmem:[#allocation2 + $0xa28] sm:$0xff]
    %v476 = vld [vmem:[#allocation2 + $0xa30] sm:$0xff]
    %v477 = vld [vmem:[#allocation2 + $0xa38] sm:$0xff]
    %v478 = vld [vmem:[#allocation2 + $0xa40] sm:$0xff]
    %v479 = vld [vmem:[#allocation2 + $0xa48] sm:$0xff]
    %v480 = vld [vmem:[#allocation2 + $0xa50] sm:$0xff]
    %v481 = vld [vmem:[#allocation2 + $0xa58] sm:$0xff]
    %v482 = vld [vmem:[#allocation2 + $0xa60] sm:$0xff]
    %v483 = vld [vmem:[#allocation2 + $0xa68] sm:$0xff]
    %v484 = vld [vmem:[#allocation2 + $0xa70] sm:$0xff]
    %v485 = vld [vmem:[#allocation2 + $0xa78] sm:$0xff]
    %v486 = vld [vmem:[#allocation2 + $0xa80] sm:$0xff]
    %v487 = vld [vmem:[#allocation2 + $0xa88] sm:$0xff]
    %v488 = vld [vmem:[#allocation2 + $0xa90] sm:$0xff]
    %v489 = vld [vmem:[#allocation2 + $0xa98] sm:$0xff]
    %v490 = vld [vmem:[#allocation2 + $0xaa0] sm:$0xff]
    %v491 = vld [vmem:[#allocation2 + $0xaa8] sm:$0xff]
    %v492 = vld [vmem:[#allocation2 + $0xab0] sm:$0xff]
    %v493 = vld [vmem:[#allocation2 + $0xab8] sm:$0xff]
    %v494 = vld [vmem:[#allocation2 + $0xac0] sm:$0xff]
    %v495 = vld [vmem:[#allocation2 + $0xac8] sm:$0xff]
    %v496 = vld [vmem:[#allocation2 + $0xad0] sm:$0xff]
    %v497 = vld [vmem:[#allocation2 + $0xad8] sm:$0xff]
    %v498 = vld [vmem:[#allocation2 + $0xae0] sm:$0xff]
    %v499 = vld [vmem:[#allocation2 + $0xae8] sm:$0xff]
    %v500 = vld [vmem:[#allocation2 + $0xaf0] sm:$0xff]
    %v501 = vld [vmem:[#allocation2 + $0xaf8] sm:$0xff]
    %v502 = vld [vmem:[#allocation2 + $0xb00] sm:$0xff]
    %v503 = vld [vmem:[#allocation2 + $0xb08] sm:$0xff]
    %v504 = vld [vmem:[#allocation2 + $0xb10] sm:$0xff]
    %v505 = vld [vmem:[#allocation2 + $0xb18] sm:$0xff]
    %v506 = vld [vmem:[#allocation2 + $0xb20] sm:$0xff]
    %v507 = vld [vmem:[#allocation2 + $0xb28] sm:$0xff]
    %v508 = vld [vmem:[#allocation2 + $0xb30] sm:$0xff]
    %v509 = vld [vmem:[#allocation2 + $0xb38] sm:$0xff]
    %v510 = vld [vmem:[#allocation2 + $0xb40] sm:$0xff]
    %v511 = vld [vmem:[#allocation2 + $0xb48] sm:$0xff]
    %v512 = vld [vmem:[#allocation2 + $0xb50] sm:$0xff]
    %v513 = vld [vmem:[#allocation2 + $0xb58] sm:$0xff]
    %v514 = vld [vmem:[#allocation2 + $0xb60] sm:$0xff]
    %v515 = vld [vmem:[#allocation2 + $0xb68] sm:$0xff]
    %v516 = vld [vmem:[#allocation2 + $0xb70] sm:$0xff]
    %v517 = vld [vmem:[#allocation2 + $0xb78] sm:$0xff]
    %v518 = vld [vmem:[#allocation2 + $0xb80] sm:$0xff]
    %v519 = vld [vmem:[#allocation2 + $0xb88] sm:$0xff]
    %v520 = vld [vmem:[#allocation2 + $0xb90] sm:$0xff]
    %v521 = vld [vmem:[#allocation2 + $0xb98] sm:$0xff]
    %v522 = vld [vmem:[#allocation2 + $0xba0] sm:$0xff]
    %v523 = vld [vmem:[#allocation2 + $0xba8] sm:$0xff]
    %v524 = vld [vmem:[#allocation2 + $0xbb0] sm:$0xff]
    %v525 = vld [vmem:[#allocation2 + $0xbb8] sm:$0xff]
    %v526 = vld [vmem:[#allocation2 + $0xbc0] sm:$0xff]
    %v527 = vld [vmem:[#allocation2 + $0xbc8] sm:$0xff]
    %v528 = vld [vmem:[#allocation2 + $0xbd0] sm:$0xff]
    %v529 = vld [vmem:[#allocation2 + $0xbd8] sm:$0xff]
    %v530 = vld [vmem:[#allocation2 + $0xbe0] sm:$0xff]
    %v531 = vld [vmem:[#allocation2 + $0xbe8] sm:$0xff]
    %v532 = vld [vmem:[#allocation2 + $0xbf0] sm:$0xff]
    %v533 = vld [vmem:[#allocation2 + $0xbf8] sm:$0xff]
    %v534 = vld [vmem:[#allocation2 + $0xc00] sm:$0xff]
    %v535 = vld [vmem:[#allocation2 + $0xc08] sm:$0xff]
    %v536 = vld [vmem:[#allocation2 + $0xc10] sm:$0xff]
    %v537 = vld [vmem:[#allocation2 + $0xc18] sm:$0xff]
    %v538 = vld [vmem:[#allocation2 + $0xc20] sm:$0xff]
    %v539 = vld [vmem:[#allocation2 + $0xc28] sm:$0xff]
    %v540 = vld [vmem:[#allocation2 + $0xc30] sm:$0xff]
    %v541 = vld [vmem:[#allocation2 + $0xc38] sm:$0xff]
    %v542 = vld [vmem:[#allocation2 + $0xc40] sm:$0xff]
    %v543 = vld [vmem:[#allocation2 + $0xc48] sm:$0xff]
    %v544 = vld [vmem:[#allocation2 + $0xc50] sm:$0xff]
    %v545 = vld [vmem:[#allocation2 + $0xc58] sm:$0xff]
    %v546 = vld [vmem:[#allocation2 + $0xc60] sm:$0xff]
    %v547 = vld [vmem:[#allocation2 + $0xc68] sm:$0xff]
    %v548 = vld [vmem:[#allocation2 + $0xc70] sm:$0xff]
    %v549 = vld [vmem:[#allocation2 + $0xc78] sm:$0xff]
    %v550 = vld [vmem:[#allocation2 + $0xc80] sm:$0xff]
    %v551 = vld [vmem:[#allocation2 + $0xc88] sm:$0xff]
    %v552 = vld [vmem:[#allocation2 + $0xc90] sm:$0xff]
    %v553 = vld [vmem:[#allocation2 + $0xc98] sm:$0xff]
    %v554 = vld [vmem:[#allocation2 + $0xca0] sm:$0xff]
    %v555 = vld [vmem:[#allocation2 + $0xca8] sm:$0xff]
    %v556 = vld [vmem:[#allocation2 + $0xcb0] sm:$0xff]
    %v557 = vld [vmem:[#allocation2 + $0xcb8] sm:$0xff]
    %v558 = vld [vmem:[#allocation2 + $0xcc0] sm:$0xff]
    %v559 = vld [vmem:[#allocation2 + $0xcc8] sm:$0xff]
    %v560 = vld [vmem:[#allocation2 + $0xcd0] sm:$0xff]
    %v561 = vld [vmem:[#allocation2 + $0xcd8] sm:$0xff]
    %v562 = vld [vmem:[#allocation2 + $0xce0] sm:$0xff]
    %v563 = vld [vmem:[#allocation2 + $0xce8] sm:$0xff]
    %v564 = vld [vmem:[#allocation2 + $0xcf0] sm:$0xff]
    %v565 = vld [vmem:[#allocation2 + $0xcf8] sm:$0xff]
    %v566 = vld [vmem:[#allocation2 + $0xd00] sm:$0xff]
    %v567 = vld [vmem:[#allocation2 + $0xd08] sm:$0xff]
    %v568 = vld [vmem:[#allocation2 + $0xd10] sm:$0xff]
    %v569 = vld [vmem:[#allocation2 + $0xd18] sm:$0xff]
    %v570 = vld [vmem:[#allocation2 + $0xd20] sm:$0xff]
    %v571 = vld [vmem:[#allocation2 + $0xd28] sm:$0xff]
    %v572 = vld [vmem:[#allocation2 + $0xd30] sm:$0xff]
    %v573 = vld [vmem:[#allocation2 + $0xd38] sm:$0xff]
    %v574 = vld [vmem:[#allocation2 + $0xd40] sm:$0xff]
    %v575 = vld [vmem:[#allocation2 + $0xd48] sm:$0xff]
    %v576 = vld [vmem:[#allocation2 + $0xd50] sm:$0xff]
    %v577 = vld [vmem:[#allocation2 + $0xd58] sm:$0xff]
    %v578 = vld [vmem:[#allocation2 + $0xd60] sm:$0xff]
    %v579 = vld [vmem:[#allocation2 + $0xd68] sm:$0xff]
    %v580 = vld [vmem:[#allocation2 + $0xd70] sm:$0xff]
    %v581 = vld [vmem:[#allocation2 + $0xd78] sm:$0xff]
    %v582 = vld [vmem:[#allocation2 + $0xd80] sm:$0xff]
    %v583 = vld [vmem:[#allocation2 + $0xd88] sm:$0xff]
    %v584 = vld [vmem:[#allocation2 + $0xd90] sm:$0xff]
    %v585 = vld [vmem:[#allocation2 + $0xd98] sm:$0xff]
    %v586 = vld [vmem:[#allocation2 + $0xda0] sm:$0xff]
    %v587 = vld [vmem:[#allocation2 + $0xda8] sm:$0xff]
    %v588 = vld [vmem:[#allocation2 + $0xdb0] sm:$0xff]
    %v589 = vld [vmem:[#allocation2 + $0xdb8] sm:$0xff]
    %v590 = vld [vmem:[#allocation2 + $0xdc0] sm:$0xff]
    %v591 = vld [vmem:[#allocation2 + $0xdc8] sm:$0xff]
    %v592 = vld [vmem:[#allocation2 + $0xdd0] sm:$0xff]
    %v593 = vld [vmem:[#allocation2 + $0xdd8] sm:$0xff]
    %v594 = vld [vmem:[#allocation2 + $0xde0] sm:$0xff]
    %v595 = vld [vmem:[#allocation2 + $0xde8] sm:$0xff]
    %v596 = vld [vmem:[#allocation2 + $0xdf0] sm:$0xff]
    %v597 = vld [vmem:[#allocation2 + $0xdf8] sm:$0xff]
    %v598 = vld [vmem:[#allocation2 + $0xe00] sm:$0x33]
    %v599 = vld [vmem:[#allocation2 + $0xe08] sm:$0x33]
    %v600 = vld [vmem:[#allocation2 + $0xe10] sm:$0x33]
    %v601 = vld [vmem:[#allocation2 + $0xe18] sm:$0x33]
    %v602 = vld [vmem:[#allocation4] sm:$0xff]
    %v604 = vlaneseq
    %v605 = vshrl.u32 %v604, 7
    %v606 = vsub.s32 0, %v605
    %v607 = vrot.slane %v602, %v606
    %v608 = vlaneseq
    %v609 = vshrl.u32 %v608, 7
    %v610 = vsub.s32 1, %v609
    %v611 = vrot.slane %v602, %v610
    %v612 = vlaneseq
    %v613 = vshrl.u32 %v612, 7
    %v614 = vsub.s32 2, %v613
    %v615 = vrot.slane %v602, %v614
    %v616 = vlaneseq
    %v617 = vshrl.u32 %v616, 7
    %v618 = vsub.s32 3, %v617
    %v619 = vrot.slane %v602, %v618
    %v620 = vlaneseq
    %v621 = vshrl.u32 %v620, 7
    %v622 = vsub.s32 4, %v621
    %v623 = vrot.slane %v602, %v622
    %v624 = vlaneseq
    %v625 = vshrl.u32 %v624, 7
    %v626 = vsub.s32 5, %v625
    %v627 = vrot.slane %v602, %v626
    %v628 = vlaneseq
    %v629 = vshrl.u32 %v628, 7
    %v630 = vsub.s32 6, %v629
    %v631 = vrot.slane %v602, %v630
    %v632 = vlaneseq
    %v633 = vshrl.u32 %v632, 7
    %v634 = vsub.s32 7, %v633
    %v635 = vrot.slane %v602, %v634
    %v1096 = vunpack.c.l.b16 %v150
    %v1097 = vunpack.c.h.b16 %v150
    %v1098 = vunpack.c.l.b16 %v151
    %v1099 = vunpack.c.h.b16 %v151
    %v1100 = vunpack.c.l.b16 %v152
    %v1101 = vunpack.c.h.b16 %v152
    %v1102 = vunpack.c.l.b16 %v153
    %v1103 = vunpack.c.h.b16 %v153
    %v1104 = vunpack.c.l.b16 %v154
    %v1105 = vunpack.c.h.b16 %v154
    %v1106 = vunpack.c.l.b16 %v155
    %v1107 = vunpack.c.h.b16 %v155
    %v1108 = vunpack.c.l.b16 %v156
    %v1109 = vunpack.c.h.b16 %v156
    %v1110 = vunpack.c.l.b16 %v157
    %v1111 = vunpack.c.h.b16 %v157
    %v1112 = vunpack.c.l.b16 %v158
    %v1113 = vunpack.c.h.b16 %v158
    %v1114 = vunpack.c.l.b16 %v159
    %v1115 = vunpack.c.h.b16 %v159
    %v1116 = vunpack.c.l.b16 %v160
    %v1117 = vunpack.c.h.b16 %v160
    %v1118 = vunpack.c.l.b16 %v161
    %v1119 = vunpack.c.h.b16 %v161
    %v1120 = vunpack.c.l.b16 %v162
    %v1121 = vunpack.c.h.b16 %v162
    %v1122 = vunpack.c.l.b16 %v163
    %v1123 = vunpack.c.h.b16 %v163
    %v1124 = vunpack.c.l.b16 %v164
    %v1125 = vunpack.c.h.b16 %v164
    %v1126 = vunpack.c.l.b16 %v165
    %v1127 = vunpack.c.h.b16 %v165
    %v1128 = vunpack.c.l.b16 %v166
    %v1129 = vunpack.c.h.b16 %v166
    %v1130 = vunpack.c.l.b16 %v167
    %v1131 = vunpack.c.h.b16 %v167
    %v1132 = vunpack.c.l.b16 %v168
    %v1133 = vunpack.c.h.b16 %v168
    %v1134 = vunpack.c.l.b16 %v169
    %v1135 = vunpack.c.h.b16 %v169
    %v1136 = vunpack.c.l.b16 %v170
    %v1137 = vunpack.c.h.b16 %v170
    %v1138 = vunpack.c.l.b16 %v171
    %v1139 = vunpack.c.h.b16 %v171
    %v1140 = vunpack.c.l.b16 %v172
    %v1141 = vunpack.c.h.b16 %v172
    %v1142 = vunpack.c.l.b16 %v173
    %v1143 = vunpack.c.h.b16 %v173
    %v1144 = vunpack.c.l.b16 %v174
    %v1145 = vunpack.c.h.b16 %v174
    %v1146 = vunpack.c.l.b16 %v175
    %v1147 = vunpack.c.h.b16 %v175
    %v1148 = vunpack.c.l.b16 %v176
    %v1149 = vunpack.c.h.b16 %v176
    %v1150 = vunpack.c.l.b16 %v177
    %v1151 = vunpack.c.h.b16 %v177
    %v1152 = vunpack.c.l.b16 %v178
    %v1153 = vunpack.c.h.b16 %v178
    %v1154 = vunpack.c.l.b16 %v179
    %v1155 = vunpack.c.h.b16 %v179
    %v1156 = vunpack.c.l.b16 %v180
    %v1157 = vunpack.c.h.b16 %v180
    %v1158 = vunpack.c.l.b16 %v181
    %v1159 = vunpack.c.h.b16 %v181
    %v1160 = vunpack.c.l.b16 %v182
    %v1161 = vunpack.c.h.b16 %v182
    %v1162 = vunpack.c.l.b16 %v183
    %v1163 = vunpack.c.h.b16 %v183
    %v1164 = vunpack.c.l.b16 %v184
    %v1165 = vunpack.c.h.b16 %v184
    %v1166 = vunpack.c.l.b16 %v185
    %v1167 = vunpack.c.h.b16 %v185
    %v1168 = vunpack.c.l.b16 %v186
    %v1169 = vunpack.c.h.b16 %v186
    %v1170 = vunpack.c.l.b16 %v187
    %v1171 = vunpack.c.h.b16 %v187
    %v1172 = vunpack.c.l.b16 %v188
    %v1173 = vunpack.c.h.b16 %v188
    %v1174 = vunpack.c.l.b16 %v189
    %v1175 = vunpack.c.h.b16 %v189
    %v1176 = vunpack.c.l.b16 %v190
    %v1177 = vunpack.c.h.b16 %v190
    %v1178 = vunpack.c.l.b16 %v191
    %v1179 = vunpack.c.h.b16 %v191
    %v1180 = vunpack.c.l.b16 %v192
    %v1181 = vunpack.c.h.b16 %v192
    %v1182 = vunpack.c.l.b16 %v193
    %v1183 = vunpack.c.h.b16 %v193
    %v1184 = vunpack.c.l.b16 %v194
    %v1185 = vunpack.c.h.b16 %v194
    %v1186 = vunpack.c.l.b16 %v195
    %v1187 = vunpack.c.h.b16 %v195
    %v1188 = vunpack.c.l.b16 %v196
    %v1189 = vunpack.c.h.b16 %v196
    %v1190 = vunpack.c.l.b16 %v197
    %v1191 = vunpack.c.h.b16 %v197
    %v1192 = vunpack.c.l.b16 %v198
    %v1193 = vunpack.c.h.b16 %v198
    %v1194 = vunpack.c.l.b16 %v199
    %v1195 = vunpack.c.h.b16 %v199
    %v1196 = vunpack.c.l.b16 %v200
    %v1197 = vunpack.c.h.b16 %v200
    %v1198 = vunpack.c.l.b16 %v201
    %v1199 = vunpack.c.h.b16 %v201
    %v1200 = vunpack.c.l.b16 %v202
    %v1201 = vunpack.c.h.b16 %v202
    %v1202 = vunpack.c.l.b16 %v203
    %v1203 = vunpack.c.h.b16 %v203
    %v1204 = vunpack.c.l.b16 %v204
    %v1205 = vunpack.c.h.b16 %v204
    %v1206 = vunpack.c.l.b16 %v205
    %v1207 = vunpack.c.h.b16 %v205
    %v1208 = vunpack.c.l.b16 %v206
    %v1209 = vunpack.c.h.b16 %v206
    %v1210 = vunpack.c.l.b16 %v207
    %v1211 = vunpack.c.h.b16 %v207
    %v1212 = vunpack.c.l.b16 %v208
    %v1213 = vunpack.c.h.b16 %v208
    %v1214 = vunpack.c.l.b16 %v209
    %v1215 = vunpack.c.h.b16 %v209
    %v1216 = vunpack.c.l.b16 %v210
    %v1217 = vunpack.c.h.b16 %v210
    %v1218 = vunpack.c.l.b16 %v211
    %v1219 = vunpack.c.h.b16 %v211
    %v1220 = vunpack.c.l.b16 %v212
    %v1221 = vunpack.c.h.b16 %v212
    %v1222 = vunpack.c.l.b16 %v213
    %v1223 = vunpack.c.h.b16 %v213
    %v1224 = vunpack.c.l.b16 %v214
    %v1225 = vunpack.c.h.b16 %v214
    %v1226 = vunpack.c.l.b16 %v215
    %v1227 = vunpack.c.h.b16 %v215
    %v1228 = vunpack.c.l.b16 %v216
    %v1229 = vunpack.c.h.b16 %v216
    %v1230 = vunpack.c.l.b16 %v217
    %v1231 = vunpack.c.h.b16 %v217
    %v1232 = vunpack.c.l.b16 %v218
    %v1233 = vunpack.c.h.b16 %v218
    %v1234 = vunpack.c.l.b16 %v219
    %v1235 = vunpack.c.h.b16 %v219
    %v1236 = vunpack.c.l.b16 %v220
    %v1237 = vunpack.c.h.b16 %v220
    %v1238 = vunpack.c.l.b16 %v221
    %v1239 = vunpack.c.h.b16 %v221
    %v1240 = vunpack.c.l.b16 %v222
    %v1241 = vunpack.c.h.b16 %v222
    %v1242 = vunpack.c.l.b16 %v223
    %v1243 = vunpack.c.h.b16 %v223
    %v1244 = vunpack.c.l.b16 %v224
    %v1245 = vunpack.c.h.b16 %v224
    %v1246 = vunpack.c.l.b16 %v225
    %v1247 = vunpack.c.h.b16 %v225
    %v1248 = vunpack.c.l.b16 %v226
    %v1249 = vunpack.c.h.b16 %v226
    %v1250 = vunpack.c.l.b16 %v227
    %v1251 = vunpack.c.h.b16 %v227
    %v1252 = vunpack.c.l.b16 %v228
    %v1253 = vunpack.c.h.b16 %v228
    %v1254 = vunpack.c.l.b16 %v229
    %v1255 = vunpack.c.h.b16 %v229
    %v1256 = vunpack.c.l.b16 %v230
    %v1257 = vunpack.c.h.b16 %v230
    %v1258 = vunpack.c.l.b16 %v231
    %v1259 = vunpack.c.h.b16 %v231
    %v1260 = vunpack.c.l.b16 %v232
    %v1261 = vunpack.c.h.b16 %v232
    %v1262 = vunpack.c.l.b16 %v233
    %v1263 = vunpack.c.h.b16 %v233
    %v1264 = vunpack.c.l.b16 %v234
    %v1265 = vunpack.c.h.b16 %v234
    %v1266 = vunpack.c.l.b16 %v235
    %v1267 = vunpack.c.h.b16 %v235
    %v1268 = vunpack.c.l.b16 %v236
    %v1269 = vunpack.c.h.b16 %v236
    %v1270 = vunpack.c.l.b16 %v237
    %v1271 = vunpack.c.h.b16 %v237
    %v1272 = vunpack.c.l.b16 %v238
    %v1273 = vunpack.c.h.b16 %v238
    %v1274 = vunpack.c.l.b16 %v239
    %v1275 = vunpack.c.h.b16 %v239
    %v1276 = vunpack.c.l.b16 %v240
    %v1277 = vunpack.c.h.b16 %v240
    %v1278 = vunpack.c.l.b16 %v241
    %v1279 = vunpack.c.h.b16 %v241
    %v1280 = vunpack.c.l.b16 %v242
    %v1281 = vunpack.c.h.b16 %v242
    %v1282 = vunpack.c.l.b16 %v243
    %v1283 = vunpack.c.h.b16 %v243
    %v1284 = vunpack.c.l.b16 %v244
    %v1285 = vunpack.c.h.b16 %v244
    %v1286 = vunpack.c.l.b16 %v245
    %v1287 = vunpack.c.h.b16 %v245
    %v1288 = vunpack.c.l.b16 %v246
    %v1289 = vunpack.c.h.b16 %v246
    %v1290 = vunpack.c.l.b16 %v247
    %v1291 = vunpack.c.h.b16 %v247
    %v1292 = vunpack.c.l.b16 %v248
    %v1293 = vunpack.c.h.b16 %v248
    %v1294 = vunpack.c.l.b16 %v249
    %v1295 = vunpack.c.h.b16 %v249
    %v1296 = vunpack.c.l.b16 %v250
    %v1297 = vunpack.c.h.b16 %v250
    %v1298 = vunpack.c.l.b16 %v251
    %v1299 = vunpack.c.h.b16 %v251
    %v1300 = vunpack.c.l.b16 %v252
    %v1301 = vunpack.c.h.b16 %v252
    %v1302 = vunpack.c.l.b16 %v253
    %v1303 = vunpack.c.h.b16 %v253
    %v1304 = vunpack.c.l.b16 %v254
    %v1305 = vunpack.c.h.b16 %v254
    %v1306 = vunpack.c.l.b16 %v255
    %v1307 = vunpack.c.h.b16 %v255
    %v1308 = vunpack.c.l.b16 %v256
    %v1309 = vunpack.c.h.b16 %v256
    %v1310 = vunpack.c.l.b16 %v257
    %v1311 = vunpack.c.h.b16 %v257
    %v1312 = vunpack.c.l.b16 %v258
    %v1313 = vunpack.c.h.b16 %v258
    %v1314 = vunpack.c.l.b16 %v259
    %v1315 = vunpack.c.h.b16 %v259
    %v1316 = vunpack.c.l.b16 %v260
    %v1317 = vunpack.c.h.b16 %v260
    %v1318 = vunpack.c.l.b16 %v261
    %v1319 = vunpack.c.h.b16 %v261
    %v1320 = vunpack.c.l.b16 %v262
    %v1321 = vunpack.c.h.b16 %v262
    %v1322 = vunpack.c.l.b16 %v263
    %v1323 = vunpack.c.h.b16 %v263
    %v1324 = vunpack.c.l.b16 %v264
    %v1325 = vunpack.c.h.b16 %v264
    %v1326 = vunpack.c.l.b16 %v265
    %v1327 = vunpack.c.h.b16 %v265
    %v1328 = vunpack.c.l.b16 %v266
    %v1329 = vunpack.c.h.b16 %v266
    %v1330 = vunpack.c.l.b16 %v267
    %v1331 = vunpack.c.h.b16 %v267
    %v1332 = vunpack.c.l.b16 %v268
    %v1333 = vunpack.c.h.b16 %v268
    %v1334 = vunpack.c.l.b16 %v269
    %v1335 = vunpack.c.h.b16 %v269
    %v1336 = vunpack.c.l.b16 %v270
    %v1337 = vunpack.c.h.b16 %v270
    %v1338 = vunpack.c.l.b16 %v271
    %v1339 = vunpack.c.h.b16 %v271
    %v1340 = vunpack.c.l.b16 %v272
    %v1341 = vunpack.c.h.b16 %v272
    %v1342 = vunpack.c.l.b16 %v273
    %v1343 = vunpack.c.h.b16 %v273
    %v1344 = vunpack.c.l.b16 %v274
    %v1345 = vunpack.c.h.b16 %v274
    %v1346 = vunpack.c.l.b16 %v275
    %v1347 = vunpack.c.h.b16 %v275
    %v1348 = vunpack.c.l.b16 %v276
    %v1349 = vunpack.c.h.b16 %v276
    %v1350 = vunpack.c.l.b16 %v277
    %v1351 = vunpack.c.h.b16 %v277
    %v1352 = vunpack.c.l.b16 %v278
    %v1353 = vunpack.c.h.b16 %v278
    %v1354 = vunpack.c.l.b16 %v279
    %v1355 = vunpack.c.h.b16 %v279
    %v1356 = vunpack.c.l.b16 %v280
    %v1357 = vunpack.c.h.b16 %v280
    %v1358 = vunpack.c.l.b16 %v281
    %v1359 = vunpack.c.h.b16 %v281
    %v1360 = vunpack.c.l.b16 %v282
    %v1361 = vunpack.c.h.b16 %v282
    %v1362 = vunpack.c.l.b16 %v283
    %v1363 = vunpack.c.h.b16 %v283
    %v1364 = vunpack.c.l.b16 %v284
    %v1365 = vunpack.c.h.b16 %v284
    %v1366 = vunpack.c.l.b16 %v285
    %v1367 = vunpack.c.h.b16 %v285
    %v1368 = vunpack.c.l.b16 %v286
    %v1369 = vunpack.c.h.b16 %v286
    %v1370 = vunpack.c.l.b16 %v287
    %v1371 = vunpack.c.h.b16 %v287
    %v1372 = vunpack.c.l.b16 %v288
    %v1373 = vunpack.c.h.b16 %v288
    %v1374 = vunpack.c.l.b16 %v289
    %v1375 = vunpack.c.h.b16 %v289
    %v1376 = vunpack.c.l.b16 %v290
    %v1377 = vunpack.c.h.b16 %v290
    %v1378 = vunpack.c.l.b16 %v291
    %v1379 = vunpack.c.h.b16 %v291
    %v1380 = vunpack.c.l.b16 %v292
    %v1381 = vunpack.c.h.b16 %v292
    %v1382 = vunpack.c.l.b16 %v293
    %v1383 = vunpack.c.h.b16 %v293
    %v1384 = vunpack.c.l.b16 %v294
    %v1385 = vunpack.c.h.b16 %v294
    %v1386 = vunpack.c.l.b16 %v295
    %v1387 = vunpack.c.h.b16 %v295
    %v1388 = vunpack.c.l.b16 %v296
    %v1389 = vunpack.c.h.b16 %v296
    %v1390 = vunpack.c.l.b16 %v297
    %v1391 = vunpack.c.h.b16 %v297
    %v1392 = vunpack.c.l.b16 %v298
    %v1393 = vunpack.c.h.b16 %v298
    %v1394 = vunpack.c.l.b16 %v299
    %v1395 = vunpack.c.h.b16 %v299
    %v1396 = vunpack.c.l.b16 %v300
    %v1397 = vunpack.c.h.b16 %v300
    %v1398 = vunpack.c.l.b16 %v301
    %v1399 = vunpack.c.h.b16 %v301
    %v1400 = vunpack.c.l.b16 %v302
    %v1401 = vunpack.c.h.b16 %v302
    %v1402 = vunpack.c.l.b16 %v303
    %v1403 = vunpack.c.h.b16 %v303
    %v1404 = vunpack.c.l.b16 %v304
    %v1405 = vunpack.c.h.b16 %v304
    %v1406 = vunpack.c.l.b16 %v305
    %v1407 = vunpack.c.h.b16 %v305
    %v1408 = vunpack.c.l.b16 %v306
    %v1409 = vunpack.c.h.b16 %v306
    %v1410 = vunpack.c.l.b16 %v307
    %v1411 = vunpack.c.h.b16 %v307
    %v1412 = vunpack.c.l.b16 %v308
    %v1413 = vunpack.c.h.b16 %v308
    %v1414 = vunpack.c.l.b16 %v309
    %v1415 = vunpack.c.h.b16 %v309
    %v1416 = vunpack.c.l.b16 %v310
    %v1417 = vunpack.c.h.b16 %v310
    %v1418 = vunpack.c.l.b16 %v311
    %v1419 = vunpack.c.h.b16 %v311
    %v1420 = vunpack.c.l.b16 %v312
    %v1421 = vunpack.c.h.b16 %v312
    %v1422 = vunpack.c.l.b16 %v313
    %v1423 = vunpack.c.h.b16 %v313
    %v1424 = vunpack.c.l.b16 %v314
    %v1425 = vunpack.c.h.b16 %v314
    %v1426 = vunpack.c.l.b16 %v315
    %v1427 = vunpack.c.h.b16 %v315
    %v1428 = vunpack.c.l.b16 %v316
    %v1429 = vunpack.c.h.b16 %v316
    %v1430 = vunpack.c.l.b16 %v317
    %v1431 = vunpack.c.h.b16 %v317
    %v1432 = vunpack.c.l.b16 %v318
    %v1433 = vunpack.c.h.b16 %v318
    %v1434 = vunpack.c.l.b16 %v319
    %v1435 = vunpack.c.h.b16 %v319
    %v1436 = vunpack.c.l.b16 %v320
    %v1437 = vunpack.c.h.b16 %v320
    %v1438 = vunpack.c.l.b16 %v321
    %v1439 = vunpack.c.h.b16 %v321
    %v1440 = vunpack.c.l.b16 %v322
    %v1441 = vunpack.c.h.b16 %v322
    %v1442 = vunpack.c.l.b16 %v323
    %v1443 = vunpack.c.h.b16 %v323
    %v1444 = vunpack.c.l.b16 %v324
    %v1445 = vunpack.c.h.b16 %v324
    %v1446 = vunpack.c.l.b16 %v325
    %v1447 = vunpack.c.h.b16 %v325
    %v1448 = vunpack.c.l.b16 %v326
    %v1449 = vunpack.c.h.b16 %v326
    %v1450 = vunpack.c.l.b16 %v327
    %v1451 = vunpack.c.h.b16 %v327
    %v1452 = vunpack.c.l.b16 %v328
    %v1453 = vunpack.c.h.b16 %v328
    %v1454 = vunpack.c.l.b16 %v329
    %v1455 = vunpack.c.h.b16 %v329
    %v1456 = vunpack.c.l.b16 %v330
    %v1457 = vunpack.c.h.b16 %v330
    %v1458 = vunpack.c.l.b16 %v331
    %v1459 = vunpack.c.h.b16 %v331
    %v1460 = vunpack.c.l.b16 %v332
    %v1461 = vunpack.c.h.b16 %v332
    %v1462 = vunpack.c.l.b16 %v333
    %v1463 = vunpack.c.h.b16 %v333
    %v1464 = vunpack.c.l.b16 %v334
    %v1465 = vunpack.c.h.b16 %v334
    %v1466 = vunpack.c.l.b16 %v335
    %v1467 = vunpack.c.h.b16 %v335
    %v1468 = vunpack.c.l.b16 %v336
    %v1469 = vunpack.c.h.b16 %v336
    %v1470 = vunpack.c.l.b16 %v337
    %v1471 = vunpack.c.h.b16 %v337
    %v1472 = vunpack.c.l.b16 %v338
    %v1473 = vunpack.c.h.b16 %v338
    %v1474 = vunpack.c.l.b16 %v339
    %v1475 = vunpack.c.h.b16 %v339
    %v1476 = vunpack.c.l.b16 %v340
    %v1477 = vunpack.c.h.b16 %v340
    %v1478 = vunpack.c.l.b16 %v341
    %v1479 = vunpack.c.h.b16 %v341
    %v1480 = vunpack.c.l.b16 %v342
    %v1481 = vunpack.c.h.b16 %v342
    %v1482 = vunpack.c.l.b16 %v343
    %v1483 = vunpack.c.h.b16 %v343
    %v1484 = vunpack.c.l.b16 %v344
    %v1485 = vunpack.c.h.b16 %v344
    %v1486 = vunpack.c.l.b16 %v345
    %v1487 = vunpack.c.h.b16 %v345
    %v1488 = vunpack.c.l.b16 %v346
    %v1489 = vunpack.c.h.b16 %v346
    %v1490 = vunpack.c.l.b16 %v347
    %v1491 = vunpack.c.h.b16 %v347
    %v1492 = vunpack.c.l.b16 %v348
    %v1493 = vunpack.c.h.b16 %v348
    %v1494 = vunpack.c.l.b16 %v349
    %v1495 = vunpack.c.h.b16 %v349
    %v1496 = vunpack.c.l.b16 %v350
    %v1497 = vunpack.c.h.b16 %v350
    %v1498 = vunpack.c.l.b16 %v351
    %v1499 = vunpack.c.h.b16 %v351
    %v1500 = vunpack.c.l.b16 %v352
    %v1501 = vunpack.c.h.b16 %v352
    %v1502 = vunpack.c.l.b16 %v353
    %v1503 = vunpack.c.h.b16 %v353
    %v1504 = vunpack.c.l.b16 %v354
    %v1505 = vunpack.c.h.b16 %v354
    %v1506 = vunpack.c.l.b16 %v355
    %v1507 = vunpack.c.h.b16 %v355
    %v1508 = vunpack.c.l.b16 %v356
    %v1509 = vunpack.c.h.b16 %v356
    %v1510 = vunpack.c.l.b16 %v357
    %v1511 = vunpack.c.h.b16 %v357
    %v1512 = vunpack.c.l.b16 %v358
    %v1513 = vunpack.c.h.b16 %v358
    %v1514 = vunpack.c.l.b16 %v359
    %v1515 = vunpack.c.h.b16 %v359
    %v1516 = vunpack.c.l.b16 %v360
    %v1517 = vunpack.c.h.b16 %v360
    %v1518 = vunpack.c.l.b16 %v361
    %v1519 = vunpack.c.h.b16 %v361
    %v1520 = vunpack.c.l.b16 %v362
    %v1521 = vunpack.c.h.b16 %v362
    %v1522 = vunpack.c.l.b16 %v363
    %v1523 = vunpack.c.h.b16 %v363
    %v1524 = vunpack.c.l.b16 %v364
    %v1525 = vunpack.c.h.b16 %v364
    %v1526 = vunpack.c.l.b16 %v365
    %v1527 = vunpack.c.h.b16 %v365
    %v1528 = vunpack.c.l.b16 %v366
    %v1529 = vunpack.c.h.b16 %v366
    %v1530 = vunpack.c.l.b16 %v367
    %v1531 = vunpack.c.h.b16 %v367
    %v1532 = vunpack.c.l.b16 %v368
    %v1533 = vunpack.c.h.b16 %v368
    %v1534 = vunpack.c.l.b16 %v369
    %v1535 = vunpack.c.h.b16 %v369
    %v1536 = vunpack.c.l.b16 %v370
    %v1537 = vunpack.c.h.b16 %v370
    %v1538 = vunpack.c.l.b16 %v371
    %v1539 = vunpack.c.h.b16 %v371
    %v1540 = vunpack.c.l.b16 %v372
    %v1541 = vunpack.c.h.b16 %v372
    %v1542 = vunpack.c.l.b16 %v373
    %v1543 = vunpack.c.h.b16 %v373
    %v1544 = vunpack.c.l.b16 %v374
    %v1545 = vunpack.c.h.b16 %v374
    %v1546 = vunpack.c.l.b16 %v375
    %v1547 = vunpack.c.h.b16 %v375
    %v1548 = vunpack.c.l.b16 %v376
    %v1549 = vunpack.c.h.b16 %v376
    %v1550 = vunpack.c.l.b16 %v377
    %v1551 = vunpack.c.h.b16 %v377
    %v1552 = vunpack.c.l.b16 %v378
    %v1553 = vunpack.c.h.b16 %v378
    %v1554 = vunpack.c.l.b16 %v379
    %v1555 = vunpack.c.h.b16 %v379
    %v1556 = vunpack.c.l.b16 %v380
    %v1557 = vunpack.c.h.b16 %v380
    %v1558 = vunpack.c.l.b16 %v381
    %v1559 = vunpack.c.h.b16 %v381
    %v1560 = vunpack.c.l.b16 %v382
    %v1561 = vunpack.c.h.b16 %v382
    %v1562 = vunpack.c.l.b16 %v383
    %v1563 = vunpack.c.h.b16 %v383
    %v1564 = vunpack.c.l.b16 %v384
    %v1565 = vunpack.c.h.b16 %v384
    %v1566 = vunpack.c.l.b16 %v385
    %v1567 = vunpack.c.h.b16 %v385
    %v1568 = vunpack.c.l.b16 %v386
    %v1569 = vunpack.c.h.b16 %v386
    %v1570 = vunpack.c.l.b16 %v387
    %v1571 = vunpack.c.h.b16 %v387
    %v1572 = vunpack.c.l.b16 %v388
    %v1573 = vunpack.c.h.b16 %v388
    %v1574 = vunpack.c.l.b16 %v389
    %v1575 = vunpack.c.h.b16 %v389
    %v1576 = vunpack.c.l.b16 %v390
    %v1577 = vunpack.c.h.b16 %v390
    %v1578 = vunpack.c.l.b16 %v391
    %v1579 = vunpack.c.h.b16 %v391
    %v1580 = vunpack.c.l.b16 %v392
    %v1581 = vunpack.c.h.b16 %v392
    %v1582 = vunpack.c.l.b16 %v393
    %v1583 = vunpack.c.h.b16 %v393
    %v1584 = vunpack.c.l.b16 %v394
    %v1585 = vunpack.c.h.b16 %v394
    %v1586 = vunpack.c.l.b16 %v395
    %v1587 = vunpack.c.h.b16 %v395
    %v1588 = vunpack.c.l.b16 %v396
    %v1589 = vunpack.c.h.b16 %v396
    %v1590 = vunpack.c.l.b16 %v397
    %v1591 = vunpack.c.h.b16 %v397
    %v1592 = vunpack.c.l.b16 %v398
    %v1593 = vunpack.c.h.b16 %v398
    %v1594 = vunpack.c.l.b16 %v399
    %v1595 = vunpack.c.h.b16 %v399
    %v1596 = vunpack.c.l.b16 %v400
    %v1597 = vunpack.c.h.b16 %v400
    %v1598 = vunpack.c.l.b16 %v401
    %v1599 = vunpack.c.h.b16 %v401
    %v1600 = vunpack.c.l.b16 %v402
    %v1601 = vunpack.c.h.b16 %v402
    %v1602 = vunpack.c.l.b16 %v403
    %v1603 = vunpack.c.h.b16 %v403
    %v1604 = vunpack.c.l.b16 %v404
    %v1605 = vunpack.c.h.b16 %v404
    %v1606 = vunpack.c.l.b16 %v405
    %v1607 = vunpack.c.h.b16 %v405
    %v1608 = vunpack.c.l.b16 %v406
    %v1609 = vunpack.c.h.b16 %v406
    %v1610 = vunpack.c.l.b16 %v407
    %v1611 = vunpack.c.h.b16 %v407
    %v1612 = vunpack.c.l.b16 %v408
    %v1613 = vunpack.c.h.b16 %v408
    %v1614 = vunpack.c.l.b16 %v409
    %v1615 = vunpack.c.h.b16 %v409
    %v1616 = vunpack.c.l.b16 %v410
    %v1617 = vunpack.c.h.b16 %v410
    %v1618 = vunpack.c.l.b16 %v411
    %v1619 = vunpack.c.h.b16 %v411
    %v1620 = vunpack.c.l.b16 %v412
    %v1621 = vunpack.c.h.b16 %v412
    %v1622 = vunpack.c.l.b16 %v413
    %v1623 = vunpack.c.h.b16 %v413
    %v1624 = vunpack.c.l.b16 %v414
    %v1625 = vunpack.c.h.b16 %v414
    %v1626 = vunpack.c.l.b16 %v415
    %v1627 = vunpack.c.h.b16 %v415
    %v1628 = vunpack.c.l.b16 %v416
    %v1629 = vunpack.c.h.b16 %v416
    %v1630 = vunpack.c.l.b16 %v417
    %v1631 = vunpack.c.h.b16 %v417
    %v1632 = vunpack.c.l.b16 %v418
    %v1633 = vunpack.c.h.b16 %v418
    %v1634 = vunpack.c.l.b16 %v419
    %v1635 = vunpack.c.h.b16 %v419
    %v1636 = vunpack.c.l.b16 %v420
    %v1637 = vunpack.c.h.b16 %v420
    %v1638 = vunpack.c.l.b16 %v421
    %v1639 = vunpack.c.h.b16 %v421
    %v1640 = vunpack.c.l.b16 %v422
    %v1641 = vunpack.c.h.b16 %v422
    %v1642 = vunpack.c.l.b16 %v423
    %v1643 = vunpack.c.h.b16 %v423
    %v1644 = vunpack.c.l.b16 %v424
    %v1645 = vunpack.c.h.b16 %v424
    %v1646 = vunpack.c.l.b16 %v425
    %v1647 = vunpack.c.h.b16 %v425
    %v1648 = vunpack.c.l.b16 %v426
    %v1649 = vunpack.c.h.b16 %v426
    %v1650 = vunpack.c.l.b16 %v427
    %v1651 = vunpack.c.h.b16 %v427
    %v1652 = vunpack.c.l.b16 %v428
    %v1653 = vunpack.c.h.b16 %v428
    %v1654 = vunpack.c.l.b16 %v429
    %v1655 = vunpack.c.h.b16 %v429
    %v1656 = vunpack.c.l.b16 %v430
    %v1657 = vunpack.c.h.b16 %v430
    %v1658 = vunpack.c.l.b16 %v431
    %v1659 = vunpack.c.h.b16 %v431
    %v1660 = vunpack.c.l.b16 %v432
    %v1661 = vunpack.c.h.b16 %v432
    %v1662 = vunpack.c.l.b16 %v433
    %v1663 = vunpack.c.h.b16 %v433
    %v1664 = vunpack.c.l.b16 %v434
    %v1665 = vunpack.c.h.b16 %v434
    %v1666 = vunpack.c.l.b16 %v435
    %v1667 = vunpack.c.h.b16 %v435
    %v1668 = vunpack.c.l.b16 %v436
    %v1669 = vunpack.c.h.b16 %v436
    %v1670 = vunpack.c.l.b16 %v437
    %v1671 = vunpack.c.h.b16 %v437
    %v1672 = vunpack.c.l.b16 %v438
    %v1673 = vunpack.c.h.b16 %v438
    %v1674 = vunpack.c.l.b16 %v439
    %v1675 = vunpack.c.h.b16 %v439
    %v1676 = vunpack.c.l.b16 %v440
    %v1677 = vunpack.c.h.b16 %v440
    %v1678 = vunpack.c.l.b16 %v441
    %v1679 = vunpack.c.h.b16 %v441
    %v1680 = vunpack.c.l.b16 %v442
    %v1681 = vunpack.c.h.b16 %v442
    %v1682 = vunpack.c.l.b16 %v443
    %v1683 = vunpack.c.h.b16 %v443
    %v1684 = vunpack.c.l.b16 %v444
    %v1685 = vunpack.c.h.b16 %v444
    %v1686 = vunpack.c.l.b16 %v445
    %v1687 = vunpack.c.h.b16 %v445
    %v1688 = vunpack.c.l.b16 %v446
    %v1689 = vunpack.c.h.b16 %v446
    %v1690 = vunpack.c.l.b16 %v447
    %v1691 = vunpack.c.h.b16 %v447
    %v1692 = vunpack.c.l.b16 %v448
    %v1693 = vunpack.c.h.b16 %v448
    %v1694 = vunpack.c.l.b16 %v449
    %v1695 = vunpack.c.h.b16 %v449
    %v1696 = vunpack.c.l.b16 %v450
    %v1697 = vunpack.c.h.b16 %v450
    %v1698 = vunpack.c.l.b16 %v451
    %v1699 = vunpack.c.h.b16 %v451
    %v1700 = vunpack.c.l.b16 %v452
    %v1701 = vunpack.c.h.b16 %v452
    %v1702 = vunpack.c.l.b16 %v453
    %v1703 = vunpack.c.h.b16 %v453
    %v1704 = vunpack.c.l.b16 %v454
    %v1705 = vunpack.c.h.b16 %v454
    %v1706 = vunpack.c.l.b16 %v455
    %v1707 = vunpack.c.h.b16 %v455
    %v1708 = vunpack.c.l.b16 %v456
    %v1709 = vunpack.c.h.b16 %v456
    %v1710 = vunpack.c.l.b16 %v457
    %v1711 = vunpack.c.h.b16 %v457
    %v1712 = vunpack.c.l.b16 %v458
    %v1713 = vunpack.c.h.b16 %v458
    %v1714 = vunpack.c.l.b16 %v459
    %v1715 = vunpack.c.h.b16 %v459
    %v1716 = vunpack.c.l.b16 %v460
    %v1717 = vunpack.c.h.b16 %v460
    %v1718 = vunpack.c.l.b16 %v461
    %v1719 = vunpack.c.h.b16 %v461
    %v1720 = vunpack.c.l.b16 %v462
    %v1721 = vunpack.c.h.b16 %v462
    %v1722 = vunpack.c.l.b16 %v463
    %v1723 = vunpack.c.h.b16 %v463
    %v1724 = vunpack.c.l.b16 %v464
    %v1725 = vunpack.c.h.b16 %v464
    %v1726 = vunpack.c.l.b16 %v465
    %v1727 = vunpack.c.h.b16 %v465
    %v1728 = vunpack.c.l.b16 %v466
    %v1729 = vunpack.c.h.b16 %v466
    %v1730 = vunpack.c.l.b16 %v467
    %v1731 = vunpack.c.h.b16 %v467
    %v1732 = vunpack.c.l.b16 %v468
    %v1733 = vunpack.c.h.b16 %v468
    %v1734 = vunpack.c.l.b16 %v469
    %v1735 = vunpack.c.h.b16 %v469
    %v1736 = vunpack.c.l.b16 %v470
    %v1737 = vunpack.c.h.b16 %v470
    %v1738 = vunpack.c.l.b16 %v471
    %v1739 = vunpack.c.h.b16 %v471
    %v1740 = vunpack.c.l.b16 %v472
    %v1741 = vunpack.c.h.b16 %v472
    %v1742 = vunpack.c.l.b16 %v473
    %v1743 = vunpack.c.h.b16 %v473
    %v1744 = vunpack.c.l.b16 %v474
    %v1745 = vunpack.c.h.b16 %v474
    %v1746 = vunpack.c.l.b16 %v475
    %v1747 = vunpack.c.h.b16 %v475
    %v1748 = vunpack.c.l.b16 %v476
    %v1749 = vunpack.c.h.b16 %v476
    %v1750 = vunpack.c.l.b16 %v477
    %v1751 = vunpack.c.h.b16 %v477
    %v1752 = vunpack.c.l.b16 %v478
    %v1753 = vunpack.c.h.b16 %v478
    %v1754 = vunpack.c.l.b16 %v479
    %v1755 = vunpack.c.h.b16 %v479
    %v1756 = vunpack.c.l.b16 %v480
    %v1757 = vunpack.c.h.b16 %v480
    %v1758 = vunpack.c.l.b16 %v481
    %v1759 = vunpack.c.h.b16 %v481
    %v1760 = vunpack.c.l.b16 %v482
    %v1761 = vunpack.c.h.b16 %v482
    %v1762 = vunpack.c.l.b16 %v483
    %v1763 = vunpack.c.h.b16 %v483
    %v1764 = vunpack.c.l.b16 %v484
    %v1765 = vunpack.c.h.b16 %v484
    %v1766 = vunpack.c.l.b16 %v485
    %v1767 = vunpack.c.h.b16 %v485
    %v1768 = vunpack.c.l.b16 %v486
    %v1769 = vunpack.c.h.b16 %v486
    %v1770 = vunpack.c.l.b16 %v487
    %v1771 = vunpack.c.h.b16 %v487
    %v1772 = vunpack.c.l.b16 %v488
    %v1773 = vunpack.c.h.b16 %v488
    %v1774 = vunpack.c.l.b16 %v489
    %v1775 = vunpack.c.h.b16 %v489
    %v1776 = vunpack.c.l.b16 %v490
    %v1777 = vunpack.c.h.b16 %v490
    %v1778 = vunpack.c.l.b16 %v491
    %v1779 = vunpack.c.h.b16 %v491
    %v1780 = vunpack.c.l.b16 %v492
    %v1781 = vunpack.c.h.b16 %v492
    %v1782 = vunpack.c.l.b16 %v493
    %v1783 = vunpack.c.h.b16 %v493
    %v1784 = vunpack.c.l.b16 %v494
    %v1785 = vunpack.c.h.b16 %v494
    %v1786 = vunpack.c.l.b16 %v495
    %v1787 = vunpack.c.h.b16 %v495
    %v1788 = vunpack.c.l.b16 %v496
    %v1789 = vunpack.c.h.b16 %v496
    %v1790 = vunpack.c.l.b16 %v497
    %v1791 = vunpack.c.h.b16 %v497
    %v1792 = vunpack.c.l.b16 %v498
    %v1793 = vunpack.c.h.b16 %v498
    %v1794 = vunpack.c.l.b16 %v499
    %v1795 = vunpack.c.h.b16 %v499
    %v1796 = vunpack.c.l.b16 %v500
    %v1797 = vunpack.c.h.b16 %v500
    %v1798 = vunpack.c.l.b16 %v501
    %v1799 = vunpack.c.h.b16 %v501
    %v1800 = vunpack.c.l.b16 %v502
    %v1801 = vunpack.c.h.b16 %v502
    %v1802 = vunpack.c.l.b16 %v503
    %v1803 = vunpack.c.h.b16 %v503
    %v1804 = vunpack.c.l.b16 %v504
    %v1805 = vunpack.c.h.b16 %v504
    %v1806 = vunpack.c.l.b16 %v505
    %v1807 = vunpack.c.h.b16 %v505
    %v1808 = vunpack.c.l.b16 %v506
    %v1809 = vunpack.c.h.b16 %v506
    %v1810 = vunpack.c.l.b16 %v507
    %v1811 = vunpack.c.h.b16 %v507
    %v1812 = vunpack.c.l.b16 %v508
    %v1813 = vunpack.c.h.b16 %v508
    %v1814 = vunpack.c.l.b16 %v509
    %v1815 = vunpack.c.h.b16 %v509
    %v1816 = vunpack.c.l.b16 %v510
    %v1817 = vunpack.c.h.b16 %v510
    %v1818 = vunpack.c.l.b16 %v511
    %v1819 = vunpack.c.h.b16 %v511
    %v1820 = vunpack.c.l.b16 %v512
    %v1821 = vunpack.c.h.b16 %v512
    %v1822 = vunpack.c.l.b16 %v513
    %v1823 = vunpack.c.h.b16 %v513
    %v1824 = vunpack.c.l.b16 %v514
    %v1825 = vunpack.c.h.b16 %v514
    %v1826 = vunpack.c.l.b16 %v515
    %v1827 = vunpack.c.h.b16 %v515
    %v1828 = vunpack.c.l.b16 %v516
    %v1829 = vunpack.c.h.b16 %v516
    %v1830 = vunpack.c.l.b16 %v517
    %v1831 = vunpack.c.h.b16 %v517
    %v1832 = vunpack.c.l.b16 %v518
    %v1833 = vunpack.c.h.b16 %v518
    %v1834 = vunpack.c.l.b16 %v519
    %v1835 = vunpack.c.h.b16 %v519
    %v1836 = vunpack.c.l.b16 %v520
    %v1837 = vunpack.c.h.b16 %v520
    %v1838 = vunpack.c.l.b16 %v521
    %v1839 = vunpack.c.h.b16 %v521
    %v1840 = vunpack.c.l.b16 %v522
    %v1841 = vunpack.c.h.b16 %v522
    %v1842 = vunpack.c.l.b16 %v523
    %v1843 = vunpack.c.h.b16 %v523
    %v1844 = vunpack.c.l.b16 %v524
    %v1845 = vunpack.c.h.b16 %v524
    %v1846 = vunpack.c.l.b16 %v525
    %v1847 = vunpack.c.h.b16 %v525
    %v1848 = vunpack.c.l.b16 %v526
    %v1849 = vunpack.c.h.b16 %v526
    %v1850 = vunpack.c.l.b16 %v527
    %v1851 = vunpack.c.h.b16 %v527
    %v1852 = vunpack.c.l.b16 %v528
    %v1853 = vunpack.c.h.b16 %v528
    %v1854 = vunpack.c.l.b16 %v529
    %v1855 = vunpack.c.h.b16 %v529
    %v1856 = vunpack.c.l.b16 %v530
    %v1857 = vunpack.c.h.b16 %v530
    %v1858 = vunpack.c.l.b16 %v531
    %v1859 = vunpack.c.h.b16 %v531
    %v1860 = vunpack.c.l.b16 %v532
    %v1861 = vunpack.c.h.b16 %v532
    %v1862 = vunpack.c.l.b16 %v533
    %v1863 = vunpack.c.h.b16 %v533
    %v1864 = vunpack.c.l.b16 %v534
    %v1865 = vunpack.c.h.b16 %v534
    %v1866 = vunpack.c.l.b16 %v535
    %v1867 = vunpack.c.h.b16 %v535
    %v1868 = vunpack.c.l.b16 %v536
    %v1869 = vunpack.c.h.b16 %v536
    %v1870 = vunpack.c.l.b16 %v537
    %v1871 = vunpack.c.h.b16 %v537
    %v1872 = vunpack.c.l.b16 %v538
    %v1873 = vunpack.c.h.b16 %v538
    %v1874 = vunpack.c.l.b16 %v539
    %v1875 = vunpack.c.h.b16 %v539
    %v1876 = vunpack.c.l.b16 %v540
    %v1877 = vunpack.c.h.b16 %v540
    %v1878 = vunpack.c.l.b16 %v541
    %v1879 = vunpack.c.h.b16 %v541
    %v1880 = vunpack.c.l.b16 %v542
    %v1881 = vunpack.c.h.b16 %v542
    %v1882 = vunpack.c.l.b16 %v543
    %v1883 = vunpack.c.h.b16 %v543
    %v1884 = vunpack.c.l.b16 %v544
    %v1885 = vunpack.c.h.b16 %v544
    %v1886 = vunpack.c.l.b16 %v545
    %v1887 = vunpack.c.h.b16 %v545
    %v1888 = vunpack.c.l.b16 %v546
    %v1889 = vunpack.c.h.b16 %v546
    %v1890 = vunpack.c.l.b16 %v547
    %v1891 = vunpack.c.h.b16 %v547
    %v1892 = vunpack.c.l.b16 %v548
    %v1893 = vunpack.c.h.b16 %v548
    %v1894 = vunpack.c.l.b16 %v549
    %v1895 = vunpack.c.h.b16 %v549
    %v1896 = vunpack.c.l.b16 %v550
    %v1897 = vunpack.c.h.b16 %v550
    %v1898 = vunpack.c.l.b16 %v551
    %v1899 = vunpack.c.h.b16 %v551
    %v1900 = vunpack.c.l.b16 %v552
    %v1901 = vunpack.c.h.b16 %v552
    %v1902 = vunpack.c.l.b16 %v553
    %v1903 = vunpack.c.h.b16 %v553
    %v1904 = vunpack.c.l.b16 %v554
    %v1905 = vunpack.c.h.b16 %v554
    %v1906 = vunpack.c.l.b16 %v555
    %v1907 = vunpack.c.h.b16 %v555
    %v1908 = vunpack.c.l.b16 %v556
    %v1909 = vunpack.c.h.b16 %v556
    %v1910 = vunpack.c.l.b16 %v557
    %v1911 = vunpack.c.h.b16 %v557
    %v1912 = vunpack.c.l.b16 %v558
    %v1913 = vunpack.c.h.b16 %v558
    %v1914 = vunpack.c.l.b16 %v559
    %v1915 = vunpack.c.h.b16 %v559
    %v1916 = vunpack.c.l.b16 %v560
    %v1917 = vunpack.c.h.b16 %v560
    %v1918 = vunpack.c.l.b16 %v561
    %v1919 = vunpack.c.h.b16 %v561
    %v1920 = vunpack.c.l.b16 %v562
    %v1921 = vunpack.c.h.b16 %v562
    %v1922 = vunpack.c.l.b16 %v563
    %v1923 = vunpack.c.h.b16 %v563
    %v1924 = vunpack.c.l.b16 %v564
    %v1925 = vunpack.c.h.b16 %v564
    %v1926 = vunpack.c.l.b16 %v565
    %v1927 = vunpack.c.h.b16 %v565
    %v1928 = vunpack.c.l.b16 %v566
    %v1929 = vunpack.c.h.b16 %v566
    %v1930 = vunpack.c.l.b16 %v567
    %v1931 = vunpack.c.h.b16 %v567
    %v1932 = vunpack.c.l.b16 %v568
    %v1933 = vunpack.c.h.b16 %v568
    %v1934 = vunpack.c.l.b16 %v569
    %v1935 = vunpack.c.h.b16 %v569
    %v1936 = vunpack.c.l.b16 %v570
    %v1937 = vunpack.c.h.b16 %v570
    %v1938 = vunpack.c.l.b16 %v571
    %v1939 = vunpack.c.h.b16 %v571
    %v1940 = vunpack.c.l.b16 %v572
    %v1941 = vunpack.c.h.b16 %v572
    %v1942 = vunpack.c.l.b16 %v573
    %v1943 = vunpack.c.h.b16 %v573
    %v1944 = vunpack.c.l.b16 %v574
    %v1945 = vunpack.c.h.b16 %v574
    %v1946 = vunpack.c.l.b16 %v575
    %v1947 = vunpack.c.h.b16 %v575
    %v1948 = vunpack.c.l.b16 %v576
    %v1949 = vunpack.c.h.b16 %v576
    %v1950 = vunpack.c.l.b16 %v577
    %v1951 = vunpack.c.h.b16 %v577
    %v1952 = vunpack.c.l.b16 %v578
    %v1953 = vunpack.c.h.b16 %v578
    %v1954 = vunpack.c.l.b16 %v579
    %v1955 = vunpack.c.h.b16 %v579
    %v1956 = vunpack.c.l.b16 %v580
    %v1957 = vunpack.c.h.b16 %v580
    %v1958 = vunpack.c.l.b16 %v581
    %v1959 = vunpack.c.h.b16 %v581
    %v1960 = vunpack.c.l.b16 %v582
    %v1961 = vunpack.c.h.b16 %v582
    %v1962 = vunpack.c.l.b16 %v583
    %v1963 = vunpack.c.h.b16 %v583
    %v1964 = vunpack.c.l.b16 %v584
    %v1965 = vunpack.c.h.b16 %v584
    %v1966 = vunpack.c.l.b16 %v585
    %v1967 = vunpack.c.h.b16 %v585
    %v1968 = vunpack.c.l.b16 %v586
    %v1969 = vunpack.c.h.b16 %v586
    %v1970 = vunpack.c.l.b16 %v587
    %v1971 = vunpack.c.h.b16 %v587
    %v1972 = vunpack.c.l.b16 %v588
    %v1973 = vunpack.c.h.b16 %v588
    %v1974 = vunpack.c.l.b16 %v589
    %v1975 = vunpack.c.h.b16 %v589
    %v1976 = vunpack.c.l.b16 %v590
    %v1977 = vunpack.c.h.b16 %v590
    %v1978 = vunpack.c.l.b16 %v591
    %v1979 = vunpack.c.h.b16 %v591
    %v1980 = vunpack.c.l.b16 %v592
    %v1981 = vunpack.c.h.b16 %v592
    %v1982 = vunpack.c.l.b16 %v593
    %v1983 = vunpack.c.h.b16 %v593
    %v1984 = vunpack.c.l.b16 %v594
    %v1985 = vunpack.c.h.b16 %v594
    %v1986 = vunpack.c.l.b16 %v595
    %v1987 = vunpack.c.h.b16 %v595
    %v1988 = vunpack.c.l.b16 %v596
    %v1989 = vunpack.c.h.b16 %v596
    %v1990 = vunpack.c.l.b16 %v597
    %v1991 = vunpack.c.h.b16 %v597
    %v1992 = vunpack.c.l.b16 %v598
    %v1993 = vunpack.c.h.b16 %v598
    %v1994 = vunpack.c.l.b16 %v599
    %v1995 = vunpack.c.h.b16 %v599
    %v1996 = vunpack.c.l.b16 %v600
    %v1997 = vunpack.c.h.b16 %v600
    %v1998 = vunpack.c.l.b16 %v601
    %v1999 = vunpack.c.h.b16 %v601
    %v2000 = vpack.c.b16 %v1104, %v1096
    %v2001 = vpack.c.b16 %v1105, %v1097
    %v2002 = vpack.c.b16 %v1106, %v1098
    %v2003 = vpack.c.b16 %v1107, %v1099
    %v2004 = vpack.c.b16 %v1108, %v1100
    %v2005 = vpack.c.b16 %v1109, %v1101
    %v2006 = vpack.c.b16 %v1110, %v1102
    %v2007 = vpack.c.b16 %v1111, %v1103
    %v2008 = vpack.c.b16 %v1120, %v1112
    %v2009 = vpack.c.b16 %v1121, %v1113
    %v2010 = vpack.c.b16 %v1122, %v1114
    %v2011 = vpack.c.b16 %v1123, %v1115
    %v2012 = vpack.c.b16 %v1124, %v1116
    %v2013 = vpack.c.b16 %v1125, %v1117
    %v2014 = vpack.c.b16 %v1126, %v1118
    %v2015 = vpack.c.b16 %v1127, %v1119
    %v2016 = vpack.c.b16 %v1136, %v1128
    %v2017 = vpack.c.b16 %v1137, %v1129
    %v2018 = vpack.c.b16 %v1138, %v1130
    %v2019 = vpack.c.b16 %v1139, %v1131
    %v2020 = vpack.c.b16 %v1140, %v1132
    %v2021 = vpack.c.b16 %v1141, %v1133
    %v2022 = vpack.c.b16 %v1142, %v1134
    %v2023 = vpack.c.b16 %v1143, %v1135
    %v2024 = vpack.c.b16 %v1152, %v1144
    %v2025 = vpack.c.b16 %v1153, %v1145
    %v2026 = vpack.c.b16 %v1154, %v1146
    %v2027 = vpack.c.b16 %v1155, %v1147
    %v2028 = vpack.c.b16 %v1156, %v1148
    %v2029 = vpack.c.b16 %v1157, %v1149
    %v2030 = vpack.c.b16 %v1158, %v1150
    %v2031 = vpack.c.b16 %v1159, %v1151
    %v2032 = vpack.c.b16 %v1168, %v1160
    %v2033 = vpack.c.b16 %v1169, %v1161
    %v2034 = vpack.c.b16 %v1170, %v1162
    %v2035 = vpack.c.b16 %v1171, %v1163
    %v2036 = vpack.c.b16 %v1172, %v1164
    %v2037 = vpack.c.b16 %v1173, %v1165
    %v2038 = vpack.c.b16 %v1174, %v1166
    %v2039 = vpack.c.b16 %v1175, %v1167
    %v2040 = vpack.c.b16 %v1184, %v1176
    %v2041 = vpack.c.b16 %v1185, %v1177
    %v2042 = vpack.c.b16 %v1186, %v1178
    %v2043 = vpack.c.b16 %v1187, %v1179
    %v2044 = vpack.c.b16 %v1188, %v1180
    %v2045 = vpack.c.b16 %v1189, %v1181
    %v2046 = vpack.c.b16 %v1190, %v1182
    %v2047 = vpack.c.b16 %v1191, %v1183
    %v2048 = vpack.c.b16 %v1200, %v1192
    %v2049 = vpack.c.b16 %v1201, %v1193
    %v2050 = vpack.c.b16 %v1202, %v1194
    %v2051 = vpack.c.b16 %v1203, %v1195
    %v2052 = vpack.c.b16 %v1204, %v1196
    %v2053 = vpack.c.b16 %v1205, %v1197
    %v2054 = vpack.c.b16 %v1206, %v1198
    %v2055 = vpack.c.b16 %v1207, %v1199
    %v2056 = vpack.c.b16 %v1216, %v1208
    %v2057 = vpack.c.b16 %v1217, %v1209
    %v2058 = vpack.c.b16 %v1218, %v1210
    %v2059 = vpack.c.b16 %v1219, %v1211
    %v2060 = vpack.c.b16 %v1220, %v1212
    %v2061 = vpack.c.b16 %v1221, %v1213
    %v2062 = vpack.c.b16 %v1222, %v1214
    %v2063 = vpack.c.b16 %v1223, %v1215
    %v2064 = vpack.c.b16 %v1232, %v1224
    %v2065 = vpack.c.b16 %v1233, %v1225
    %v2066 = vpack.c.b16 %v1234, %v1226
    %v2067 = vpack.c.b16 %v1235, %v1227
    %v2068 = vpack.c.b16 %v1236, %v1228
    %v2069 = vpack.c.b16 %v1237, %v1229
    %v2070 = vpack.c.b16 %v1238, %v1230
    %v2071 = vpack.c.b16 %v1239, %v1231
    %v2072 = vpack.c.b16 %v1248, %v1240
    %v2073 = vpack.c.b16 %v1249, %v1241
    %v2074 = vpack.c.b16 %v1250, %v1242
    %v2075 = vpack.c.b16 %v1251, %v1243
    %v2076 = vpack.c.b16 %v1252, %v1244
    %v2077 = vpack.c.b16 %v1253, %v1245
    %v2078 = vpack.c.b16 %v1254, %v1246
    %v2079 = vpack.c.b16 %v1255, %v1247
    %v2080 = vpack.c.b16 %v1264, %v1256
    %v2081 = vpack.c.b16 %v1265, %v1257
    %v2082 = vpack.c.b16 %v1266, %v1258
    %v2083 = vpack.c.b16 %v1267, %v1259
    %v2084 = vpack.c.b16 %v1268, %v1260
    %v2085 = vpack.c.b16 %v1269, %v1261
    %v2086 = vpack.c.b16 %v1270, %v1262
    %v2087 = vpack.c.b16 %v1271, %v1263
    %v2088 = vpack.c.b16 %v1280, %v1272
    %v2089 = vpack.c.b16 %v1281, %v1273
    %v2090 = vpack.c.b16 %v1282, %v1274
    %v2091 = vpack.c.b16 %v1283, %v1275
    %v2092 = vpack.c.b16 %v1284, %v1276
    %v2093 = vpack.c.b16 %v1285, %v1277
    %v2094 = vpack.c.b16 %v1286, %v1278
    %v2095 = vpack.c.b16 %v1287, %v1279
    %v2096 = vpack.c.b16 %v1296, %v1288
    %v2097 = vpack.c.b16 %v1297, %v1289
    %v2098 = vpack.c.b16 %v1298, %v1290
    %v2099 = vpack.c.b16 %v1299, %v1291
    %v2100 = vpack.c.b16 %v1300, %v1292
    %v2101 = vpack.c.b16 %v1301, %v1293
    %v2102 = vpack.c.b16 %v1302, %v1294
    %v2103 = vpack.c.b16 %v1303, %v1295
    %v2104 = vpack.c.b16 %v1312, %v1304
    %v2105 = vpack.c.b16 %v1313, %v1305
    %v2106 = vpack.c.b16 %v1314, %v1306
    %v2107 = vpack.c.b16 %v1315, %v1307
    %v2108 = vpack.c.b16 %v1316, %v1308
    %v2109 = vpack.c.b16 %v1317, %v1309
    %v2110 = vpack.c.b16 %v1318, %v1310
    %v2111 = vpack.c.b16 %v1319, %v1311
    %v2112 = vpack.c.b16 %v1328, %v1320
    %v2113 = vpack.c.b16 %v1329, %v1321
    %v2114 = vpack.c.b16 %v1330, %v1322
    %v2115 = vpack.c.b16 %v1331, %v1323
    %v2116 = vpack.c.b16 %v1332, %v1324
    %v2117 = vpack.c.b16 %v1333, %v1325
    %v2118 = vpack.c.b16 %v1334, %v1326
    %v2119 = vpack.c.b16 %v1335, %v1327
    %v2120 = vpack.c.b16 %v1344, %v1336
    %v2121 = vpack.c.b16 %v1345, %v1337
    %v2122 = vpack.c.b16 %v1346, %v1338
    %v2123 = vpack.c.b16 %v1347, %v1339
    %v2124 = vpack.c.b16 %v1348, %v1340
    %v2125 = vpack.c.b16 %v1349, %v1341
    %v2126 = vpack.c.b16 %v1350, %v1342
    %v2127 = vpack.c.b16 %v1351, %v1343
    %v2128 = vpack.c.b16 %v1360, %v1352
    %v2129 = vpack.c.b16 %v1361, %v1353
    %v2130 = vpack.c.b16 %v1362, %v1354
    %v2131 = vpack.c.b16 %v1363, %v1355
    %v2132 = vpack.c.b16 %v1364, %v1356
    %v2133 = vpack.c.b16 %v1365, %v1357
    %v2134 = vpack.c.b16 %v1366, %v1358
    %v2135 = vpack.c.b16 %v1367, %v1359
    %v2136 = vpack.c.b16 %v1376, %v1368
    %v2137 = vpack.c.b16 %v1377, %v1369
    %v2138 = vpack.c.b16 %v1378, %v1370
    %v2139 = vpack.c.b16 %v1379, %v1371
    %v2140 = vpack.c.b16 %v1380, %v1372
    %v2141 = vpack.c.b16 %v1381, %v1373
    %v2142 = vpack.c.b16 %v1382, %v1374
    %v2143 = vpack.c.b16 %v1383, %v1375
    %v2144 = vpack.c.b16 %v1392, %v1384
    %v2145 = vpack.c.b16 %v1393, %v1385
    %v2146 = vpack.c.b16 %v1394, %v1386
    %v2147 = vpack.c.b16 %v1395, %v1387
    %v2148 = vpack.c.b16 %v1396, %v1388
    %v2149 = vpack.c.b16 %v1397, %v1389
    %v2150 = vpack.c.b16 %v1398, %v1390
    %v2151 = vpack.c.b16 %v1399, %v1391
    %v2152 = vpack.c.b16 %v1408, %v1400
    %v2153 = vpack.c.b16 %v1409, %v1401
    %v2154 = vpack.c.b16 %v1410, %v1402
    %v2155 = vpack.c.b16 %v1411, %v1403
    %v2156 = vpack.c.b16 %v1412, %v1404
    %v2157 = vpack.c.b16 %v1413, %v1405
    %v2158 = vpack.c.b16 %v1414, %v1406
    %v2159 = vpack.c.b16 %v1415, %v1407
    %v2160 = vpack.c.b16 %v1424, %v1416
    %v2161 = vpack.c.b16 %v1425, %v1417
    %v2162 = vpack.c.b16 %v1426, %v1418
    %v2163 = vpack.c.b16 %v1427, %v1419
    %v2164 = vpack.c.b16 %v1428, %v1420
    %v2165 = vpack.c.b16 %v1429, %v1421
    %v2166 = vpack.c.b16 %v1430, %v1422
    %v2167 = vpack.c.b16 %v1431, %v1423
    %v2168 = vpack.c.b16 %v1440, %v1432
    %v2169 = vpack.c.b16 %v1441, %v1433
    %v2170 = vpack.c.b16 %v1442, %v1434
    %v2171 = vpack.c.b16 %v1443, %v1435
    %v2172 = vpack.c.b16 %v1444, %v1436
    %v2173 = vpack.c.b16 %v1445, %v1437
    %v2174 = vpack.c.b16 %v1446, %v1438
    %v2175 = vpack.c.b16 %v1447, %v1439
    %v2176 = vpack.c.b16 %v1456, %v1448
    %v2177 = vpack.c.b16 %v1457, %v1449
    %v2178 = vpack.c.b16 %v1458, %v1450
    %v2179 = vpack.c.b16 %v1459, %v1451
    %v2180 = vpack.c.b16 %v1460, %v1452
    %v2181 = vpack.c.b16 %v1461, %v1453
    %v2182 = vpack.c.b16 %v1462, %v1454
    %v2183 = vpack.c.b16 %v1463, %v1455
    %v2184 = vpack.c.b16 %v1472, %v1464
    %v2185 = vpack.c.b16 %v1473, %v1465
    %v2186 = vpack.c.b16 %v1474, %v1466
    %v2187 = vpack.c.b16 %v1475, %v1467
    %v2188 = vpack.c.b16 %v1476, %v1468
    %v2189 = vpack.c.b16 %v1477, %v1469
    %v2190 = vpack.c.b16 %v1478, %v1470
    %v2191 = vpack.c.b16 %v1479, %v1471
    %v2192 = vpack.c.b16 %v1488, %v1480
    %v2193 = vpack.c.b16 %v1489, %v1481
    %v2194 = vpack.c.b16 %v1490, %v1482
    %v2195 = vpack.c.b16 %v1491, %v1483
    %v2196 = vpack.c.b16 %v1492, %v1484
    %v2197 = vpack.c.b16 %v1493, %v1485
    %v2198 = vpack.c.b16 %v1494, %v1486
    %v2199 = vpack.c.b16 %v1495, %v1487
    %v2200 = vpack.c.b16 %v1504, %v1496
    %v2201 = vpack.c.b16 %v1505, %v1497
    %v2202 = vpack.c.b16 %v1506, %v1498
    %v2203 = vpack.c.b16 %v1507, %v1499
    %v2204 = vpack.c.b16 %v1508, %v1500
    %v2205 = vpack.c.b16 %v1509, %v1501
    %v2206 = vpack.c.b16 %v1510, %v1502
    %v2207 = vpack.c.b16 %v1511, %v1503
    %v2208 = vpack.c.b16 %v1520, %v1512
    %v2209 = vpack.c.b16 %v1521, %v1513
    %v2210 = vpack.c.b16 %v1522, %v1514
    %v2211 = vpack.c.b16 %v1523, %v1515
    %v2212 = vpack.c.b16 %v1524, %v1516
    %v2213 = vpack.c.b16 %v1525, %v1517
    %v2214 = vpack.c.b16 %v1526, %v1518
    %v2215 = vpack.c.b16 %v1527, %v1519
    %v2216 = vpack.c.b16 %v1536, %v1528
    %v2217 = vpack.c.b16 %v1537, %v1529
    %v2218 = vpack.c.b16 %v1538, %v1530
    %v2219 = vpack.c.b16 %v1539, %v1531
    %v2220 = vpack.c.b16 %v1540, %v1532
    %v2221 = vpack.c.b16 %v1541, %v1533
    %v2222 = vpack.c.b16 %v1542, %v1534
    %v2223 = vpack.c.b16 %v1543, %v1535
    %v2224 = vpack.c.b16 %v1552, %v1544
    %v2225 = vpack.c.b16 %v1553, %v1545
    %v2226 = vpack.c.b16 %v1554, %v1546
    %v2227 = vpack.c.b16 %v1555, %v1547
    %v2228 = vpack.c.b16 %v1556, %v1548
    %v2229 = vpack.c.b16 %v1557, %v1549
    %v2230 = vpack.c.b16 %v1558, %v1550
    %v2231 = vpack.c.b16 %v1559, %v1551
    %v2232 = vpack.c.b16 %v1568, %v1560
    %v2233 = vpack.c.b16 %v1569, %v1561
    %v2234 = vpack.c.b16 %v1570, %v1562
    %v2235 = vpack.c.b16 %v1571, %v1563
    %v2236 = vpack.c.b16 %v1572, %v1564
    %v2237 = vpack.c.b16 %v1573, %v1565
    %v2238 = vpack.c.b16 %v1574, %v1566
    %v2239 = vpack.c.b16 %v1575, %v1567
    %v2240 = vpack.c.b16 %v1584, %v1576
    %v2241 = vpack.c.b16 %v1585, %v1577
    %v2242 = vpack.c.b16 %v1586, %v1578
    %v2243 = vpack.c.b16 %v1587, %v1579
    %v2244 = vpack.c.b16 %v1588, %v1580
    %v2245 = vpack.c.b16 %v1589, %v1581
    %v2246 = vpack.c.b16 %v1590, %v1582
    %v2247 = vpack.c.b16 %v1591, %v1583
    %v2248 = vpack.c.b16 %v1600, %v1592
    %v2249 = vpack.c.b16 %v1601, %v1593
    %v2250 = vpack.c.b16 %v1602, %v1594
    %v2251 = vpack.c.b16 %v1603, %v1595
    %v2252 = vpack.c.b16 %v1604, %v1596
    %v2253 = vpack.c.b16 %v1605, %v1597
    %v2254 = vpack.c.b16 %v1606, %v1598
    %v2255 = vpack.c.b16 %v1607, %v1599
    %v2256 = vpack.c.b16 %v1616, %v1608
    %v2257 = vpack.c.b16 %v1617, %v1609
    %v2258 = vpack.c.b16 %v1618, %v1610
    %v2259 = vpack.c.b16 %v1619, %v1611
    %v2260 = vpack.c.b16 %v1620, %v1612
    %v2261 = vpack.c.b16 %v1621, %v1613
    %v2262 = vpack.c.b16 %v1622, %v1614
    %v2263 = vpack.c.b16 %v1623, %v1615
    %v2264 = vpack.c.b16 %v1632, %v1624
    %v2265 = vpack.c.b16 %v1633, %v1625
    %v2266 = vpack.c.b16 %v1634, %v1626
    %v2267 = vpack.c.b16 %v1635, %v1627
    %v2268 = vpack.c.b16 %v1636, %v1628
    %v2269 = vpack.c.b16 %v1637, %v1629
    %v2270 = vpack.c.b16 %v1638, %v1630
    %v2271 = vpack.c.b16 %v1639, %v1631
    %v2272 = vpack.c.b16 %v1648, %v1640
    %v2273 = vpack.c.b16 %v1649, %v1641
    %v2274 = vpack.c.b16 %v1650, %v1642
    %v2275 = vpack.c.b16 %v1651, %v1643
    %v2276 = vpack.c.b16 %v1652, %v1644
    %v2277 = vpack.c.b16 %v1653, %v1645
    %v2278 = vpack.c.b16 %v1654, %v1646
    %v2279 = vpack.c.b16 %v1655, %v1647
    %v2280 = vpack.c.b16 %v1664, %v1656
    %v2281 = vpack.c.b16 %v1665, %v1657
    %v2282 = vpack.c.b16 %v1666, %v1658
    %v2283 = vpack.c.b16 %v1667, %v1659
    %v2284 = vpack.c.b16 %v1668, %v1660
    %v2285 = vpack.c.b16 %v1669, %v1661
    %v2286 = vpack.c.b16 %v1670, %v1662
    %v2287 = vpack.c.b16 %v1671, %v1663
    %v2288 = vpack.c.b16 %v1680, %v1672
    %v2289 = vpack.c.b16 %v1681, %v1673
    %v2290 = vpack.c.b16 %v1682, %v1674
    %v2291 = vpack.c.b16 %v1683, %v1675
    %v2292 = vpack.c.b16 %v1684, %v1676
    %v2293 = vpack.c.b16 %v1685, %v1677
    %v2294 = vpack.c.b16 %v1686, %v1678
    %v2295 = vpack.c.b16 %v1687, %v1679
    %v2296 = vpack.c.b16 %v1696, %v1688
    %v2297 = vpack.c.b16 %v1697, %v1689
    %v2298 = vpack.c.b16 %v1698, %v1690
    %v2299 = vpack.c.b16 %v1699, %v1691
    %v2300 = vpack.c.b16 %v1700, %v1692
    %v2301 = vpack.c.b16 %v1701, %v1693
    %v2302 = vpack.c.b16 %v1702, %v1694
    %v2303 = vpack.c.b16 %v1703, %v1695
    %v2304 = vpack.c.b16 %v1712, %v1704
    %v2305 = vpack.c.b16 %v1713, %v1705
    %v2306 = vpack.c.b16 %v1714, %v1706
    %v2307 = vpack.c.b16 %v1715, %v1707
    %v2308 = vpack.c.b16 %v1716, %v1708
    %v2309 = vpack.c.b16 %v1717, %v1709
    %v2310 = vpack.c.b16 %v1718, %v1710
    %v2311 = vpack.c.b16 %v1719, %v1711
    %v2312 = vpack.c.b16 %v1728, %v1720
    %v2313 = vpack.c.b16 %v1729, %v1721
    %v2314 = vpack.c.b16 %v1730, %v1722
    %v2315 = vpack.c.b16 %v1731, %v1723
    %v2316 = vpack.c.b16 %v1732, %v1724
    %v2317 = vpack.c.b16 %v1733, %v1725
    %v2318 = vpack.c.b16 %v1734, %v1726
    %v2319 = vpack.c.b16 %v1735, %v1727
    %v2320 = vpack.c.b16 %v1744, %v1736
    %v2321 = vpack.c.b16 %v1745, %v1737
    %v2322 = vpack.c.b16 %v1746, %v1738
    %v2323 = vpack.c.b16 %v1747, %v1739
    %v2324 = vpack.c.b16 %v1748, %v1740
    %v2325 = vpack.c.b16 %v1749, %v1741
    %v2326 = vpack.c.b16 %v1750, %v1742
    %v2327 = vpack.c.b16 %v1751, %v1743
    %v2328 = vpack.c.b16 %v1760, %v1752
    %v2329 = vpack.c.b16 %v1761, %v1753
    %v2330 = vpack.c.b16 %v1762, %v1754
    %v2331 = vpack.c.b16 %v1763, %v1755
    %v2332 = vpack.c.b16 %v1764, %v1756
    %v2333 = vpack.c.b16 %v1765, %v1757
    %v2334 = vpack.c.b16 %v1766, %v1758
    %v2335 = vpack.c.b16 %v1767, %v1759
    %v2336 = vpack.c.b16 %v1776, %v1768
    %v2337 = vpack.c.b16 %v1777, %v1769
    %v2338 = vpack.c.b16 %v1778, %v1770
    %v2339 = vpack.c.b16 %v1779, %v1771
    %v2340 = vpack.c.b16 %v1780, %v1772
    %v2341 = vpack.c.b16 %v1781, %v1773
    %v2342 = vpack.c.b16 %v1782, %v1774
    %v2343 = vpack.c.b16 %v1783, %v1775
    %v2344 = vpack.c.b16 %v1792, %v1784
    %v2345 = vpack.c.b16 %v1793, %v1785
    %v2346 = vpack.c.b16 %v1794, %v1786
    %v2347 = vpack.c.b16 %v1795, %v1787
    %v2348 = vpack.c.b16 %v1796, %v1788
    %v2349 = vpack.c.b16 %v1797, %v1789
    %v2350 = vpack.c.b16 %v1798, %v1790
    %v2351 = vpack.c.b16 %v1799, %v1791
    %v2352 = vpack.c.b16 %v1808, %v1800
    %v2353 = vpack.c.b16 %v1809, %v1801
    %v2354 = vpack.c.b16 %v1810, %v1802
    %v2355 = vpack.c.b16 %v1811, %v1803
    %v2356 = vpack.c.b16 %v1812, %v1804
    %v2357 = vpack.c.b16 %v1813, %v1805
    %v2358 = vpack.c.b16 %v1814, %v1806
    %v2359 = vpack.c.b16 %v1815, %v1807
    %v2360 = vpack.c.b16 %v1824, %v1816
    %v2361 = vpack.c.b16 %v1825, %v1817
    %v2362 = vpack.c.b16 %v1826, %v1818
    %v2363 = vpack.c.b16 %v1827, %v1819
    %v2364 = vpack.c.b16 %v1828, %v1820
    %v2365 = vpack.c.b16 %v1829, %v1821
    %v2366 = vpack.c.b16 %v1830, %v1822
    %v2367 = vpack.c.b16 %v1831, %v1823
    %v2368 = vpack.c.b16 %v1840, %v1832
    %v2369 = vpack.c.b16 %v1841, %v1833
    %v2370 = vpack.c.b16 %v1842, %v1834
    %v2371 = vpack.c.b16 %v1843, %v1835
    %v2372 = vpack.c.b16 %v1844, %v1836
    %v2373 = vpack.c.b16 %v1845, %v1837
    %v2374 = vpack.c.b16 %v1846, %v1838
    %v2375 = vpack.c.b16 %v1847, %v1839
    %v2376 = vpack.c.b16 %v1856, %v1848
    %v2377 = vpack.c.b16 %v1857, %v1849
    %v2378 = vpack.c.b16 %v1858, %v1850
    %v2379 = vpack.c.b16 %v1859, %v1851
    %v2380 = vpack.c.b16 %v1860, %v1852
    %v2381 = vpack.c.b16 %v1861, %v1853
    %v2382 = vpack.c.b16 %v1862, %v1854
    %v2383 = vpack.c.b16 %v1863, %v1855
    %v2384 = vpack.c.b16 %v1872, %v1864
    %v2385 = vpack.c.b16 %v1873, %v1865
    %v2386 = vpack.c.b16 %v1874, %v1866
    %v2387 = vpack.c.b16 %v1875, %v1867
    %v2388 = vpack.c.b16 %v1876, %v1868
    %v2389 = vpack.c.b16 %v1877, %v1869
    %v2390 = vpack.c.b16 %v1878, %v1870
    %v2391 = vpack.c.b16 %v1879, %v1871
    %v2392 = vpack.c.b16 %v1888, %v1880
    %v2393 = vpack.c.b16 %v1889, %v1881
    %v2394 = vpack.c.b16 %v1890, %v1882
    %v2395 = vpack.c.b16 %v1891, %v1883
    %v2396 = vpack.c.b16 %v1892, %v1884
    %v2397 = vpack.c.b16 %v1893, %v1885
    %v2398 = vpack.c.b16 %v1894, %v1886
    %v2399 = vpack.c.b16 %v1895, %v1887
    %v2400 = vpack.c.b16 %v1904, %v1896
    %v2401 = vpack.c.b16 %v1905, %v1897
    %v2402 = vpack.c.b16 %v1906, %v1898
    %v2403 = vpack.c.b16 %v1907, %v1899
    %v2404 = vpack.c.b16 %v1908, %v1900
    %v2405 = vpack.c.b16 %v1909, %v1901
    %v2406 = vpack.c.b16 %v1910, %v1902
    %v2407 = vpack.c.b16 %v1911, %v1903
    %v2408 = vpack.c.b16 %v1920, %v1912
    %v2409 = vpack.c.b16 %v1921, %v1913
    %v2410 = vpack.c.b16 %v1922, %v1914
    %v2411 = vpack.c.b16 %v1923, %v1915
    %v2412 = vpack.c.b16 %v1924, %v1916
    %v2413 = vpack.c.b16 %v1925, %v1917
    %v2414 = vpack.c.b16 %v1926, %v1918
    %v2415 = vpack.c.b16 %v1927, %v1919
    %v2416 = vpack.c.b16 %v1936, %v1928
    %v2417 = vpack.c.b16 %v1937, %v1929
    %v2418 = vpack.c.b16 %v1938, %v1930
    %v2419 = vpack.c.b16 %v1939, %v1931
    %v2420 = vpack.c.b16 %v1940, %v1932
    %v2421 = vpack.c.b16 %v1941, %v1933
    %v2422 = vpack.c.b16 %v1942, %v1934
    %v2423 = vpack.c.b16 %v1943, %v1935
    %v2424 = vpack.c.b16 %v1952, %v1944
    %v2425 = vpack.c.b16 %v1953, %v1945
    %v2426 = vpack.c.b16 %v1954, %v1946
    %v2427 = vpack.c.b16 %v1955, %v1947
    %v2428 = vpack.c.b16 %v1956, %v1948
    %v2429 = vpack.c.b16 %v1957, %v1949
    %v2430 = vpack.c.b16 %v1958, %v1950
    %v2431 = vpack.c.b16 %v1959, %v1951
    %v2432 = vpack.c.b16 %v1968, %v1960
    %v2433 = vpack.c.b16 %v1969, %v1961
    %v2434 = vpack.c.b16 %v1970, %v1962
    %v2435 = vpack.c.b16 %v1971, %v1963
    %v2436 = vpack.c.b16 %v1972, %v1964
    %v2437 = vpack.c.b16 %v1973, %v1965
    %v2438 = vpack.c.b16 %v1974, %v1966
    %v2439 = vpack.c.b16 %v1975, %v1967
    %v2440 = vpack.c.b16 %v1984, %v1976
    %v2441 = vpack.c.b16 %v1985, %v1977
    %v2442 = vpack.c.b16 %v1986, %v1978
    %v2443 = vpack.c.b16 %v1987, %v1979
    %v2444 = vpack.c.b16 %v1988, %v1980
    %v2445 = vpack.c.b16 %v1989, %v1981
    %v2446 = vpack.c.b16 %v1990, %v1982
    %v2447 = vpack.c.b16 %v1991, %v1983
    %v2448 = vpack.c.b16 %v1992, %v1992
    %v2449 = vpack.c.b16 %v1993, %v1993
    %v2450 = vpack.c.b16 %v1994, %v1994
    %v2451 = vpack.c.b16 %v1995, %v1995
    %v2452 = vpack.c.b16 %v1996, %v1996
    %v2453 = vpack.c.b16 %v1997, %v1997
    %v2454 = vpack.c.b16 %v1998, %v1998
    %v2455 = vpack.c.b16 %v1999, %v1999
    %vm2904 = vcmask 31744
    %v2906 = vsel %vm2904, %v149, 0
    %vm2908 = vcmask 1041408
    %v2910 = vsel %vm2908, %v2448, 0
    %v2913 = vsel %vm2908, %v2449, 0
    %v2916 = vsel %vm2908, %v2450, 0
    %v2919 = vsel %vm2908, %v2451, 0
    %v2922 = vsel %vm2908, %v2452, 0
    %v2925 = vsel %vm2908, %v2453, 0
    %v2928 = vsel %vm2908, %v2454, 0
    %v2931 = vsel %vm2908, %v2455, 0
    %2933 = vmatprep.subr.bf16.mxu0 %v2001
    %2934 = vmatpush1.bf16.msra.mxu0 %v2000
    %2935 = vmatprep.subr.bf16.mxu0 %v2009
    %2936 = vmatpush1.bf16.msra.mxu0 %v2008
    %2937 = vmatprep.subr.bf16.mxu0 %v2017
    %2938 = vmatpush1.bf16.msra.mxu0 %v2016
    %2939 = vmatprep.subr.bf16.mxu0 %v2025
    %2940 = vmatpush1.bf16.msra.mxu0 %v2024
    %2941 = vmatprep.subr.bf16.mxu0 %v2033
    %2942 = vmatpush1.bf16.msra.mxu0 %v2032
    %2943 = vmatprep.subr.bf16.mxu0 %v2041
    %2944 = vmatpush1.bf16.msra.mxu0 %v2040
    %2945 = vmatprep.subr.bf16.mxu0 %v2049
    %2946 = vmatpush1.bf16.msra.mxu0 %v2048
    %2947 = vmatprep.subr.bf16.mxu0 %v2057
    %2948 = vmatpush1.bf16.msra.mxu0 %v2056
    %2949 = vmatprep.subr.bf16.mxu0 %v2065
    %2950 = vmatpush1.bf16.msra.mxu0 %v2064
    %2951 = vmatprep.subr.bf16.mxu0 %v2073
    %2952 = vmatpush1.bf16.msra.mxu0 %v2072
    %2953 = vmatprep.subr.bf16.mxu0 %v2081
    %2954 = vmatpush1.bf16.msra.mxu0 %v2080
    %2955 = vmatprep.subr.bf16.mxu0 %v2089
    %2956 = vmatpush1.bf16.msra.mxu0 %v2088
    %2957 = vmatprep.subr.bf16.mxu0 %v2097
    %2958 = vmatpush1.bf16.msra.mxu0 %v2096
    %2959 = vmatprep.subr.bf16.mxu0 %v2105
    %2960 = vmatpush1.bf16.msra.mxu0 %v2104
    %2961 = vmatprep.subr.bf16.mxu0 %v2113
    %2962 = vmatpush1.bf16.msra.mxu0 %v2112
    %2963 = vmatprep.subr.bf16.mxu0 %v2121
    %2964 = vmatpush1.bf16.msra.mxu0 %v2120
    %2965 = vmatprep.mubr.bf16.mxu0 %v143
    %2966 = vmatmul.mubr.bf16.gmra.mrb[0].mxu0 %v142
    %v2967 = vpop.f32.mrb[0].mxu0
    %v2968 = vadd.f32 %v607, %v2967
    %v2969 = vpop.f32.mrb[0].mxu0
    %v2970 = vadd.f32 %v611, %v2969
    %v2971 = vpop.f32.mrb[0].mxu0
    %v2972 = vpop.f32.mrb[0].mxu0
    %2973 = vdwg.mxu0
    %2974 = vmatprep.subr.bf16.mxu0 %v2129
    %2975 = vmatpush1.bf16.msra.mxu0 %v2128
    %2976 = vmatprep.subr.bf16.mxu0 %v2137
    %2977 = vmatpush1.bf16.msra.mxu0 %v2136
    %2978 = vmatprep.subr.bf16.mxu0 %v2145
    %2979 = vmatpush1.bf16.msra.mxu0 %v2144
    %2980 = vmatprep.subr.bf16.mxu0 %v2153
    %2981 = vmatpush1.bf16.msra.mxu0 %v2152
    %2982 = vmatprep.subr.bf16.mxu0 %v2161
    %2983 = vmatpush1.bf16.msra.mxu0 %v2160
    %2984 = vmatprep.subr.bf16.mxu0 %v2169
    %2985 = vmatpush1.bf16.msra.mxu0 %v2168
    %2986 = vmatprep.subr.bf16.mxu0 %v2177
    %2987 = vmatpush1.bf16.msra.mxu0 %v2176
    %2988 = vmatprep.subr.bf16.mxu0 %v2185
    %2989 = vmatpush1.bf16.msra.mxu0 %v2184
    %2990 = vmatprep.subr.bf16.mxu0 %v2193
    %2991 = vmatpush1.bf16.msra.mxu0 %v2192
    %2992 = vmatprep.subr.bf16.mxu0 %v2201
    %2993 = vmatpush1.bf16.msra.mxu0 %v2200
    %2994 = vmatprep.subr.bf16.mxu0 %v2209
    %2995 = vmatpush1.bf16.msra.mxu0 %v2208
    %2996 = vmatprep.subr.bf16.mxu0 %v2217
    %2997 = vmatpush1.bf16.msra.mxu0 %v2216
    %2998 = vmatprep.subr.bf16.mxu0 %v2225
    %2999 = vmatpush1.bf16.msra.mxu0 %v2224
    %3000 = vmatprep.subr.bf16.mxu0 %v2233
    %3001 = vmatpush1.bf16.msra.mxu0 %v2232
    %3002 = vmatprep.subr.bf16.mxu0 %v2241
    %3003 = vmatpush1.bf16.msra.mxu0 %v2240
    %3004 = vmatprep.subr.bf16.mxu0 %v2249
    %3005 = vmatpush1.bf16.msra.mxu0 %v2248
    %3006 = vmatprep.mubr.bf16.mxu0 %v145
    %3007 = vmatmul.mubr.bf16.gmra.mrb[0].mxu0 %v144
    %v3008 = vpop.f32.mrb[0].mxu0
    %v3009 = vadd.f32 %v2968, %v3008
    %v3010 = vpop.f32.mrb[0].mxu0
    %v3011 = vadd.f32 %v2970, %v3010
    %v3012 = vpop.f32.mrb[0].mxu0
    %v3013 = vpop.f32.mrb[0].mxu0
    %3014 = vdwg.mxu0
    %3015 = vmatprep.subr.bf16.mxu0 %v2257
    %3016 = vmatpush1.bf16.msra.mxu0 %v2256
    %3017 = vmatprep.subr.bf16.mxu0 %v2265
    %3018 = vmatpush1.bf16.msra.mxu0 %v2264
    %3019 = vmatprep.subr.bf16.mxu0 %v2273
    %3020 = vmatpush1.bf16.msra.mxu0 %v2272
    %3021 = vmatprep.subr.bf16.mxu0 %v2281
    %3022 = vmatpush1.bf16.msra.mxu0 %v2280
    %3023 = vmatprep.subr.bf16.mxu0 %v2289
    %3024 = vmatpush1.bf16.msra.mxu0 %v2288
    %3025 = vmatprep.subr.bf16.mxu0 %v2297
    %3026 = vmatpush1.bf16.msra.mxu0 %v2296
    %3027 = vmatprep.subr.bf16.mxu0 %v2305
    %3028 = vmatpush1.bf16.msra.mxu0 %v2304
    %3029 = vmatprep.subr.bf16.mxu0 %v2313
    %3030 = vmatpush1.bf16.msra.mxu0 %v2312
    %3031 = vmatprep.subr.bf16.mxu0 %v2321
    %3032 = vmatpush1.bf16.msra.mxu0 %v2320
    %3033 = vmatprep.subr.bf16.mxu0 %v2329
    %3034 = vmatpush1.bf16.msra.mxu0 %v2328
    %3035 = vmatprep.subr.bf16.mxu0 %v2337
    %3036 = vmatpush1.bf16.msra.mxu0 %v2336
    %3037 = vmatprep.subr.bf16.mxu0 %v2345
    %3038 = vmatpush1.bf16.msra.mxu0 %v2344
    %3039 = vmatprep.subr.bf16.mxu0 %v2353
    %3040 = vmatpush1.bf16.msra.mxu0 %v2352
    %3041 = vmatprep.subr.bf16.mxu0 %v2361
    %3042 = vmatpush1.bf16.msra.mxu0 %v2360
    %3043 = vmatprep.subr.bf16.mxu0 %v2369
    %3044 = vmatpush1.bf16.msra.mxu0 %v2368
    %3045 = vmatprep.subr.bf16.mxu0 %v2377
    %3046 = vmatpush1.bf16.msra.mxu0 %v2376
    %3047 = vmatprep.mubr.bf16.mxu0 %v147
    %3048 = vmatmul.mubr.bf16.gmra.mrb[0].mxu0 %v146
    %v3049 = vpop.f32.mrb[0].mxu0
    %v3050 = vadd.f32 %v3009, %v3049
    %v3051 = vpop.f32.mrb[0].mxu0
    %v3052 = vadd.f32 %v3011, %v3051
    %v3053 = vpop.f32.mrb[0].mxu0
    %v3054 = vpop.f32.mrb[0].mxu0
    %3055 = vdwg.mxu0
    %3056 = vmatprep.subr.bf16.mxu0 %v2385
    %3057 = vmatpush1.bf16.msra.mxu0 %v2384
    %3058 = vmatprep.subr.bf16.mxu0 %v2393
    %3059 = vmatpush1.bf16.msra.mxu0 %v2392
    %3060 = vmatprep.subr.bf16.mxu0 %v2401
    %3061 = vmatpush1.bf16.msra.mxu0 %v2400
    %3062 = vmatprep.subr.bf16.mxu0 %v2409
    %3063 = vmatpush1.bf16.msra.mxu0 %v2408
    %3064 = vmatprep.subr.bf16.mxu0 %v2417
    %3065 = vmatpush1.bf16.msra.mxu0 %v2416
    %3066 = vmatprep.subr.bf16.mxu0 %v2425
    %3067 = vmatpush1.bf16.msra.mxu0 %v2424
    %3068 = vmatprep.subr.bf16.mxu0 %v2433
    %3069 = vmatpush1.bf16.msra.mxu0 %v2432
    %3070 = vmatprep.subr.bf16.mxu0 %v2441
    %3071 = vmatpush1.bf16.msra.mxu0 %v2440
    %3072 = vmatprep.subr.bf16.mxu0 %v2913
    %3073 = vmatpush1.bf16.msra.mxu0 %v2910
    %3074 = vmatprep.subr.bf16.mxu0 0
    %3075 = vmatpush1.bf16.msra.mxu0 0
    %3076 = vmatprep.subr.bf16.mxu0 0
    %3077 = vmatpush1.bf16.msra.mxu0 0
    %3078 = vmatprep.subr.bf16.mxu0 0
    %3079 = vmatpush1.bf16.msra.mxu0 0
    %3080 = vmatprep.subr.bf16.mxu0 0
    %3081 = vmatpush1.bf16.msra.mxu0 0
    %3082 = vmatprep.subr.bf16.mxu0 0
    %3083 = vmatpush1.bf16.msra.mxu0 0
    %3084 = vmatprep.subr.bf16.mxu0 0
    %3085 = vmatpush1.bf16.msra.mxu0 0
    %3086 = vmatprep.subr.bf16.mxu0 0
    %3087 = vmatpush1.bf16.msra.mxu0 0
    %3088 = vmatprep.mubr.bf16.mxu0 %v2906
    %3089 = vmatmul.mubr.bf16.gmra.mrb[0].mxu0 %v148
    %v3090 = vpop.f32.mrb[0].mxu0
    %v3091 = vadd.f32 %v3050, %v3090
    %v3092 = vpop.f32.mrb[0].mxu0
    %v3093 = vadd.f32 %v3052, %v3092
    %v3094 = vpop.f32.mrb[0].mxu0
    %v3095 = vpop.f32.mrb[0].mxu0
    %3096 = vdwg.mxu0
    %3097 = vmatprep.subr.bf16.mxu0 %v2003
    %3098 = vmatpush1.bf16.msra.mxu0 %v2002
    %3099 = vmatprep.subr.bf16.mxu0 %v2011
    %3100 = vmatpush1.bf16.msra.mxu0 %v2010
    %3101 = vmatprep.subr.bf16.mxu0 %v2019
    %3102 = vmatpush1.bf16.msra.mxu0 %v2018
    %3103 = vmatprep.subr.bf16.mxu0 %v2027
    %3104 = vmatpush1.bf16.msra.mxu0 %v2026
    %3105 = vmatprep.subr.bf16.mxu0 %v2035
    %3106 = vmatpush1.bf16.msra.mxu0 %v2034
    %3107 = vmatprep.subr.bf16.mxu0 %v2043
    %3108 = vmatpush1.bf16.msra.mxu0 %v2042
    %3109 = vmatprep.subr.bf16.mxu0 %v2051
    %3110 = vmatpush1.bf16.msra.mxu0 %v2050
    %3111 = vmatprep.subr.bf16.mxu0 %v2059
    %3112 = vmatpush1.bf16.msra.mxu0 %v2058
    %3113 = vmatprep.subr.bf16.mxu0 %v2067
    %3114 = vmatpush1.bf16.msra.mxu0 %v2066
    %3115 = vmatprep.subr.bf16.mxu0 %v2075
    %3116 = vmatpush1.bf16.msra.mxu0 %v2074
    %3117 = vmatprep.subr.bf16.mxu0 %v2083
    %3118 = vmatpush1.bf16.msra.mxu0 %v2082
    %3119 = vmatprep.subr.bf16.mxu0 %v2091
    %3120 = vmatpush1.bf16.msra.mxu0 %v2090
    %3121 = vmatprep.subr.bf16.mxu0 %v2099
    %3122 = vmatpush1.bf16.msra.mxu0 %v2098
    %3123 = vmatprep.subr.bf16.mxu0 %v2107
    %3124 = vmatpush1.bf16.msra.mxu0 %v2106
    %3125 = vmatprep.subr.bf16.mxu0 %v2115
    %3126 = vmatpush1.bf16.msra.mxu0 %v2114
    %3127 = vmatprep.subr.bf16.mxu0 %v2123
    %3128 = vmatpush1.bf16.msra.mxu0 %v2122
    %3129 = vmatprep.mubr.bf16.mxu0 %v143
    %3130 = vmatmul.mubr.bf16.gmra.mrb[0].mxu0 %v142
    %v3131 = vpop.f32.mrb[0].mxu0
    %v3132 = vadd.f32 %v615, %v3131
    %v3133 = vpop.f32.mrb[0].mxu0
    %v3134 = vadd.f32 %v619, %v3133
    %v3135 = vpop.f32.mrb[0].mxu0
    %v3136 = vpop.f32.mrb[0].mxu0
    %3137 = vdwg.mxu0
    %3138 = vmatprep.subr.bf16.mxu0 %v2131
    %3139 = vmatpush1.bf16.msra.mxu0 %v2130
    %3140 = vmatprep.subr.bf16.mxu0 %v2139
    %3141 = vmatpush1.bf16.msra.mxu0 %v2138
    %3142 = vmatprep.subr.bf16.mxu0 %v2147
    %3143 = vmatpush1.bf16.msra.mxu0 %v2146
    %3144 = vmatprep.subr.bf16.mxu0 %v2155
    %3145 = vmatpush1.bf16.msra.mxu0 %v2154
    %3146 = vmatprep.subr.bf16.mxu0 %v2163
    %3147 = vmatpush1.bf16.msra.mxu0 %v2162
    %3148 = vmatprep.subr.bf16.mxu0 %v2171
    %3149 = vmatpush1.bf16.msra.mxu0 %v2170
    %3150 = vmatprep.subr.bf16.mxu0 %v2179
    %3151 = vmatpush1.bf16.msra.mxu0 %v2178
    %3152 = vmatprep.subr.bf16.mxu0 %v2187
    %3153 = vmatpush1.bf16.msra.mxu0 %v2186
    %3154 = vmatprep.subr.bf16.mxu0 %v2195
    %3155 = vmatpush1.bf16.msra.mxu0 %v2194
    %3156 = vmatprep.subr.bf16.mxu0 %v2203
    %3157 = vmatpush1.bf16.msra.mxu0 %v2202
    %3158 = vmatprep.subr.bf16.mxu0 %v2211
    %3159 = vmatpush1.bf16.msra.mxu0 %v2210
    %3160 = vmatprep.subr.bf16.mxu0 %v2219
    %3161 = vmatpush1.bf16.msra.mxu0 %v2218
    %3162 = vmatprep.subr.bf16.mxu0 %v2227
    %3163 = vmatpush1.bf16.msra.mxu0 %v2226
    %3164 = vmatprep.subr.bf16.mxu0 %v2235
    %3165 = vmatpush1.bf16.msra.mxu0 %v2234
    %3166 = vmatprep.subr.bf16.mxu0 %v2243
    %3167 = vmatpush1.bf16.msra.mxu0 %v2242
    %3168 = vmatprep.subr.bf16.mxu0 %v2251
    %3169 = vmatpush1.bf16.msra.mxu0 %v2250
    %3170 = vmatprep.mubr.bf16.mxu0 %v145
    %3171 = vmatmul.mubr.bf16.gmra.mrb[0].mxu0 %v144
    %v3172 = vpop.f32.mrb[0].mxu0
    %v3173 = vadd.f32 %v3132, %v3172
    %v3174 = vpop.f32.mrb[0].mxu0
    %v3175 = vadd.f32 %v3134, %v3174
    %v3176 = vpop.f32.mrb[0].mxu0
    %v3177 = vpop.f32.mrb[0].mxu0
    %3178 = vdwg.mxu0
    %3179 = vmatprep.subr.bf16.mxu0 %v2259
    %3180 = vmatpush1.bf16.msra.mxu0 %v2258
    %3181 = vmatprep.subr.bf16.mxu0 %v2267
    %3182 = vmatpush1.bf16.msra.mxu0 %v2266
    %3183 = vmatprep.subr.bf16.mxu0 %v2275
    %3184 = vmatpush1.bf16.msra.mxu0 %v2274
    %3185 = vmatprep.subr.bf16.mxu0 %v2283
    %3186 = vmatpush1.bf16.msra.mxu0 %v2282
    %3187 = vmatprep.subr.bf16.mxu0 %v2291
    %3188 = vmatpush1.bf16.msra.mxu0 %v2290
    %3189 = vmatprep.subr.bf16.mxu0 %v2299
    %3190 = vmatpush1.bf16.msra.mxu0 %v2298
    %3191 = vmatprep.subr.bf16.mxu0 %v2307
    %3192 = vmatpush1.bf16.msra.mxu0 %v2306
    %3193 = vmatprep.subr.bf16.mxu0 %v2315
    %3194 = vmatpush1.bf16.msra.mxu0 %v2314
    %3195 = vmatprep.subr.bf16.mxu0 %v2323
    %3196 = vmatpush1.bf16.msra.mxu0 %v2322
    %3197 = vmatprep.subr.bf16.mxu0 %v2331
    %3198 = vmatpush1.bf16.msra.mxu0 %v2330
    %3199 = vmatprep.subr.bf16.mxu0 %v2339
    %3200 = vmatpush1.bf16.msra.mxu0 %v2338
    %3201 = vmatprep.subr.bf16.mxu0 %v2347
    %3202 = vmatpush1.bf16.msra.mxu0 %v2346
    %3203 = vmatprep.subr.bf16.mxu0 %v2355
    %3204 = vmatpush1.bf16.msra.mxu0 %v2354
    %3205 = vmatprep.subr.bf16.mxu0 %v2363
    %3206 = vmatpush1.bf16.msra.mxu0 %v2362
    %3207 = vmatprep.subr.bf16.mxu0 %v2371
    %3208 = vmatpush1.bf16.msra.mxu0 %v2370
    %3209 = vmatprep.subr.bf16.mxu0 %v2379
    %3210 = vmatpush1.bf16.msra.mxu0 %v2378
    %3211 = vmatprep.mubr.bf16.mxu0 %v147
    %3212 = vmatmul.mubr.bf16.gmra.mrb[0].mxu0 %v146
    %v3213 = vpop.f32.mrb[0].mxu0
    %v3214 = vadd.f32 %v3173, %v3213
    %v3215 = vpop.f32.mrb[0].mxu0
    %v3216 = vadd.f32 %v3175, %v3215
    %v3217 = vpop.f32.mrb[0].mxu0
    %v3218 = vpop.f32.mrb[0].mxu0
    %3219 = vdwg.mxu0
    %3220 = vmatprep.subr.bf16.mxu0 %v2387
    %3221 = vmatpush1.bf16.msra.mxu0 %v2386
    %3222 = vmatprep.subr.bf16.mxu0 %v2395
    %3223 = vmatpush1.bf16.msra.mxu0 %v2394
    %3224 = vmatprep.subr.bf16.mxu0 %v2403
    %3225 = vmatpush1.bf16.msra.mxu0 %v2402
    %3226 = vmatprep.subr.bf16.mxu0 %v2411
    %3227 = vmatpush1.bf16.msra.mxu0 %v2410
    %3228 = vmatprep.subr.bf16.mxu0 %v2419
    %3229 = vmatpush1.bf16.msra.mxu0 %v2418
    %3230 = vmatprep.subr.bf16.mxu0 %v2427
    %3231 = vmatpush1.bf16.msra.mxu0 %v2426
    %3232 = vmatprep.subr.bf16.mxu0 %v2435
    %3233 = vmatpush1.bf16.msra.mxu0 %v2434
    %3234 = vmatprep.subr.bf16.mxu0 %v2443
    %3235 = vmatpush1.bf16.msra.mxu0 %v2442
    %3236 = vmatprep.subr.bf16.mxu0 %v2919
    %3237 = vmatpush1.bf16.msra.mxu0 %v2916
    %3238 = vmatprep.subr.bf16.mxu0 0
    %3239 = vmatpush1.bf16.msra.mxu0 0
    %3240 = vmatprep.subr.bf16.mxu0 0
    %3241 = vmatpush1.bf16.msra.mxu0 0
    %3242 = vmatprep.subr.bf16.mxu0 0
    %3243 = vmatpush1.bf16.msra.mxu0 0
    %3244 = vmatprep.subr.bf16.mxu0 0
    %3245 = vmatpush1.bf16.msra.mxu0 0
    %3246 = vmatprep.subr.bf16.mxu0 0
    %3247 = vmatpush1.bf16.msra.mxu0 0
    %3248 = vmatprep.subr.bf16.mxu0 0
    %3249 = vmatpush1.bf16.msra.mxu0 0
    %3250 = vmatprep.subr.bf16.mxu0 0
    %3251 = vmatpush1.bf16.msra.mxu0 0
    %3252 = vmatprep.mubr.bf16.mxu0 %v2906
    %3253 = vmatmul.mubr.bf16.gmra.mrb[0].mxu0 %v148
    %v3254 = vpop.f32.mrb[0].mxu0
    %v3255 = vadd.f32 %v3214, %v3254
    %v3256 = vpop.f32.mrb[0].mxu0
    %v3257 = vadd.f32 %v3216, %v3256
    %v3258 = vpop.f32.mrb[0].mxu0
    %v3259 = vpop.f32.mrb[0].mxu0
    %3260 = vdwg.mxu0
    %3261 = vmatprep.subr.bf16.mxu0 %v2005
    %3262 = vmatpush1.bf16.msra.mxu0 %v2004
    %3263 = vmatprep.subr.bf16.mxu0 %v2013
    %3264 = vmatpush1.bf16.msra.mxu0 %v2012
    %3265 = vmatprep.subr.bf16.mxu0 %v2021
    %3266 = vmatpush1.bf16.msra.mxu0 %v2020
    %3267 = vmatprep.subr.bf16.mxu0 %v2029
    %3268 = vmatpush1.bf16.msra.mxu0 %v2028
    %3269 = vmatprep.subr.bf16.mxu0 %v2037
    %3270 = vmatpush1.bf16.msra.mxu0 %v2036
    %3271 = vmatprep.subr.bf16.mxu0 %v2045
    %3272 = vmatpush1.bf16.msra.mxu0 %v2044
    %3273 = vmatprep.subr.bf16.mxu0 %v2053
    %3274 = vmatpush1.bf16.msra.mxu0 %v2052
    %3275 = vmatprep.subr.bf16.mxu0 %v2061
    %3276 = vmatpush1.bf16.msra.mxu0 %v2060
    %3277 = vmatprep.subr.bf16.mxu0 %v2069
    %3278 = vmatpush1.bf16.msra.mxu0 %v2068
    %3279 = vmatprep.subr.bf16.mxu0 %v2077
    %3280 = vmatpush1.bf16.msra.mxu0 %v2076
    %3281 = vmatprep.subr.bf16.mxu0 %v2085
    %3282 = vmatpush1.bf16.msra.mxu0 %v2084
    %3283 = vmatprep.subr.bf16.mxu0 %v2093
    %3284 = vmatpush1.bf16.msra.mxu0 %v2092
    %3285 = vmatprep.subr.bf16.mxu0 %v2101
    %3286 = vmatpush1.bf16.msra.mxu0 %v2100
    %3287 = vmatprep.subr.bf16.mxu0 %v2109
    %3288 = vmatpush1.bf16.msra.mxu0 %v2108
    %3289 = vmatprep.subr.bf16.mxu0 %v2117
    %3290 = vmatpush1.bf16.msra.mxu0 %v2116
    %3291 = vmatprep.subr.bf16.mxu0 %v2125
    %3292 = vmatpush1.bf16.msra.mxu0 %v2124
    %3293 = vmatprep.mubr.bf16.mxu0 %v143
    %3294 = vmatmul.mubr.bf16.gmra.mrb[0].mxu0 %v142
    %v3295 = vpop.f32.mrb[0].mxu0
    %v3296 = vadd.f32 %v623, %v3295
    %v3297 = vpop.f32.mrb[0].mxu0
    %v3298 = vadd.f32 %v627, %v3297
    %v3299 = vpop.f32.mrb[0].mxu0
    %v3300 = vpop.f32.mrb[0].mxu0
    %3301 = vdwg.mxu0
    %3302 = vmatprep.subr.bf16.mxu0 %v2133
    %3303 = vmatpush1.bf16.msra.mxu0 %v2132
    %3304 = vmatprep.subr.bf16.mxu0 %v2141
    %3305 = vmatpush1.bf16.msra.mxu0 %v2140
    %3306 = vmatprep.subr.bf16.mxu0 %v2149
    %3307 = vmatpush1.bf16.msra.mxu0 %v2148
    %3308 = vmatprep.subr.bf16.mxu0 %v2157
    %3309 = vmatpush1.bf16.msra.mxu0 %v2156
    %3310 = vmatprep.subr.bf16.mxu0 %v2165
    %3311 = vmatpush1.bf16.msra.mxu0 %v2164
    %3312 = vmatprep.subr.bf16.mxu0 %v2173
    %3313 = vmatpush1.bf16.msra.mxu0 %v2172
    %3314 = vmatprep.subr.bf16.mxu0 %v2181
    %3315 = vmatpush1.bf16.msra.mxu0 %v2180
    %3316 = vmatprep.subr.bf16.mxu0 %v2189
    %3317 = vmatpush1.bf16.msra.mxu0 %v2188
    %3318 = vmatprep.subr.bf16.mxu0 %v2197
    %3319 = vmatpush1.bf16.msra.mxu0 %v2196
    %3320 = vmatprep.subr.bf16.mxu0 %v2205
    %3321 = vmatpush1.bf16.msra.mxu0 %v2204
    %3322 = vmatprep.subr.bf16.mxu0 %v2213
    %3323 = vmatpush1.bf16.msra.mxu0 %v2212
    %3324 = vmatprep.subr.bf16.mxu0 %v2221
    %3325 = vmatpush1.bf16.msra.mxu0 %v2220
    %3326 = vmatprep.subr.bf16.mxu0 %v2229
    %3327 = vmatpush1.bf16.msra.mxu0 %v2228
    %3328 = vmatprep.subr.bf16.mxu0 %v2237
    %3329 = vmatpush1.bf16.msra.mxu0 %v2236
    %3330 = vmatprep.subr.bf16.mxu0 %v2245
    %3331 = vmatpush1.bf16.msra.mxu0 %v2244
    %3332 = vmatprep.subr.bf16.mxu0 %v2253
    %3333 = vmatpush1.bf16.msra.mxu0 %v2252
    %3334 = vmatprep.mubr.bf16.mxu0 %v145
    %3335 = vmatmul.mubr.bf16.gmra.mrb[0].mxu0 %v144
    %v3336 = vpop.f32.mrb[0].mxu0
    %v3337 = vadd.f32 %v3296, %v3336
    %v3338 = vpop.f32.mrb[0].mxu0
    %v3339 = vadd.f32 %v3298, %v3338
    %v3340 = vpop.f32.mrb[0].mxu0
    %v3341 = vpop.f32.mrb[0].mxu0
    %3342 = vdwg.mxu0
    %3343 = vmatprep.subr.bf16.mxu0 %v2261
    %3344 = vmatpush1.bf16.msra.mxu0 %v2260
    %3345 = vmatprep.subr.bf16.mxu0 %v2269
    %3346 = vmatpush1.bf16.msra.mxu0 %v2268
    %3347 = vmatprep.subr.bf16.mxu0 %v2277
    %3348 = vmatpush1.bf16.msra.mxu0 %v2276
    %3349 = vmatprep.subr.bf16.mxu0 %v2285
    %3350 = vmatpush1.bf16.msra.mxu0 %v2284
    %3351 = vmatprep.subr.bf16.mxu0 %v2293
    %3352 = vmatpush1.bf16.msra.mxu0 %v2292
    %3353 = vmatprep.subr.bf16.mxu0 %v2301
    %3354 = vmatpush1.bf16.msra.mxu0 %v2300
    %3355 = vmatprep.subr.bf16.mxu0 %v2309
    %3356 = vmatpush1.bf16.msra.mxu0 %v2308
    %3357 = vmatprep.subr.bf16.mxu0 %v2317
    %3358 = vmatpush1.bf16.msra.mxu0 %v2316
    %3359 = vmatprep.subr.bf16.mxu0 %v2325
    %3360 = vmatpush1.bf16.msra.mxu0 %v2324
    %3361 = vmatprep.subr.bf16.mxu0 %v2333
    %3362 = vmatpush1.bf16.msra.mxu0 %v2332
    %3363 = vmatprep.subr.bf16.mxu0 %v2341
    %3364 = vmatpush1.bf16.msra.mxu0 %v2340
    %3365 = vmatprep.subr.bf16.mxu0 %v2349
    %3366 = vmatpush1.bf16.msra.mxu0 %v2348
    %3367 = vmatprep.subr.bf16.mxu0 %v2357
    %3368 = vmatpush1.bf16.msra.mxu0 %v2356
    %3369 = vmatprep.subr.bf16.mxu0 %v2365
    %3370 = vmatpush1.bf16.msra.mxu0 %v2364
    %3371 = vmatprep.subr.bf16.mxu0 %v2373
    %3372 = vmatpush1.bf16.msra.mxu0 %v2372
    %3373 = vmatprep.subr.bf16.mxu0 %v2381
    %3374 = vmatpush1.bf16.msra.mxu0 %v2380
    %3375 = vmatprep.mubr.bf16.mxu0 %v147
    %3376 = vmatmul.mubr.bf16.gmra.mrb[0].mxu0 %v146
    %v3377 = vpop.f32.mrb[0].mxu0
    %v3378 = vadd.f32 %v3337, %v3377
    %v3379 = vpop.f32.mrb[0].mxu0
    %v3380 = vadd.f32 %v3339, %v3379
    %v3381 = vpop.f32.mrb[0].mxu0
    %v3382 = vpop.f32.mrb[0].mxu0
    %3383 = vdwg.mxu0
    %3384 = vmatprep.subr.bf16.mxu0 %v2389
    %3385 = vmatpush1.bf16.msra.mxu0 %v2388
    %3386 = vmatprep.subr.bf16.mxu0 %v2397
    %3387 = vmatpush1.bf16.msra.mxu0 %v2396
    %3388 = vmatprep.subr.bf16.mxu0 %v2405
    %3389 = vmatpush1.bf16.msra.mxu0 %v2404
    %3390 = vmatprep.subr.bf16.mxu0 %v2413
    %3391 = vmatpush1.bf16.msra.mxu0 %v2412
    %3392 = vmatprep.subr.bf16.mxu0 %v2421
    %3393 = vmatpush1.bf16.msra.mxu0 %v2420
    %3394 = vmatprep.subr.bf16.mxu0 %v2429
    %3395 = vmatpush1.bf16.msra.mxu0 %v2428
    %3396 = vmatprep.subr.bf16.mxu0 %v2437
    %3397 = vmatpush1.bf16.msra.mxu0 %v2436
    %3398 = vmatprep.subr.bf16.mxu0 %v2445
    %3399 = vmatpush1.bf16.msra.mxu0 %v2444
    %3400 = vmatprep.subr.bf16.mxu0 %v2925
    %3401 = vmatpush1.bf16.msra.mxu0 %v2922
    %3402 = vmatprep.subr.bf16.mxu0 0
    %3403 = vmatpush1.bf16.msra.mxu0 0
    %3404 = vmatprep.subr.bf16.mxu0 0
    %3405 = vmatpush1.bf16.msra.mxu0 0
    %3406 = vmatprep.subr.bf16.mxu0 0
    %3407 = vmatpush1.bf16.msra.mxu0 0
    %3408 = vmatprep.subr.bf16.mxu0 0
    %3409 = vmatpush1.bf16.msra.mxu0 0
    %3410 = vmatprep.subr.bf16.mxu0 0
    %3411 = vmatpush1.bf16.msra.mxu0 0
    %3412 = vmatprep.subr.bf16.mxu0 0
    %3413 = vmatpush1.bf16.msra.mxu0 0
    %3414 = vmatprep.subr.bf16.mxu0 0
    %3415 = vmatpush1.bf16.msra.mxu0 0
    %3416 = vmatprep.mubr.bf16.mxu0 %v2906
    %3417 = vmatmul.mubr.bf16.gmra.mrb[0].mxu0 %v148
    %v3418 = vpop.f32.mrb[0].mxu0
    %v3419 = vadd.f32 %v3378, %v3418
    %v3420 = vpop.f32.mrb[0].mxu0
    %v3421 = vadd.f32 %v3380, %v3420
    %v3422 = vpop.f32.mrb[0].mxu0
    %v3423 = vpop.f32.mrb[0].mxu0
    %3424 = vdwg.mxu0
    %3425 = vmatprep.subr.bf16.mxu0 %v2007
    %3426 = vmatpush1.bf16.msra.mxu0 %v2006
    %3427 = vmatprep.subr.bf16.mxu0 %v2015
    %3428 = vmatpush1.bf16.msra.mxu0 %v2014
    %3429 = vmatprep.subr.bf16.mxu0 %v2023
    %3430 = vmatpush1.bf16.msra.mxu0 %v2022
    %3431 = vmatprep.subr.bf16.mxu0 %v2031
    %3432 = vmatpush1.bf16.msra.mxu0 %v2030
    %3433 = vmatprep.subr.bf16.mxu0 %v2039
    %3434 = vmatpush1.bf16.msra.mxu0 %v2038
    %3435 = vmatprep.subr.bf16.mxu0 %v2047
    %3436 = vmatpush1.bf16.msra.mxu0 %v2046
    %3437 = vmatprep.subr.bf16.mxu0 %v2055
    %3438 = vmatpush1.bf16.msra.mxu0 %v2054
    %3439 = vmatprep.subr.bf16.mxu0 %v2063
    %3440 = vmatpush1.bf16.msra.mxu0 %v2062
    %3441 = vmatprep.subr.bf16.mxu0 %v2071
    %3442 = vmatpush1.bf16.msra.mxu0 %v2070
    %3443 = vmatprep.subr.bf16.mxu0 %v2079
    %3444 = vmatpush1.bf16.msra.mxu0 %v2078
    %3445 = vmatprep.subr.bf16.mxu0 %v2087
    %3446 = vmatpush1.bf16.msra.mxu0 %v2086
    %3447 = vmatprep.subr.bf16.mxu0 %v2095
    %3448 = vmatpush1.bf16.msra.mxu0 %v2094
    %3449 = vmatprep.subr.bf16.mxu0 %v2103
    %3450 = vmatpush1.bf16.msra.mxu0 %v2102
    %3451 = vmatprep.subr.bf16.mxu0 %v2111
    %3452 = vmatpush1.bf16.msra.mxu0 %v2110
    %3453 = vmatprep.subr.bf16.mxu0 %v2119
    %3454 = vmatpush1.bf16.msra.mxu0 %v2118
    %3455 = vmatprep.subr.bf16.mxu0 %v2127
    %3456 = vmatpush1.bf16.msra.mxu0 %v2126
    %3457 = vmatprep.mubr.bf16.mxu0 %v143
    %3458 = vmatmul.mubr.bf16.gmra.mrb[0].mxu0 %v142
    %v3459 = vpop.f32.mrb[0].mxu0
    %v3460 = vadd.f32 %v631, %v3459
    %v3461 = vpop.f32.mrb[0].mxu0
    %v3462 = vadd.f32 %v635, %v3461
    %v3463 = vpop.f32.mrb[0].mxu0
    %v3464 = vpop.f32.mrb[0].mxu0
    %3465 = vdwg.mxu0
    %3466 = vmatprep.subr.bf16.mxu0 %v2135
    %3467 = vmatpush1.bf16.msra.mxu0 %v2134
    %3468 = vmatprep.subr.bf16.mxu0 %v2143
    %3469 = vmatpush1.bf16.msra.mxu0 %v2142
    %3470 = vmatprep.subr.bf16.mxu0 %v2151
    %3471 = vmatpush1.bf16.msra.mxu0 %v2150
    %3472 = vmatprep.subr.bf16.mxu0 %v2159
    %3473 = vmatpush1.bf16.msra.mxu0 %v2158
    %3474 = vmatprep.subr.bf16.mxu0 %v2167
    %3475 = vmatpush1.bf16.msra.mxu0 %v2166
    %3476 = vmatprep.subr.bf16.mxu0 %v2175
    %3477 = vmatpush1.bf16.msra.mxu0 %v2174
    %3478 = vmatprep.subr.bf16.mxu0 %v2183
    %3479 = vmatpush1.bf16.msra.mxu0 %v2182
    %3480 = vmatprep.subr.bf16.mxu0 %v2191
    %3481 = vmatpush1.bf16.msra.mxu0 %v2190
    %3482 = vmatprep.subr.bf16.mxu0 %v2199
    %3483 = vmatpush1.bf16.msra.mxu0 %v2198
    %3484 = vmatprep.subr.bf16.mxu0 %v2207
    %3485 = vmatpush1.bf16.msra.mxu0 %v2206
    %3486 = vmatprep.subr.bf16.mxu0 %v2215
    %3487 = vmatpush1.bf16.msra.mxu0 %v2214
    %3488 = vmatprep.subr.bf16.mxu0 %v2223
    %3489 = vmatpush1.bf16.msra.mxu0 %v2222
    %3490 = vmatprep.subr.bf16.mxu0 %v2231
    %3491 = vmatpush1.bf16.msra.mxu0 %v2230
    %3492 = vmatprep.subr.bf16.mxu0 %v2239
    %3493 = vmatpush1.bf16.msra.mxu0 %v2238
    %3494 = vmatprep.subr.bf16.mxu0 %v2247
    %3495 = vmatpush1.bf16.msra.mxu0 %v2246
    %3496 = vmatprep.subr.bf16.mxu0 %v2255
    %3497 = vmatpush1.bf16.msra.mxu0 %v2254
    %3498 = vmatprep.mubr.bf16.mxu0 %v145
    %3499 = vmatmul.mubr.bf16.gmra.mrb[0].mxu0 %v144
    %v3500 = vpop.f32.mrb[0].mxu0
    %v3501 = vadd.f32 %v3460, %v3500
    %v3502 = vpop.f32.mrb[0].mxu0
    %v3503 = vadd.f32 %v3462, %v3502
    %v3504 = vpop.f32.mrb[0].mxu0
    %v3505 = vpop.f32.mrb[0].mxu0
    %3506 = vdwg.mxu0
    %3507 = vmatprep.subr.bf16.mxu0 %v2263
    %3508 = vmatpush1.bf16.msra.mxu0 %v2262
    %3509 = vmatprep.subr.bf16.mxu0 %v2271
    %3510 = vmatpush1.bf16.msra.mxu0 %v2270
    %3511 = vmatprep.subr.bf16.mxu0 %v2279
    %3512 = vmatpush1.bf16.msra.mxu0 %v2278
    %3513 = vmatprep.subr.bf16.mxu0 %v2287
    %3514 = vmatpush1.bf16.msra.mxu0 %v2286
    %3515 = vmatprep.subr.bf16.mxu0 %v2295
    %3516 = vmatpush1.bf16.msra.mxu0 %v2294
    %3517 = vmatprep.subr.bf16.mxu0 %v2303
    %3518 = vmatpush1.bf16.msra.mxu0 %v2302
    %3519 = vmatprep.subr.bf16.mxu0 %v2311
    %3520 = vmatpush1.bf16.msra.mxu0 %v2310
    %3521 = vmatprep.subr.bf16.mxu0 %v2319
    %3522 = vmatpush1.bf16.msra.mxu0 %v2318
    %3523 = vmatprep.subr.bf16.mxu0 %v2327
    %3524 = vmatpush1.bf16.msra.mxu0 %v2326
    %3525 = vmatprep.subr.bf16.mxu0 %v2335
    %3526 = vmatpush1.bf16.msra.mxu0 %v2334
    %3527 = vmatprep.subr.bf16.mxu0 %v2343
    %3528 = vmatpush1.bf16.msra.mxu0 %v2342
    %3529 = vmatprep.subr.bf16.mxu0 %v2351
    %3530 = vmatpush1.bf16.msra.mxu0 %v2350
    %3531 = vmatprep.subr.bf16.mxu0 %v2359
    %3532 = vmatpush1.bf16.msra.mxu0 %v2358
    %3533 = vmatprep.subr.bf16.mxu0 %v2367
    %3534 = vmatpush1.bf16.msra.mxu0 %v2366
    %3535 = vmatprep.subr.bf16.mxu0 %v2375
    %3536 = vmatpush1.bf16.msra.mxu0 %v2374
    %3537 = vmatprep.subr.bf16.mxu0 %v2383
    %3538 = vmatpush1.bf16.msra.mxu0 %v2382
    %3539 = vmatprep.mubr.bf16.mxu0 %v147
    %3540 = vmatmul.mubr.bf16.gmra.mrb[0].mxu0 %v146
    %v3541 = vpop.f32.mrb[0].mxu0
    %v3542 = vadd.f32 %v3501, %v3541
    %v3543 = vpop.f32.mrb[0].mxu0
    %v3544 = vadd.f32 %v3503, %v3543
    %v3545 = vpop.f32.mrb[0].mxu0
    %v3546 = vpop.f32.mrb[0].mxu0
    %3547 = vdwg.mxu0
    %3548 = vmatprep.subr.bf16.mxu0 %v2391
    %3549 = vmatpush1.bf16.msra.mxu0 %v2390
    %3550 = vmatprep.subr.bf16.mxu0 %v2399
    %3551 = vmatpush1.bf16.msra.mxu0 %v2398
    %3552 = vmatprep.subr.bf16.mxu0 %v2407
    %3553 = vmatpush1.bf16.msra.mxu0 %v2406
    %3554 = vmatprep.subr.bf16.mxu0 %v2415
    %3555 = vmatpush1.bf16.msra.mxu0 %v2414
    %3556 = vmatprep.subr.bf16.mxu0 %v2423
    %3557 = vmatpush1.bf16.msra.mxu0 %v2422
    %3558 = vmatprep.subr.bf16.mxu0 %v2431
    %3559 = vmatpush1.bf16.msra.mxu0 %v2430
    %3560 = vmatprep.subr.bf16.mxu0 %v2439
    %3561 = vmatpush1.bf16.msra.mxu0 %v2438
    %3562 = vmatprep.subr.bf16.mxu0 %v2447
    %3563 = vmatpush1.bf16.msra.mxu0 %v2446
    %3564 = vmatprep.subr.bf16.mxu0 %v2931
    %3565 = vmatpush1.bf16.msra.mxu0 %v2928
    %3566 = vmatprep.subr.bf16.mxu0 0
    %3567 = vmatpush1.bf16.msra.mxu0 0
    %3568 = vmatprep.subr.bf16.mxu0 0
    %3569 = vmatpush1.bf16.msra.mxu0 0
    %3570 = vmatprep.subr.bf16.mxu0 0
    %3571 = vmatpush1.bf16.msra.mxu0 0
    %3572 = vmatprep.subr.bf16.mxu0 0
    %3573 = vmatpush1.bf16.msra.mxu0 0
    %3574 = vmatprep.subr.bf16.mxu0 0
    %3575 = vmatpush1.bf16.msra.mxu0 0
    %3576 = vmatprep.subr.bf16.mxu0 0
    %3577 = vmatpush1.bf16.msra.mxu0 0
    %3578 = vmatprep.subr.bf16.mxu0 0
    %3579 = vmatpush1.bf16.msra.mxu0 0
    %3580 = vmatprep.mubr.bf16.mxu0 %v2906
    %3581 = vmatmul.mubr.bf16.gmra.mrb[0].mxu0 %v148
    %v3582 = vpop.f32.mrb[0].mxu0
    %v3583 = vadd.f32 %v3542, %v3582
    %v3584 = vpop.f32.mrb[0].mxu0
    %v3585 = vadd.f32 %v3544, %v3584
    %v3586 = vpop.f32.mrb[0].mxu0
    %v3587 = vpop.f32.mrb[0].mxu0
    %3588 = vdwg.mxu0
    %v3589 = vmax.f32 %v3091, 0.0
    %v3590 = vmax.f32 %v3093, 0.0
    %v3591 = vmax.f32 %v3255, 0.0
    %v3592 = vmax.f32 %v3257, 0.0
    %v3593 = vmax.f32 %v3419, 0.0
    %v3594 = vmax.f32 %v3421, 0.0
    %v3595 = vmax.f32 %v3583, 0.0
    %v3596 = vmax.f32 %v3585, 0.0
    %v3597 = vpack.c.bf16 %v3589, %v3589
    %v3598 = vpack.c.bf16 %v3590, %v3590
    %v3599 = vpack.c.bf16 %v3591, %v3591
    %v3600 = vpack.c.bf16 %v3592, %v3592
    %v3601 = vpack.c.bf16 %v3593, %v3593
    %v3602 = vpack.c.bf16 %v3594, %v3594
    %v3603 = vpack.c.bf16 %v3595, %v3595
    %v3604 = vpack.c.bf16 %v3596, %v3596
    %v3605 = vld [vmem:[#allocation6] sm:$0xff]
    %v3606 = vld [vmem:[#allocation6 + $0x8] sm:$0xff]
    %v3607 = vld [vmem:[#allocation6 + $0x10] sm:$0xff]
    %v3608 = vld [vmem:[#allocation6 + $0x18] sm:$0xff]
    %v3609 = vld [vmem:[#allocation6 + $0x20] sm:$0xff]
    %v3610 = vld [vmem:[#allocation6 + $0x28] sm:$0xff]
    %v3611 = vld [vmem:[#allocation6 + $0x30] sm:$0xff]
    %v3612 = vld [vmem:[#allocation6 + $0x38] sm:$0xff]
    %v3613 = vld [vmem:[#allocation6 + $0x40] sm:$0xff]
    %v3614 = vld [vmem:[#allocation6 + $0x48] sm:$0xff]
    %v3615 = vld [vmem:[#allocation6 + $0x50] sm:$0xff]
    %v3616 = vld [vmem:[#allocation6 + $0x58] sm:$0xff]
    %v3617 = vld [vmem:[#allocation6 + $0x60] sm:$0xff]
    %v3618 = vld [vmem:[#allocation6 + $0x68] sm:$0xff]
    %v3619 = vld [vmem:[#allocation6 + $0x70] sm:$0xff]
    %v3620 = vld [vmem:[#allocation6 + $0x78] sm:$0xff]
    %v3621 = vld [vmem:[#allocation6 + $0x80] sm:$0xff]
    %v3622 = vld [vmem:[#allocation6 + $0x88] sm:$0xff]
    %v3623 = vld [vmem:[#allocation6 + $0x90] sm:$0xff]
    %v3624 = vld [vmem:[#allocation6 + $0x98] sm:$0xff]
    %v3625 = vld [vmem:[#allocation6 + $0xa0] sm:$0xff]
    %v3626 = vld [vmem:[#allocation6 + $0xa8] sm:$0xff]
    %v3627 = vld [vmem:[#allocation6 + $0xb0] sm:$0xff]
    %v3628 = vld [vmem:[#allocation6 + $0xb8] sm:$0xff]
    %v3629 = vld [vmem:[#allocation6 + $0xc0] sm:$0xff]
    %v3630 = vld [vmem:[#allocation6 + $0xc8] sm:$0xff]
    %v3631 = vld [vmem:[#allocation6 + $0xd0] sm:$0xff]
    %v3632 = vld [vmem:[#allocation6 + $0xd8] sm:$0xff]
    %v3633 = vld [vmem:[#allocation6 + $0xe0] sm:$0xff]
    %v3634 = vld [vmem:[#allocation6 + $0xe8] sm:$0xff]
    %v3635 = vld [vmem:[#allocation6 + $0xf0] sm:$0xff]
    %v3636 = vld [vmem:[#allocation6 + $0xf8] sm:$0xff]
    %v3637 = vld [vmem:[#allocation6 + $0x100] sm:$0xff]
    %v3638 = vld [vmem:[#allocation6 + $0x108] sm:$0xff]
    %v3639 = vld [vmem:[#allocation6 + $0x110] sm:$0xff]
    %v3640 = vld [vmem:[#allocation6 + $0x118] sm:$0xff]
    %v3641 = vld [vmem:[#allocation6 + $0x120] sm:$0xff]
    %v3642 = vld [vmem:[#allocation6 + $0x128] sm:$0xff]
    %v3643 = vld [vmem:[#allocation6 + $0x130] sm:$0xff]
    %v3644 = vld [vmem:[#allocation6 + $0x138] sm:$0xff]
    %v3645 = vld [vmem:[#allocation6 + $0x140] sm:$0xff]
    %v3646 = vld [vmem:[#allocation6 + $0x148] sm:$0xff]
    %v3647 = vld [vmem:[#allocation6 + $0x150] sm:$0xff]
    %v3648 = vld [vmem:[#allocation6 + $0x158] sm:$0xff]
    %v3649 = vld [vmem:[#allocation6 + $0x160] sm:$0xff]
    %v3650 = vld [vmem:[#allocation6 + $0x168] sm:$0xff]
    %v3651 = vld [vmem:[#allocation6 + $0x170] sm:$0xff]
    %v3652 = vld [vmem:[#allocation6 + $0x178] sm:$0xff]
    %v3653 = vld [vmem:[#allocation6 + $0x180] sm:$0xff]
    %v3654 = vld [vmem:[#allocation6 + $0x188] sm:$0xff]
    %v3655 = vld [vmem:[#allocation6 + $0x190] sm:$0xff]
    %v3656 = vld [vmem:[#allocation6 + $0x198] sm:$0xff]
    %v3657 = vld [vmem:[#allocation6 + $0x1a0] sm:$0xff]
    %v3658 = vld [vmem:[#allocation6 + $0x1a8] sm:$0xff]
    %v3659 = vld [vmem:[#allocation6 + $0x1b0] sm:$0xff]
    %v3660 = vld [vmem:[#allocation6 + $0x1b8] sm:$0xff]
    %v3661 = vld [vmem:[#allocation6 + $0x1c0] sm:$0xff]
    %v3662 = vld [vmem:[#allocation6 + $0x1c8] sm:$0xff]
    %v3663 = vld [vmem:[#allocation6 + $0x1d0] sm:$0xff]
    %v3664 = vld [vmem:[#allocation6 + $0x1d8] sm:$0xff]
    %v3665 = vld [vmem:[#allocation6 + $0x1e0] sm:$0xff]
    %v3666 = vld [vmem:[#allocation6 + $0x1e8] sm:$0xff]
    %v3667 = vld [vmem:[#allocation6 + $0x1f0] sm:$0xff]
    %v3668 = vld [vmem:[#allocation6 + $0x1f8] sm:$0xff]
    %v3669 = vld [vmem:[#allocation6 + $0x200] sm:$0xff]
    %v3670 = vld [vmem:[#allocation6 + $0x208] sm:$0xff]
    %v3671 = vld [vmem:[#allocation6 + $0x210] sm:$0xff]
    %v3672 = vld [vmem:[#allocation6 + $0x218] sm:$0xff]
    %v3673 = vld [vmem:[#allocation6 + $0x220] sm:$0xff]
    %v3674 = vld [vmem:[#allocation6 + $0x228] sm:$0xff]
    %v3675 = vld [vmem:[#allocation6 + $0x230] sm:$0xff]
    %v3676 = vld [vmem:[#allocation6 + $0x238] sm:$0xff]
    %v3677 = vld [vmem:[#allocation6 + $0x240] sm:$0xff]
    %v3678 = vld [vmem:[#allocation6 + $0x248] sm:$0xff]
    %v3679 = vld [vmem:[#allocation6 + $0x250] sm:$0xff]
    %v3680 = vld [vmem:[#allocation6 + $0x258] sm:$0xff]
    %v3681 = vld [vmem:[#allocation6 + $0x260] sm:$0xff]
    %v3682 = vld [vmem:[#allocation6 + $0x268] sm:$0xff]
    %v3683 = vld [vmem:[#allocation6 + $0x270] sm:$0xff]
    %v3684 = vld [vmem:[#allocation6 + $0x278] sm:$0xff]
    %v3685 = vld [vmem:[#allocation6 + $0x280] sm:$0xff]
    %v3686 = vld [vmem:[#allocation6 + $0x288] sm:$0xff]
    %v3687 = vld [vmem:[#allocation6 + $0x290] sm:$0xff]
    %v3688 = vld [vmem:[#allocation6 + $0x298] sm:$0xff]
    %v3689 = vld [vmem:[#allocation6 + $0x2a0] sm:$0xff]
    %v3690 = vld [vmem:[#allocation6 + $0x2a8] sm:$0xff]
    %v3691 = vld [vmem:[#allocation6 + $0x2b0] sm:$0xff]
    %v3692 = vld [vmem:[#allocation6 + $0x2b8] sm:$0xff]
    %v3693 = vld [vmem:[#allocation6 + $0x2c0] sm:$0xff]
    %v3694 = vld [vmem:[#allocation6 + $0x2c8] sm:$0xff]
    %v3695 = vld [vmem:[#allocation6 + $0x2d0] sm:$0xff]
    %v3696 = vld [vmem:[#allocation6 + $0x2d8] sm:$0xff]
    %v3697 = vld [vmem:[#allocation6 + $0x2e0] sm:$0xff]
    %v3698 = vld [vmem:[#allocation6 + $0x2e8] sm:$0xff]
    %v3699 = vld [vmem:[#allocation6 + $0x2f0] sm:$0xff]
    %v3700 = vld [vmem:[#allocation6 + $0x2f8] sm:$0xff]
    %v3701 = vld [vmem:[#allocation6 + $0x300] sm:$0xff]
    %v3702 = vld [vmem:[#allocation6 + $0x308] sm:$0xff]
    %v3703 = vld [vmem:[#allocation6 + $0x310] sm:$0xff]
    %v3704 = vld [vmem:[#allocation6 + $0x318] sm:$0xff]
    %v3705 = vld [vmem:[#allocation6 + $0x320] sm:$0xff]
    %v3706 = vld [vmem:[#allocation6 + $0x328] sm:$0xff]
    %v3707 = vld [vmem:[#allocation6 + $0x330] sm:$0xff]
    %v3708 = vld [vmem:[#allocation6 + $0x338] sm:$0xff]
    %v3709 = vld [vmem:[#allocation6 + $0x340] sm:$0xff]
    %v3710 = vld [vmem:[#allocation6 + $0x348] sm:$0xff]
    %v3711 = vld [vmem:[#allocation6 + $0x350] sm:$0xff]
    %v3712 = vld [vmem:[#allocation6 + $0x358] sm:$0xff]
    %v3713 = vld [vmem:[#allocation6 + $0x360] sm:$0xff]
    %v3714 = vld [vmem:[#allocation6 + $0x368] sm:$0xff]
    %v3715 = vld [vmem:[#allocation6 + $0x370] sm:$0xff]
    %v3716 = vld [vmem:[#allocation6 + $0x378] sm:$0xff]
    %v3717 = vld [vmem:[#allocation6 + $0x380] sm:$0xff]
    %v3718 = vld [vmem:[#allocation6 + $0x388] sm:$0xff]
    %v3719 = vld [vmem:[#allocation6 + $0x390] sm:$0xff]
    %v3720 = vld [vmem:[#allocation6 + $0x398] sm:$0xff]
    %v3721 = vld [vmem:[#allocation6 + $0x3a0] sm:$0xff]
    %v3722 = vld [vmem:[#allocation6 + $0x3a8] sm:$0xff]
    %v3723 = vld [vmem:[#allocation6 + $0x3b0] sm:$0xff]
    %v3724 = vld [vmem:[#allocation6 + $0x3b8] sm:$0xff]
    %v3725 = vld [vmem:[#allocation6 + $0x3c0] sm:$0xff]
    %v3726 = vld [vmem:[#allocation6 + $0x3c8] sm:$0xff]
    %v3727 = vld [vmem:[#allocation6 + $0x3d0] sm:$0xff]
    %v3728 = vld [vmem:[#allocation6 + $0x3d8] sm:$0xff]
    %v3729 = vld [vmem:[#allocation6 + $0x3e0] sm:$0xff]
    %v3730 = vld [vmem:[#allocation6 + $0x3e8] sm:$0xff]
    %v3731 = vld [vmem:[#allocation6 + $0x3f0] sm:$0xff]
    %v3732 = vld [vmem:[#allocation6 + $0x3f8] sm:$0xff]
    %v3733 = vld [vmem:[#allocation6 + $0x400] sm:$0xff]
    %v3734 = vld [vmem:[#allocation6 + $0x408] sm:$0xff]
    %v3735 = vld [vmem:[#allocation6 + $0x410] sm:$0xff]
    %v3736 = vld [vmem:[#allocation6 + $0x418] sm:$0xff]
    %v3737 = vld [vmem:[#allocation6 + $0x420] sm:$0xff]
    %v3738 = vld [vmem:[#allocation6 + $0x428] sm:$0xff]
    %v3739 = vld [vmem:[#allocation6 + $0x430] sm:$0xff]
    %v3740 = vld [vmem:[#allocation6 + $0x438] sm:$0xff]
    %v3741 = vld [vmem:[#allocation6 + $0x440] sm:$0xff]
    %v3742 = vld [vmem:[#allocation6 + $0x448] sm:$0xff]
    %v3743 = vld [vmem:[#allocation6 + $0x450] sm:$0xff]
    %v3744 = vld [vmem:[#allocation6 + $0x458] sm:$0xff]
    %v3745 = vld [vmem:[#allocation6 + $0x460] sm:$0xff]
    %v3746 = vld [vmem:[#allocation6 + $0x468] sm:$0xff]
    %v3747 = vld [vmem:[#allocation6 + $0x470] sm:$0xff]
    %v3748 = vld [vmem:[#allocation6 + $0x478] sm:$0xff]
    %v3749 = vld [vmem:[#allocation6 + $0x480] sm:$0xff]
    %v3750 = vld [vmem:[#allocation6 + $0x488] sm:$0xff]
    %v3751 = vld [vmem:[#allocation6 + $0x490] sm:$0xff]
    %v3752 = vld [vmem:[#allocation6 + $0x498] sm:$0xff]
    %v3753 = vld [vmem:[#allocation6 + $0x4a0] sm:$0xff]
    %v3754 = vld [vmem:[#allocation6 + $0x4a8] sm:$0xff]
    %v3755 = vld [vmem:[#allocation6 + $0x4b0] sm:$0xff]
    %v3756 = vld [vmem:[#allocation6 + $0x4b8] sm:$0xff]
    %v3757 = vld [vmem:[#allocation6 + $0x4c0] sm:$0xff]
    %v3758 = vld [vmem:[#allocation6 + $0x4c8] sm:$0xff]
    %v3759 = vld [vmem:[#allocation6 + $0x4d0] sm:$0xff]
    %v3760 = vld [vmem:[#allocation6 + $0x4d8] sm:$0xff]
    %v3761 = vld [vmem:[#allocation6 + $0x4e0] sm:$0xff]
    %v3762 = vld [vmem:[#allocation6 + $0x4e8] sm:$0xff]
    %v3763 = vld [vmem:[#allocation6 + $0x4f0] sm:$0xff]
    %v3764 = vld [vmem:[#allocation6 + $0x4f8] sm:$0xff]
    %v3765 = vld [vmem:[#allocation6 + $0x500] sm:$0xff]
    %v3766 = vld [vmem:[#allocation6 + $0x508] sm:$0xff]
    %v3767 = vld [vmem:[#allocation6 + $0x510] sm:$0xff]
    %v3768 = vld [vmem:[#allocation6 + $0x518] sm:$0xff]
    %v3769 = vld [vmem:[#allocation6 + $0x520] sm:$0xff]
    %v3770 = vld [vmem:[#allocation6 + $0x528] sm:$0xff]
    %v3771 = vld [vmem:[#allocation6 + $0x530] sm:$0xff]
    %v3772 = vld [vmem:[#allocation6 + $0x538] sm:$0xff]
    %v3773 = vld [vmem:[#allocation6 + $0x540] sm:$0xff]
    %v3774 = vld [vmem:[#allocation6 + $0x548] sm:$0xff]
    %v3775 = vld [vmem:[#allocation6 + $0x550] sm:$0xff]
    %v3776 = vld [vmem:[#allocation6 + $0x558] sm:$0xff]
    %v3777 = vld [vmem:[#allocation6 + $0x560] sm:$0xff]
    %v3778 = vld [vmem:[#allocation6 + $0x568] sm:$0xff]
    %v3779 = vld [vmem:[#allocation6 + $0x570] sm:$0xff]
    %v3780 = vld [vmem:[#allocation6 + $0x578] sm:$0xff]
    %v3781 = vld [vmem:[#allocation6 + $0x580] sm:$0xff]
    %v3782 = vld [vmem:[#allocation6 + $0x588] sm:$0xff]
    %v3783 = vld [vmem:[#allocation6 + $0x590] sm:$0xff]
    %v3784 = vld [vmem:[#allocation6 + $0x598] sm:$0xff]
    %v3785 = vld [vmem:[#allocation6 + $0x5a0] sm:$0xff]
    %v3786 = vld [vmem:[#allocation6 + $0x5a8] sm:$0xff]
    %v3787 = vld [vmem:[#allocation6 + $0x5b0] sm:$0xff]
    %v3788 = vld [vmem:[#allocation6 + $0x5b8] sm:$0xff]
    %v3789 = vld [vmem:[#allocation6 + $0x5c0] sm:$0xff]
    %v3790 = vld [vmem:[#allocation6 + $0x5c8] sm:$0xff]
    %v3791 = vld [vmem:[#allocation6 + $0x5d0] sm:$0xff]
    %v3792 = vld [vmem:[#allocation6 + $0x5d8] sm:$0xff]
    %v3793 = vld [vmem:[#allocation6 + $0x5e0] sm:$0xff]
    %v3794 = vld [vmem:[#allocation6 + $0x5e8] sm:$0xff]
    %v3795 = vld [vmem:[#allocation6 + $0x5f0] sm:$0xff]
    %v3796 = vld [vmem:[#allocation6 + $0x5f8] sm:$0xff]
    %v3797 = vld [vmem:[#allocation6 + $0x600] sm:$0xff]
    %v3798 = vld [vmem:[#allocation6 + $0x608] sm:$0xff]
    %v3799 = vld [vmem:[#allocation6 + $0x610] sm:$0xff]
    %v3800 = vld [vmem:[#allocation6 + $0x618] sm:$0xff]
    %v3801 = vld [vmem:[#allocation6 + $0x620] sm:$0xff]
    %v3802 = vld [vmem:[#allocation6 + $0x628] sm:$0xff]
    %v3803 = vld [vmem:[#allocation6 + $0x630] sm:$0xff]
    %v3804 = vld [vmem:[#allocation6 + $0x638] sm:$0xff]
    %v3805 = vld [vmem:[#allocation6 + $0x640] sm:$0xff]
    %v3806 = vld [vmem:[#allocation6 + $0x648] sm:$0xff]
    %v3807 = vld [vmem:[#allocation6 + $0x650] sm:$0xff]
    %v3808 = vld [vmem:[#allocation6 + $0x658] sm:$0xff]
    %v3809 = vld [vmem:[#allocation6 + $0x660] sm:$0xff]
    %v3810 = vld [vmem:[#allocation6 + $0x668] sm:$0xff]
    %v3811 = vld [vmem:[#allocation6 + $0x670] sm:$0xff]
    %v3812 = vld [vmem:[#allocation6 + $0x678] sm:$0xff]
    %v3813 = vld [vmem:[#allocation6 + $0x680] sm:$0xff]
    %v3814 = vld [vmem:[#allocation6 + $0x688] sm:$0xff]
    %v3815 = vld [vmem:[#allocation6 + $0x690] sm:$0xff]
    %v3816 = vld [vmem:[#allocation6 + $0x698] sm:$0xff]
    %v3817 = vld [vmem:[#allocation6 + $0x6a0] sm:$0xff]
    %v3818 = vld [vmem:[#allocation6 + $0x6a8] sm:$0xff]
    %v3819 = vld [vmem:[#allocation6 + $0x6b0] sm:$0xff]
    %v3820 = vld [vmem:[#allocation6 + $0x6b8] sm:$0xff]
    %v3821 = vld [vmem:[#allocation6 + $0x6c0] sm:$0xff]
    %v3822 = vld [vmem:[#allocation6 + $0x6c8] sm:$0xff]
    %v3823 = vld [vmem:[#allocation6 + $0x6d0] sm:$0xff]
    %v3824 = vld [vmem:[#allocation6 + $0x6d8] sm:$0xff]
    %v3825 = vld [vmem:[#allocation6 + $0x6e0] sm:$0xff]
    %v3826 = vld [vmem:[#allocation6 + $0x6e8] sm:$0xff]
    %v3827 = vld [vmem:[#allocation6 + $0x6f0] sm:$0xff]
    %v3828 = vld [vmem:[#allocation6 + $0x6f8] sm:$0xff]
    %v3829 = vld [vmem:[#allocation6 + $0x700] sm:$0xff]
    %v3830 = vld [vmem:[#allocation6 + $0x708] sm:$0xff]
    %v3831 = vld [vmem:[#allocation6 + $0x710] sm:$0xff]
    %v3832 = vld [vmem:[#allocation6 + $0x718] sm:$0xff]
    %v3833 = vld [vmem:[#allocation6 + $0x720] sm:$0xff]
    %v3834 = vld [vmem:[#allocation6 + $0x728] sm:$0xff]
    %v3835 = vld [vmem:[#allocation6 + $0x730] sm:$0xff]
    %v3836 = vld [vmem:[#allocation6 + $0x738] sm:$0xff]
    %v3837 = vld [vmem:[#allocation6 + $0x740] sm:$0xff]
    %v3838 = vld [vmem:[#allocation6 + $0x748] sm:$0xff]
    %v3839 = vld [vmem:[#allocation6 + $0x750] sm:$0xff]
    %v3840 = vld [vmem:[#allocation6 + $0x758] sm:$0xff]
    %v3841 = vld [vmem:[#allocation6 + $0x760] sm:$0xff]
    %v3842 = vld [vmem:[#allocation6 + $0x768] sm:$0xff]
    %v3843 = vld [vmem:[#allocation6 + $0x770] sm:$0xff]
    %v3844 = vld [vmem:[#allocation6 + $0x778] sm:$0xff]
    %v3845 = vld [vmem:[#allocation6 + $0x780] sm:$0xff]
    %v3846 = vld [vmem:[#allocation6 + $0x788] sm:$0xff]
    %v3847 = vld [vmem:[#allocation6 + $0x790] sm:$0xff]
    %v3848 = vld [vmem:[#allocation6 + $0x798] sm:$0xff]
    %v3849 = vld [vmem:[#allocation6 + $0x7a0] sm:$0xff]
    %v3850 = vld [vmem:[#allocation6 + $0x7a8] sm:$0xff]
    %v3851 = vld [vmem:[#allocation6 + $0x7b0] sm:$0xff]
    %v3852 = vld [vmem:[#allocation6 + $0x7b8] sm:$0xff]
    %v3853 = vld [vmem:[#allocation6 + $0x7c0] sm:$0xff]
    %v3854 = vld [vmem:[#allocation6 + $0x7c8] sm:$0xff]
    %v3855 = vld [vmem:[#allocation6 + $0x7d0] sm:$0xff]
    %v3856 = vld [vmem:[#allocation6 + $0x7d8] sm:$0xff]
    %v3857 = vld [vmem:[#allocation6 + $0x7e0] sm:$0xff]
    %v3858 = vld [vmem:[#allocation6 + $0x7e8] sm:$0xff]
    %v3859 = vld [vmem:[#allocation6 + $0x7f0] sm:$0xff]
    %v3860 = vld [vmem:[#allocation6 + $0x7f8] sm:$0xff]
    %v3861 = vld [vmem:[#allocation7] sm:$0xf]
    %v3863 = vlaneseq
    %v3864 = vshrl.u32 %v3863, 7
    %v3865 = vsub.s32 0, %v3864
    %v3866 = vrot.slane %v3861, %v3865
    %v3867 = vlaneseq
    %v3868 = vshrl.u32 %v3867, 7
    %v3869 = vsub.s32 1, %v3868
    %v3870 = vrot.slane %v3861, %v3869
    %v3871 = vlaneseq
    %v3872 = vshrl.u32 %v3871, 7
    %v3873 = vsub.s32 2, %v3872
    %v3874 = vrot.slane %v3861, %v3873
    %v3875 = vlaneseq
    %v3876 = vshrl.u32 %v3875, 7
    %v3877 = vsub.s32 3, %v3876
    %v3878 = vrot.slane %v3861, %v3877
    %v4139 = vunpack.c.l.b16 %v3605
    %v4140 = vunpack.c.h.b16 %v3605
    %v4141 = vunpack.c.l.b16 %v3606
    %v4142 = vunpack.c.h.b16 %v3606
    %v4143 = vunpack.c.l.b16 %v3607
    %v4144 = vunpack.c.h.b16 %v3607
    %v4145 = vunpack.c.l.b16 %v3608
    %v4146 = vunpack.c.h.b16 %v3608
    %v4147 = vunpack.c.l.b16 %v3609
    %v4148 = vunpack.c.h.b16 %v3609
    %v4149 = vunpack.c.l.b16 %v3610
    %v4150 = vunpack.c.h.b16 %v3610
    %v4151 = vunpack.c.l.b16 %v3611
    %v4152 = vunpack.c.h.b16 %v3611
    %v4153 = vunpack.c.l.b16 %v3612
    %v4154 = vunpack.c.h.b16 %v3612
    %v4155 = vunpack.c.l.b16 %v3613
    %v4156 = vunpack.c.h.b16 %v3613
    %v4157 = vunpack.c.l.b16 %v3614
    %v4158 = vunpack.c.h.b16 %v3614
    %v4159 = vunpack.c.l.b16 %v3615
    %v4160 = vunpack.c.h.b16 %v3615
    %v4161 = vunpack.c.l.b16 %v3616
    %v4162 = vunpack.c.h.b16 %v3616
    %v4163 = vunpack.c.l.b16 %v3617
    %v4164 = vunpack.c.h.b16 %v3617
    %v4165 = vunpack.c.l.b16 %v3618
    %v4166 = vunpack.c.h.b16 %v3618
    %v4167 = vunpack.c.l.b16 %v3619
    %v4168 = vunpack.c.h.b16 %v3619
    %v4169 = vunpack.c.l.b16 %v3620
    %v4170 = vunpack.c.h.b16 %v3620
    %v4171 = vunpack.c.l.b16 %v3621
    %v4172 = vunpack.c.h.b16 %v3621
    %v4173 = vunpack.c.l.b16 %v3622
    %v4174 = vunpack.c.h.b16 %v3622
    %v4175 = vunpack.c.l.b16 %v3623
    %v4176 = vunpack.c.h.b16 %v3623
    %v4177 = vunpack.c.l.b16 %v3624
    %v4178 = vunpack.c.h.b16 %v3624
    %v4179 = vunpack.c.l.b16 %v3625
    %v4180 = vunpack.c.h.b16 %v3625
    %v4181 = vunpack.c.l.b16 %v3626
    %v4182 = vunpack.c.h.b16 %v3626
    %v4183 = vunpack.c.l.b16 %v3627
    %v4184 = vunpack.c.h.b16 %v3627
    %v4185 = vunpack.c.l.b16 %v3628
    %v4186 = vunpack.c.h.b16 %v3628
    %v4187 = vunpack.c.l.b16 %v3629
    %v4188 = vunpack.c.h.b16 %v3629
    %v4189 = vunpack.c.l.b16 %v3630
    %v4190 = vunpack.c.h.b16 %v3630
    %v4191 = vunpack.c.l.b16 %v3631
    %v4192 = vunpack.c.h.b16 %v3631
    %v4193 = vunpack.c.l.b16 %v3632
    %v4194 = vunpack.c.h.b16 %v3632
    %v4195 = vunpack.c.l.b16 %v3633
    %v4196 = vunpack.c.h.b16 %v3633
    %v4197 = vunpack.c.l.b16 %v3634
    %v4198 = vunpack.c.h.b16 %v3634
    %v4199 = vunpack.c.l.b16 %v3635
    %v4200 = vunpack.c.h.b16 %v3635
    %v4201 = vunpack.c.l.b16 %v3636
    %v4202 = vunpack.c.h.b16 %v3636
    %v4203 = vunpack.c.l.b16 %v3637
    %v4204 = vunpack.c.h.b16 %v3637
    %v4205 = vunpack.c.l.b16 %v3638
    %v4206 = vunpack.c.h.b16 %v3638
    %v4207 = vunpack.c.l.b16 %v3639
    %v4208 = vunpack.c.h.b16 %v3639
    %v4209 = vunpack.c.l.b16 %v3640
    %v4210 = vunpack.c.h.b16 %v3640
    %v4211 = vunpack.c.l.b16 %v3641
    %v4212 = vunpack.c.h.b16 %v3641
    %v4213 = vunpack.c.l.b16 %v3642
    %v4214 = vunpack.c.h.b16 %v3642
    %v4215 = vunpack.c.l.b16 %v3643
    %v4216 = vunpack.c.h.b16 %v3643
    %v4217 = vunpack.c.l.b16 %v3644
    %v4218 = vunpack.c.h.b16 %v3644
    %v4219 = vunpack.c.l.b16 %v3645
    %v4220 = vunpack.c.h.b16 %v3645
    %v4221 = vunpack.c.l.b16 %v3646
    %v4222 = vunpack.c.h.b16 %v3646
    %v4223 = vunpack.c.l.b16 %v3647
    %v4224 = vunpack.c.h.b16 %v3647
    %v4225 = vunpack.c.l.b16 %v3648
    %v4226 = vunpack.c.h.b16 %v3648
    %v4227 = vunpack.c.l.b16 %v3649
    %v4228 = vunpack.c.h.b16 %v3649
    %v4229 = vunpack.c.l.b16 %v3650
    %v4230 = vunpack.c.h.b16 %v3650
    %v4231 = vunpack.c.l.b16 %v3651
    %v4232 = vunpack.c.h.b16 %v3651
    %v4233 = vunpack.c.l.b16 %v3652
    %v4234 = vunpack.c.h.b16 %v3652
    %v4235 = vunpack.c.l.b16 %v3653
    %v4236 = vunpack.c.h.b16 %v3653
    %v4237 = vunpack.c.l.b16 %v3654
    %v4238 = vunpack.c.h.b16 %v3654
    %v4239 = vunpack.c.l.b16 %v3655
    %v4240 = vunpack.c.h.b16 %v3655
    %v4241 = vunpack.c.l.b16 %v3656
    %v4242 = vunpack.c.h.b16 %v3656
    %v4243 = vunpack.c.l.b16 %v3657
    %v4244 = vunpack.c.h.b16 %v3657
    %v4245 = vunpack.c.l.b16 %v3658
    %v4246 = vunpack.c.h.b16 %v3658
    %v4247 = vunpack.c.l.b16 %v3659
    %v4248 = vunpack.c.h.b16 %v3659
    %v4249 = vunpack.c.l.b16 %v3660
    %v4250 = vunpack.c.h.b16 %v3660
    %v4251 = vunpack.c.l.b16 %v3661
    %v4252 = vunpack.c.h.b16 %v3661
    %v4253 = vunpack.c.l.b16 %v3662
    %v4254 = vunpack.c.h.b16 %v3662
    %v4255 = vunpack.c.l.b16 %v3663
    %v4256 = vunpack.c.h.b16 %v3663
    %v4257 = vunpack.c.l.b16 %v3664
    %v4258 = vunpack.c.h.b16 %v3664
    %v4259 = vunpack.c.l.b16 %v3665
    %v4260 = vunpack.c.h.b16 %v3665
    %v4261 = vunpack.c.l.b16 %v3666
    %v4262 = vunpack.c.h.b16 %v3666
    %v4263 = vunpack.c.l.b16 %v3667
    %v4264 = vunpack.c.h.b16 %v3667
    %v4265 = vunpack.c.l.b16 %v3668
    %v4266 = vunpack.c.h.b16 %v3668
    %v4267 = vunpack.c.l.b16 %v3669
    %v4268 = vunpack.c.h.b16 %v3669
    %v4269 = vunpack.c.l.b16 %v3670
    %v4270 = vunpack.c.h.b16 %v3670
    %v4271 = vunpack.c.l.b16 %v3671
    %v4272 = vunpack.c.h.b16 %v3671
    %v4273 = vunpack.c.l.b16 %v3672
    %v4274 = vunpack.c.h.b16 %v3672
    %v4275 = vunpack.c.l.b16 %v3673
    %v4276 = vunpack.c.h.b16 %v3673
    %v4277 = vunpack.c.l.b16 %v3674
    %v4278 = vunpack.c.h.b16 %v3674
    %v4279 = vunpack.c.l.b16 %v3675
    %v4280 = vunpack.c.h.b16 %v3675
    %v4281 = vunpack.c.l.b16 %v3676
    %v4282 = vunpack.c.h.b16 %v3676
    %v4283 = vunpack.c.l.b16 %v3677
    %v4284 = vunpack.c.h.b16 %v3677
    %v4285 = vunpack.c.l.b16 %v3678
    %v4286 = vunpack.c.h.b16 %v3678
    %v4287 = vunpack.c.l.b16 %v3679
    %v4288 = vunpack.c.h.b16 %v3679
    %v4289 = vunpack.c.l.b16 %v3680
    %v4290 = vunpack.c.h.b16 %v3680
    %v4291 = vunpack.c.l.b16 %v3681
    %v4292 = vunpack.c.h.b16 %v3681
    %v4293 = vunpack.c.l.b16 %v3682
    %v4294 = vunpack.c.h.b16 %v3682
    %v4295 = vunpack.c.l.b16 %v3683
    %v4296 = vunpack.c.h.b16 %v3683
    %v4297 = vunpack.c.l.b16 %v3684
    %v4298 = vunpack.c.h.b16 %v3684
    %v4299 = vunpack.c.l.b16 %v3685
    %v4300 = vunpack.c.h.b16 %v3685
    %v4301 = vunpack.c.l.b16 %v3686
    %v4302 = vunpack.c.h.b16 %v3686
    %v4303 = vunpack.c.l.b16 %v3687
    %v4304 = vunpack.c.h.b16 %v3687
    %v4305 = vunpack.c.l.b16 %v3688
    %v4306 = vunpack.c.h.b16 %v3688
    %v4307 = vunpack.c.l.b16 %v3689
    %v4308 = vunpack.c.h.b16 %v3689
    %v4309 = vunpack.c.l.b16 %v3690
    %v4310 = vunpack.c.h.b16 %v3690
    %v4311 = vunpack.c.l.b16 %v3691
    %v4312 = vunpack.c.h.b16 %v3691
    %v4313 = vunpack.c.l.b16 %v3692
    %v4314 = vunpack.c.h.b16 %v3692
    %v4315 = vunpack.c.l.b16 %v3693
    %v4316 = vunpack.c.h.b16 %v3693
    %v4317 = vunpack.c.l.b16 %v3694
    %v4318 = vunpack.c.h.b16 %v3694
    %v4319 = vunpack.c.l.b16 %v3695
    %v4320 = vunpack.c.h.b16 %v3695
    %v4321 = vunpack.c.l.b16 %v3696
    %v4322 = vunpack.c.h.b16 %v3696
    %v4323 = vunpack.c.l.b16 %v3697
    %v4324 = vunpack.c.h.b16 %v3697
    %v4325 = vunpack.c.l.b16 %v3698
    %v4326 = vunpack.c.h.b16 %v3698
    %v4327 = vunpack.c.l.b16 %v3699
    %v4328 = vunpack.c.h.b16 %v3699
    %v4329 = vunpack.c.l.b16 %v3700
    %v4330 = vunpack.c.h.b16 %v3700
    %v4331 = vunpack.c.l.b16 %v3701
    %v4332 = vunpack.c.h.b16 %v3701
    %v4333 = vunpack.c.l.b16 %v3702
    %v4334 = vunpack.c.h.b16 %v3702
    %v4335 = vunpack.c.l.b16 %v3703
    %v4336 = vunpack.c.h.b16 %v3703
    %v4337 = vunpack.c.l.b16 %v3704
    %v4338 = vunpack.c.h.b16 %v3704
    %v4339 = vunpack.c.l.b16 %v3705
    %v4340 = vunpack.c.h.b16 %v3705
    %v4341 = vunpack.c.l.b16 %v3706
    %v4342 = vunpack.c.h.b16 %v3706
    %v4343 = vunpack.c.l.b16 %v3707
    %v4344 = vunpack.c.h.b16 %v3707
    %v4345 = vunpack.c.l.b16 %v3708
    %v4346 = vunpack.c.h.b16 %v3708
    %v4347 = vunpack.c.l.b16 %v3709
    %v4348 = vunpack.c.h.b16 %v3709
    %v4349 = vunpack.c.l.b16 %v3710
    %v4350 = vunpack.c.h.b16 %v3710
    %v4351 = vunpack.c.l.b16 %v3711
    %v4352 = vunpack.c.h.b16 %v3711
    %v4353 = vunpack.c.l.b16 %v3712
    %v4354 = vunpack.c.h.b16 %v3712
    %v4355 = vunpack.c.l.b16 %v3713
    %v4356 = vunpack.c.h.b16 %v3713
    %v4357 = vunpack.c.l.b16 %v3714
    %v4358 = vunpack.c.h.b16 %v3714
    %v4359 = vunpack.c.l.b16 %v3715
    %v4360 = vunpack.c.h.b16 %v3715
    %v4361 = vunpack.c.l.b16 %v3716
    %v4362 = vunpack.c.h.b16 %v3716
    %v4363 = vunpack.c.l.b16 %v3717
    %v4364 = vunpack.c.h.b16 %v3717
    %v4365 = vunpack.c.l.b16 %v3718
    %v4366 = vunpack.c.h.b16 %v3718
    %v4367 = vunpack.c.l.b16 %v3719
    %v4368 = vunpack.c.h.b16 %v3719
    %v4369 = vunpack.c.l.b16 %v3720
    %v4370 = vunpack.c.h.b16 %v3720
    %v4371 = vunpack.c.l.b16 %v3721
    %v4372 = vunpack.c.h.b16 %v3721
    %v4373 = vunpack.c.l.b16 %v3722
    %v4374 = vunpack.c.h.b16 %v3722
    %v4375 = vunpack.c.l.b16 %v3723
    %v4376 = vunpack.c.h.b16 %v3723
    %v4377 = vunpack.c.l.b16 %v3724
    %v4378 = vunpack.c.h.b16 %v3724
    %v4379 = vunpack.c.l.b16 %v3725
    %v4380 = vunpack.c.h.b16 %v3725
    %v4381 = vunpack.c.l.b16 %v3726
    %v4382 = vunpack.c.h.b16 %v3726
    %v4383 = vunpack.c.l.b16 %v3727
    %v4384 = vunpack.c.h.b16 %v3727
    %v4385 = vunpack.c.l.b16 %v3728
    %v4386 = vunpack.c.h.b16 %v3728
    %v4387 = vunpack.c.l.b16 %v3729
    %v4388 = vunpack.c.h.b16 %v3729
    %v4389 = vunpack.c.l.b16 %v3730
    %v4390 = vunpack.c.h.b16 %v3730
    %v4391 = vunpack.c.l.b16 %v3731
    %v4392 = vunpack.c.h.b16 %v3731
    %v4393 = vunpack.c.l.b16 %v3732
    %v4394 = vunpack.c.h.b16 %v3732
    %v4395 = vunpack.c.l.b16 %v3733
    %v4396 = vunpack.c.h.b16 %v3733
    %v4397 = vunpack.c.l.b16 %v3734
    %v4398 = vunpack.c.h.b16 %v3734
    %v4399 = vunpack.c.l.b16 %v3735
    %v4400 = vunpack.c.h.b16 %v3735
    %v4401 = vunpack.c.l.b16 %v3736
    %v4402 = vunpack.c.h.b16 %v3736
    %v4403 = vunpack.c.l.b16 %v3737
    %v4404 = vunpack.c.h.b16 %v3737
    %v4405 = vunpack.c.l.b16 %v3738
    %v4406 = vunpack.c.h.b16 %v3738
    %v4407 = vunpack.c.l.b16 %v3739
    %v4408 = vunpack.c.h.b16 %v3739
    %v4409 = vunpack.c.l.b16 %v3740
    %v4410 = vunpack.c.h.b16 %v3740
    %v4411 = vunpack.c.l.b16 %v3741
    %v4412 = vunpack.c.h.b16 %v3741
    %v4413 = vunpack.c.l.b16 %v3742
    %v4414 = vunpack.c.h.b16 %v3742
    %v4415 = vunpack.c.l.b16 %v3743
    %v4416 = vunpack.c.h.b16 %v3743
    %v4417 = vunpack.c.l.b16 %v3744
    %v4418 = vunpack.c.h.b16 %v3744
    %v4419 = vunpack.c.l.b16 %v3745
    %v4420 = vunpack.c.h.b16 %v3745
    %v4421 = vunpack.c.l.b16 %v3746
    %v4422 = vunpack.c.h.b16 %v3746
    %v4423 = vunpack.c.l.b16 %v3747
    %v4424 = vunpack.c.h.b16 %v3747
    %v4425 = vunpack.c.l.b16 %v3748
    %v4426 = vunpack.c.h.b16 %v3748
    %v4427 = vunpack.c.l.b16 %v3749
    %v4428 = vunpack.c.h.b16 %v3749
    %v4429 = vunpack.c.l.b16 %v3750
    %v4430 = vunpack.c.h.b16 %v3750
    %v4431 = vunpack.c.l.b16 %v3751
    %v4432 = vunpack.c.h.b16 %v3751
    %v4433 = vunpack.c.l.b16 %v3752
    %v4434 = vunpack.c.h.b16 %v3752
    %v4435 = vunpack.c.l.b16 %v3753
    %v4436 = vunpack.c.h.b16 %v3753
    %v4437 = vunpack.c.l.b16 %v3754
    %v4438 = vunpack.c.h.b16 %v3754
    %v4439 = vunpack.c.l.b16 %v3755
    %v4440 = vunpack.c.h.b16 %v3755
    %v4441 = vunpack.c.l.b16 %v3756
    %v4442 = vunpack.c.h.b16 %v3756
    %v4443 = vunpack.c.l.b16 %v3757
    %v4444 = vunpack.c.h.b16 %v3757
    %v4445 = vunpack.c.l.b16 %v3758
    %v4446 = vunpack.c.h.b16 %v3758
    %v4447 = vunpack.c.l.b16 %v3759
    %v4448 = vunpack.c.h.b16 %v3759
    %v4449 = vunpack.c.l.b16 %v3760
    %v4450 = vunpack.c.h.b16 %v3760
    %v4451 = vunpack.c.l.b16 %v3761
    %v4452 = vunpack.c.h.b16 %v3761
    %v4453 = vunpack.c.l.b16 %v3762
    %v4454 = vunpack.c.h.b16 %v3762
    %v4455 = vunpack.c.l.b16 %v3763
    %v4456 = vunpack.c.h.b16 %v3763
    %v4457 = vunpack.c.l.b16 %v3764
    %v4458 = vunpack.c.h.b16 %v3764
    %v4459 = vunpack.c.l.b16 %v3765
    %v4460 = vunpack.c.h.b16 %v3765
    %v4461 = vunpack.c.l.b16 %v3766
    %v4462 = vunpack.c.h.b16 %v3766
    %v4463 = vunpack.c.l.b16 %v3767
    %v4464 = vunpack.c.h.b16 %v3767
    %v4465 = vunpack.c.l.b16 %v3768
    %v4466 = vunpack.c.h.b16 %v3768
    %v4467 = vunpack.c.l.b16 %v3769
    %v4468 = vunpack.c.h.b16 %v3769
    %v4469 = vunpack.c.l.b16 %v3770
    %v4470 = vunpack.c.h.b16 %v3770
    %v4471 = vunpack.c.l.b16 %v3771
    %v4472 = vunpack.c.h.b16 %v3771
    %v4473 = vunpack.c.l.b16 %v3772
    %v4474 = vunpack.c.h.b16 %v3772
    %v4475 = vunpack.c.l.b16 %v3773
    %v4476 = vunpack.c.h.b16 %v3773
    %v4477 = vunpack.c.l.b16 %v3774
    %v4478 = vunpack.c.h.b16 %v3774
    %v4479 = vunpack.c.l.b16 %v3775
    %v4480 = vunpack.c.h.b16 %v3775
    %v4481 = vunpack.c.l.b16 %v3776
    %v4482 = vunpack.c.h.b16 %v3776
    %v4483 = vunpack.c.l.b16 %v3777
    %v4484 = vunpack.c.h.b16 %v3777
    %v4485 = vunpack.c.l.b16 %v3778
    %v4486 = vunpack.c.h.b16 %v3778
    %v4487 = vunpack.c.l.b16 %v3779
    %v4488 = vunpack.c.h.b16 %v3779
    %v4489 = vunpack.c.l.b16 %v3780
    %v4490 = vunpack.c.h.b16 %v3780
    %v4491 = vunpack.c.l.b16 %v3781
    %v4492 = vunpack.c.h.b16 %v3781
    %v4493 = vunpack.c.l.b16 %v3782
    %v4494 = vunpack.c.h.b16 %v3782
    %v4495 = vunpack.c.l.b16 %v3783
    %v4496 = vunpack.c.h.b16 %v3783
    %v4497 = vunpack.c.l.b16 %v3784
    %v4498 = vunpack.c.h.b16 %v3784
    %v4499 = vunpack.c.l.b16 %v3785
    %v4500 = vunpack.c.h.b16 %v3785
    %v4501 = vunpack.c.l.b16 %v3786
    %v4502 = vunpack.c.h.b16 %v3786
    %v4503 = vunpack.c.l.b16 %v3787
    %v4504 = vunpack.c.h.b16 %v3787
    %v4505 = vunpack.c.l.b16 %v3788
    %v4506 = vunpack.c.h.b16 %v3788
    %v4507 = vunpack.c.l.b16 %v3789
    %v4508 = vunpack.c.h.b16 %v3789
    %v4509 = vunpack.c.l.b16 %v3790
    %v4510 = vunpack.c.h.b16 %v3790
    %v4511 = vunpack.c.l.b16 %v3791
    %v4512 = vunpack.c.h.b16 %v3791
    %v4513 = vunpack.c.l.b16 %v3792
    %v4514 = vunpack.c.h.b16 %v3792
    %v4515 = vunpack.c.l.b16 %v3793
    %v4516 = vunpack.c.h.b16 %v3793
    %v4517 = vunpack.c.l.b16 %v3794
    %v4518 = vunpack.c.h.b16 %v3794
    %v4519 = vunpack.c.l.b16 %v3795
    %v4520 = vunpack.c.h.b16 %v3795
    %v4521 = vunpack.c.l.b16 %v3796
    %v4522 = vunpack.c.h.b16 %v3796
    %v4523 = vunpack.c.l.b16 %v3797
    %v4524 = vunpack.c.h.b16 %v3797
    %v4525 = vunpack.c.l.b16 %v3798
    %v4526 = vunpack.c.h.b16 %v3798
    %v4527 = vunpack.c.l.b16 %v3799
    %v4528 = vunpack.c.h.b16 %v3799
    %v4529 = vunpack.c.l.b16 %v3800
    %v4530 = vunpack.c.h.b16 %v3800
    %v4531 = vunpack.c.l.b16 %v3801
    %v4532 = vunpack.c.h.b16 %v3801
    %v4533 = vunpack.c.l.b16 %v3802
    %v4534 = vunpack.c.h.b16 %v3802
    %v4535 = vunpack.c.l.b16 %v3803
    %v4536 = vunpack.c.h.b16 %v3803
    %v4537 = vunpack.c.l.b16 %v3804
    %v4538 = vunpack.c.h.b16 %v3804
    %v4539 = vunpack.c.l.b16 %v3805
    %v4540 = vunpack.c.h.b16 %v3805
    %v4541 = vunpack.c.l.b16 %v3806
    %v4542 = vunpack.c.h.b16 %v3806
    %v4543 = vunpack.c.l.b16 %v3807
    %v4544 = vunpack.c.h.b16 %v3807
    %v4545 = vunpack.c.l.b16 %v3808
    %v4546 = vunpack.c.h.b16 %v3808
    %v4547 = vunpack.c.l.b16 %v3809
    %v4548 = vunpack.c.h.b16 %v3809
    %v4549 = vunpack.c.l.b16 %v3810
    %v4550 = vunpack.c.h.b16 %v3810
    %v4551 = vunpack.c.l.b16 %v3811
    %v4552 = vunpack.c.h.b16 %v3811
    %v4553 = vunpack.c.l.b16 %v3812
    %v4554 = vunpack.c.h.b16 %v3812
    %v4555 = vunpack.c.l.b16 %v3813
    %v4556 = vunpack.c.h.b16 %v3813
    %v4557 = vunpack.c.l.b16 %v3814
    %v4558 = vunpack.c.h.b16 %v3814
    %v4559 = vunpack.c.l.b16 %v3815
    %v4560 = vunpack.c.h.b16 %v3815
    %v4561 = vunpack.c.l.b16 %v3816
    %v4562 = vunpack.c.h.b16 %v3816
    %v4563 = vunpack.c.l.b16 %v3817
    %v4564 = vunpack.c.h.b16 %v3817
    %v4565 = vunpack.c.l.b16 %v3818
    %v4566 = vunpack.c.h.b16 %v3818
    %v4567 = vunpack.c.l.b16 %v3819
    %v4568 = vunpack.c.h.b16 %v3819
    %v4569 = vunpack.c.l.b16 %v3820
    %v4570 = vunpack.c.h.b16 %v3820
    %v4571 = vunpack.c.l.b16 %v3821
    %v4572 = vunpack.c.h.b16 %v3821
    %v4573 = vunpack.c.l.b16 %v3822
    %v4574 = vunpack.c.h.b16 %v3822
    %v4575 = vunpack.c.l.b16 %v3823
    %v4576 = vunpack.c.h.b16 %v3823
    %v4577 = vunpack.c.l.b16 %v3824
    %v4578 = vunpack.c.h.b16 %v3824
    %v4579 = vunpack.c.l.b16 %v3825
    %v4580 = vunpack.c.h.b16 %v3825
    %v4581 = vunpack.c.l.b16 %v3826
    %v4582 = vunpack.c.h.b16 %v3826
    %v4583 = vunpack.c.l.b16 %v3827
    %v4584 = vunpack.c.h.b16 %v3827
    %v4585 = vunpack.c.l.b16 %v3828
    %v4586 = vunpack.c.h.b16 %v3828
    %v4587 = vunpack.c.l.b16 %v3829
    %v4588 = vunpack.c.h.b16 %v3829
    %v4589 = vunpack.c.l.b16 %v3830
    %v4590 = vunpack.c.h.b16 %v3830
    %v4591 = vunpack.c.l.b16 %v3831
    %v4592 = vunpack.c.h.b16 %v3831
    %v4593 = vunpack.c.l.b16 %v3832
    %v4594 = vunpack.c.h.b16 %v3832
    %v4595 = vunpack.c.l.b16 %v3833
    %v4596 = vunpack.c.h.b16 %v3833
    %v4597 = vunpack.c.l.b16 %v3834
    %v4598 = vunpack.c.h.b16 %v3834
    %v4599 = vunpack.c.l.b16 %v3835
    %v4600 = vunpack.c.h.b16 %v3835
    %v4601 = vunpack.c.l.b16 %v3836
    %v4602 = vunpack.c.h.b16 %v3836
    %v4603 = vunpack.c.l.b16 %v3837
    %v4604 = vunpack.c.h.b16 %v3837
    %v4605 = vunpack.c.l.b16 %v3838
    %v4606 = vunpack.c.h.b16 %v3838
    %v4607 = vunpack.c.l.b16 %v3839
    %v4608 = vunpack.c.h.b16 %v3839
    %v4609 = vunpack.c.l.b16 %v3840
    %v4610 = vunpack.c.h.b16 %v3840
    %v4611 = vunpack.c.l.b16 %v3841
    %v4612 = vunpack.c.h.b16 %v3841
    %v4613 = vunpack.c.l.b16 %v3842
    %v4614 = vunpack.c.h.b16 %v3842
    %v4615 = vunpack.c.l.b16 %v3843
    %v4616 = vunpack.c.h.b16 %v3843
    %v4617 = vunpack.c.l.b16 %v3844
    %v4618 = vunpack.c.h.b16 %v3844
    %v4619 = vunpack.c.l.b16 %v3845
    %v4620 = vunpack.c.h.b16 %v3845
    %v4621 = vunpack.c.l.b16 %v3846
    %v4622 = vunpack.c.h.b16 %v3846
    %v4623 = vunpack.c.l.b16 %v3847
    %v4624 = vunpack.c.h.b16 %v3847
    %v4625 = vunpack.c.l.b16 %v3848
    %v4626 = vunpack.c.h.b16 %v3848
    %v4627 = vunpack.c.l.b16 %v3849
    %v4628 = vunpack.c.h.b16 %v3849
    %v4629 = vunpack.c.l.b16 %v3850
    %v4630 = vunpack.c.h.b16 %v3850
    %v4631 = vunpack.c.l.b16 %v3851
    %v4632 = vunpack.c.h.b16 %v3851
    %v4633 = vunpack.c.l.b16 %v3852
    %v4634 = vunpack.c.h.b16 %v3852
    %v4635 = vunpack.c.l.b16 %v3853
    %v4636 = vunpack.c.h.b16 %v3853
    %v4637 = vunpack.c.l.b16 %v3854
    %v4638 = vunpack.c.h.b16 %v3854
    %v4639 = vunpack.c.l.b16 %v3855
    %v4640 = vunpack.c.h.b16 %v3855
    %v4641 = vunpack.c.l.b16 %v3856
    %v4642 = vunpack.c.h.b16 %v3856
    %v4643 = vunpack.c.l.b16 %v3857
    %v4644 = vunpack.c.h.b16 %v3857
    %v4645 = vunpack.c.l.b16 %v3858
    %v4646 = vunpack.c.h.b16 %v3858
    %v4647 = vunpack.c.l.b16 %v3859
    %v4648 = vunpack.c.h.b16 %v3859
    %v4649 = vunpack.c.l.b16 %v3860
    %v4650 = vunpack.c.h.b16 %v3860
    %v4651 = vpack.c.b16 %v4143, %v4139
    %v4652 = vpack.c.b16 %v4144, %v4140
    %v4653 = vpack.c.b16 %v4145, %v4141
    %v4654 = vpack.c.b16 %v4146, %v4142
    %v4655 = vpack.c.b16 %v4151, %v4147
    %v4656 = vpack.c.b16 %v4152, %v4148
    %v4657 = vpack.c.b16 %v4153, %v4149
    %v4658 = vpack.c.b16 %v4154, %v4150
    %v4659 = vpack.c.b16 %v4159, %v4155
    %v4660 = vpack.c.b16 %v4160, %v4156
    %v4661 = vpack.c.b16 %v4161, %v4157
    %v4662 = vpack.c.b16 %v4162, %v4158
    %v4663 = vpack.c.b16 %v4167, %v4163
    %v4664 = vpack.c.b16 %v4168, %v4164
    %v4665 = vpack.c.b16 %v4169, %v4165
    %v4666 = vpack.c.b16 %v4170, %v4166
    %v4667 = vpack.c.b16 %v4175, %v4171
    %v4668 = vpack.c.b16 %v4176, %v4172
    %v4669 = vpack.c.b16 %v4177, %v4173
    %v4670 = vpack.c.b16 %v4178, %v4174
    %v4671 = vpack.c.b16 %v4183, %v4179
    %v4672 = vpack.c.b16 %v4184, %v4180
    %v4673 = vpack.c.b16 %v4185, %v4181
    %v4674 = vpack.c.b16 %v4186, %v4182
    %v4675 = vpack.c.b16 %v4191, %v4187
    %v4676 = vpack.c.b16 %v4192, %v4188
    %v4677 = vpack.c.b16 %v4193, %v4189
    %v4678 = vpack.c.b16 %v4194, %v4190
    %v4679 = vpack.c.b16 %v4199, %v4195
    %v4680 = vpack.c.b16 %v4200, %v4196
    %v4681 = vpack.c.b16 %v4201, %v4197
    %v4682 = vpack.c.b16 %v4202, %v4198
    %v4683 = vpack.c.b16 %v4207, %v4203
    %v4684 = vpack.c.b16 %v4208, %v4204
    %v4685 = vpack.c.b16 %v4209, %v4205
    %v4686 = vpack.c.b16 %v4210, %v4206
    %v4687 = vpack.c.b16 %v4215, %v4211
    %v4688 = vpack.c.b16 %v4216, %v4212
    %v4689 = vpack.c.b16 %v4217, %v4213
    %v4690 = vpack.c.b16 %v4218, %v4214
    %v4691 = vpack.c.b16 %v4223, %v4219
    %v4692 = vpack.c.b16 %v4224, %v4220
    %v4693 = vpack.c.b16 %v4225, %v4221
    %v4694 = vpack.c.b16 %v4226, %v4222
    %v4695 = vpack.c.b16 %v4231, %v4227
    %v4696 = vpack.c.b16 %v4232, %v4228
    %v4697 = vpack.c.b16 %v4233, %v4229
    %v4698 = vpack.c.b16 %v4234, %v4230
    %v4699 = vpack.c.b16 %v4239, %v4235
    %v4700 = vpack.c.b16 %v4240, %v4236
    %v4701 = vpack.c.b16 %v4241, %v4237
    %v4702 = vpack.c.b16 %v4242, %v4238
    %v4703 = vpack.c.b16 %v4247, %v4243
    %v4704 = vpack.c.b16 %v4248, %v4244
    %v4705 = vpack.c.b16 %v4249, %v4245
    %v4706 = vpack.c.b16 %v4250, %v4246
    %v4707 = vpack.c.b16 %v4255, %v4251
    %v4708 = vpack.c.b16 %v4256, %v4252
    %v4709 = vpack.c.b16 %v4257, %v4253
    %v4710 = vpack.c.b16 %v4258, %v4254
    %v4711 = vpack.c.b16 %v4263, %v4259
    %v4712 = vpack.c.b16 %v4264, %v4260
    %v4713 = vpack.c.b16 %v4265, %v4261
    %v4714 = vpack.c.b16 %v4266, %v4262
    %v4715 = vpack.c.b16 %v4271, %v4267
    %v4716 = vpack.c.b16 %v4272, %v4268
    %v4717 = vpack.c.b16 %v4273, %v4269
    %v4718 = vpack.c.b16 %v4274, %v4270
    %v4719 = vpack.c.b16 %v4279, %v4275
    %v4720 = vpack.c.b16 %v4280, %v4276
    %v4721 = vpack.c.b16 %v4281, %v4277
    %v4722 = vpack.c.b16 %v4282, %v4278
    %v4723 = vpack.c.b16 %v4287, %v4283
    %v4724 = vpack.c.b16 %v4288, %v4284
    %v4725 = vpack.c.b16 %v4289, %v4285
    %v4726 = vpack.c.b16 %v4290, %v4286
    %v4727 = vpack.c.b16 %v4295, %v4291
    %v4728 = vpack.c.b16 %v4296, %v4292
    %v4729 = vpack.c.b16 %v4297, %v4293
    %v4730 = vpack.c.b16 %v4298, %v4294
    %v4731 = vpack.c.b16 %v4303, %v4299
    %v4732 = vpack.c.b16 %v4304, %v4300
    %v4733 = vpack.c.b16 %v4305, %v4301
    %v4734 = vpack.c.b16 %v4306, %v4302
    %v4735 = vpack.c.b16 %v4311, %v4307
    %v4736 = vpack.c.b16 %v4312, %v4308
    %v4737 = vpack.c.b16 %v4313, %v4309
    %v4738 = vpack.c.b16 %v4314, %v4310
    %v4739 = vpack.c.b16 %v4319, %v4315
    %v4740 = vpack.c.b16 %v4320, %v4316
    %v4741 = vpack.c.b16 %v4321, %v4317
    %v4742 = vpack.c.b16 %v4322, %v4318
    %v4743 = vpack.c.b16 %v4327, %v4323
    %v4744 = vpack.c.b16 %v4328, %v4324
    %v4745 = vpack.c.b16 %v4329, %v4325
    %v4746 = vpack.c.b16 %v4330, %v4326
    %v4747 = vpack.c.b16 %v4335, %v4331
    %v4748 = vpack.c.b16 %v4336, %v4332
    %v4749 = vpack.c.b16 %v4337, %v4333
    %v4750 = vpack.c.b16 %v4338, %v4334
    %v4751 = vpack.c.b16 %v4343, %v4339
    %v4752 = vpack.c.b16 %v4344, %v4340
    %v4753 = vpack.c.b16 %v4345, %v4341
    %v4754 = vpack.c.b16 %v4346, %v4342
    %v4755 = vpack.c.b16 %v4351, %v4347
    %v4756 = vpack.c.b16 %v4352, %v4348
    %v4757 = vpack.c.b16 %v4353, %v4349
    %v4758 = vpack.c.b16 %v4354, %v4350
    %v4759 = vpack.c.b16 %v4359, %v4355
    %v4760 = vpack.c.b16 %v4360, %v4356
    %v4761 = vpack.c.b16 %v4361, %v4357
    %v4762 = vpack.c.b16 %v4362, %v4358
    %v4763 = vpack.c.b16 %v4367, %v4363
    %v4764 = vpack.c.b16 %v4368, %v4364
    %v4765 = vpack.c.b16 %v4369, %v4365
    %v4766 = vpack.c.b16 %v4370, %v4366
    %v4767 = vpack.c.b16 %v4375, %v4371
    %v4768 = vpack.c.b16 %v4376, %v4372
    %v4769 = vpack.c.b16 %v4377, %v4373
    %v4770 = vpack.c.b16 %v4378, %v4374
    %v4771 = vpack.c.b16 %v4383, %v4379
    %v4772 = vpack.c.b16 %v4384, %v4380
    %v4773 = vpack.c.b16 %v4385, %v4381
    %v4774 = vpack.c.b16 %v4386, %v4382
    %v4775 = vpack.c.b16 %v4391, %v4387
    %v4776 = vpack.c.b16 %v4392, %v4388
    %v4777 = vpack.c.b16 %v4393, %v4389
    %v4778 = vpack.c.b16 %v4394, %v4390
    %v4779 = vpack.c.b16 %v4399, %v4395
    %v4780 = vpack.c.b16 %v4400, %v4396
    %v4781 = vpack.c.b16 %v4401, %v4397
    %v4782 = vpack.c.b16 %v4402, %v4398
    %v4783 = vpack.c.b16 %v4407, %v4403
    %v4784 = vpack.c.b16 %v4408, %v4404
    %v4785 = vpack.c.b16 %v4409, %v4405
    %v4786 = vpack.c.b16 %v4410, %v4406
    %v4787 = vpack.c.b16 %v4415, %v4411
    %v4788 = vpack.c.b16 %v4416, %v4412
    %v4789 = vpack.c.b16 %v4417, %v4413
    %v4790 = vpack.c.b16 %v4418, %v4414
    %v4791 = vpack.c.b16 %v4423, %v4419
    %v4792 = vpack.c.b16 %v4424, %v4420
    %v4793 = vpack.c.b16 %v4425, %v4421
    %v4794 = vpack.c.b16 %v4426, %v4422
    %v4795 = vpack.c.b16 %v4431, %v4427
    %v4796 = vpack.c.b16 %v4432, %v4428
    %v4797 = vpack.c.b16 %v4433, %v4429
    %v4798 = vpack.c.b16 %v4434, %v4430
    %v4799 = vpack.c.b16 %v4439, %v4435
    %v4800 = vpack.c.b16 %v4440, %v4436
    %v4801 = vpack.c.b16 %v4441, %v4437
    %v4802 = vpack.c.b16 %v4442, %v4438
    %v4803 = vpack.c.b16 %v4447, %v4443
    %v4804 = vpack.c.b16 %v4448, %v4444
    %v4805 = vpack.c.b16 %v4449, %v4445
    %v4806 = vpack.c.b16 %v4450, %v4446
    %v4807 = vpack.c.b16 %v4455, %v4451
    %v4808 = vpack.c.b16 %v4456, %v4452
    %v4809 = vpack.c.b16 %v4457, %v4453
    %v4810 = vpack.c.b16 %v4458, %v4454
    %v4811 = vpack.c.b16 %v4463, %v4459
    %v4812 = vpack.c.b16 %v4464, %v4460
    %v4813 = vpack.c.b16 %v4465, %v4461
    %v4814 = vpack.c.b16 %v4466, %v4462
    %v4815 = vpack.c.b16 %v4471, %v4467
    %v4816 = vpack.c.b16 %v4472, %v4468
    %v4817 = vpack.c.b16 %v4473, %v4469
    %v4818 = vpack.c.b16 %v4474, %v4470
    %v4819 = vpack.c.b16 %v4479, %v4475
    %v4820 = vpack.c.b16 %v4480, %v4476
    %v4821 = vpack.c.b16 %v4481, %v4477
    %v4822 = vpack.c.b16 %v4482, %v4478
    %v4823 = vpack.c.b16 %v4487, %v4483
    %v4824 = vpack.c.b16 %v4488, %v4484
    %v4825 = vpack.c.b16 %v4489, %v4485
    %v4826 = vpack.c.b16 %v4490, %v4486
    %v4827 = vpack.c.b16 %v4495, %v4491
    %v4828 = vpack.c.b16 %v4496, %v4492
    %v4829 = vpack.c.b16 %v4497, %v4493
    %v4830 = vpack.c.b16 %v4498, %v4494
    %v4831 = vpack.c.b16 %v4503, %v4499
    %v4832 = vpack.c.b16 %v4504, %v4500
    %v4833 = vpack.c.b16 %v4505, %v4501
    %v4834 = vpack.c.b16 %v4506, %v4502
    %v4835 = vpack.c.b16 %v4511, %v4507
    %v4836 = vpack.c.b16 %v4512, %v4508
    %v4837 = vpack.c.b16 %v4513, %v4509
    %v4838 = vpack.c.b16 %v4514, %v4510
    %v4839 = vpack.c.b16 %v4519, %v4515
    %v4840 = vpack.c.b16 %v4520, %v4516
    %v4841 = vpack.c.b16 %v4521, %v4517
    %v4842 = vpack.c.b16 %v4522, %v4518
    %v4843 = vpack.c.b16 %v4527, %v4523
    %v4844 = vpack.c.b16 %v4528, %v4524
    %v4845 = vpack.c.b16 %v4529, %v4525
    %v4846 = vpack.c.b16 %v4530, %v4526
    %v4847 = vpack.c.b16 %v4535, %v4531
    %v4848 = vpack.c.b16 %v4536, %v4532
    %v4849 = vpack.c.b16 %v4537, %v4533
    %v4850 = vpack.c.b16 %v4538, %v4534
    %v4851 = vpack.c.b16 %v4543, %v4539
    %v4852 = vpack.c.b16 %v4544, %v4540
    %v4853 = vpack.c.b16 %v4545, %v4541
    %v4854 = vpack.c.b16 %v4546, %v4542
    %v4855 = vpack.c.b16 %v4551, %v4547
    %v4856 = vpack.c.b16 %v4552, %v4548
    %v4857 = vpack.c.b16 %v4553, %v4549
    %v4858 = vpack.c.b16 %v4554, %v4550
    %v4859 = vpack.c.b16 %v4559, %v4555
    %v4860 = vpack.c.b16 %v4560, %v4556
    %v4861 = vpack.c.b16 %v4561, %v4557
    %v4862 = vpack.c.b16 %v4562, %v4558
    %v4863 = vpack.c.b16 %v4567, %v4563
    %v4864 = vpack.c.b16 %v4568, %v4564
    %v4865 = vpack.c.b16 %v4569, %v4565
    %v4866 = vpack.c.b16 %v4570, %v4566
    %v4867 = vpack.c.b16 %v4575, %v4571
    %v4868 = vpack.c.b16 %v4576, %v4572
    %v4869 = vpack.c.b16 %v4577, %v4573
    %v4870 = vpack.c.b16 %v4578, %v4574
    %v4871 = vpack.c.b16 %v4583, %v4579
    %v4872 = vpack.c.b16 %v4584, %v4580
    %v4873 = vpack.c.b16 %v4585, %v4581
    %v4874 = vpack.c.b16 %v4586, %v4582
    %v4875 = vpack.c.b16 %v4591, %v4587
    %v4876 = vpack.c.b16 %v4592, %v4588
    %v4877 = vpack.c.b16 %v4593, %v4589
    %v4878 = vpack.c.b16 %v4594, %v4590
    %v4879 = vpack.c.b16 %v4599, %v4595
    %v4880 = vpack.c.b16 %v4600, %v4596
    %v4881 = vpack.c.b16 %v4601, %v4597
    %v4882 = vpack.c.b16 %v4602, %v4598
    %v4883 = vpack.c.b16 %v4607, %v4603
    %v4884 = vpack.c.b16 %v4608, %v4604
    %v4885 = vpack.c.b16 %v4609, %v4605
    %v4886 = vpack.c.b16 %v4610, %v4606
    %v4887 = vpack.c.b16 %v4615, %v4611
    %v4888 = vpack.c.b16 %v4616, %v4612
    %v4889 = vpack.c.b16 %v4617, %v4613
    %v4890 = vpack.c.b16 %v4618, %v4614
    %v4891 = vpack.c.b16 %v4623, %v4619
    %v4892 = vpack.c.b16 %v4624, %v4620
    %v4893 = vpack.c.b16 %v4625, %v4621
    %v4894 = vpack.c.b16 %v4626, %v4622
    %v4895 = vpack.c.b16 %v4631, %v4627
    %v4896 = vpack.c.b16 %v4632, %v4628
    %v4897 = vpack.c.b16 %v4633, %v4629
    %v4898 = vpack.c.b16 %v4634, %v4630
    %v4899 = vpack.c.b16 %v4639, %v4635
    %v4900 = vpack.c.b16 %v4640, %v4636
    %v4901 = vpack.c.b16 %v4641, %v4637
    %v4902 = vpack.c.b16 %v4642, %v4638
    %v4903 = vpack.c.b16 %v4647, %v4643
    %v4904 = vpack.c.b16 %v4648, %v4644
    %v4905 = vpack.c.b16 %v4649, %v4645
    %v4906 = vpack.c.b16 %v4650, %v4646
    %5163 = vmatprep.subr.bf16.mxu0 %v4652
    %5164 = vmatpush1.bf16.msra.mxu0 %v4651
    %5165 = vmatprep.subr.bf16.mxu0 %v4656
    %5166 = vmatpush1.bf16.msra.mxu0 %v4655
    %5167 = vmatprep.subr.bf16.mxu0 %v4660
    %5168 = vmatpush1.bf16.msra.mxu0 %v4659
    %5169 = vmatprep.subr.bf16.mxu0 %v4664
    %5170 = vmatpush1.bf16.msra.mxu0 %v4663
    %5171 = vmatprep.subr.bf16.mxu0 %v4668
    %5172 = vmatpush1.bf16.msra.mxu0 %v4667
    %5173 = vmatprep.subr.bf16.mxu0 %v4672
    %5174 = vmatpush1.bf16.msra.mxu0 %v4671
    %5175 = vmatprep.subr.bf16.mxu0 %v4676
    %5176 = vmatpush1.bf16.msra.mxu0 %v4675
    %5177 = vmatprep.subr.bf16.mxu0 %v4680
    %5178 = vmatpush1.bf16.msra.mxu0 %v4679
    %5179 = vmatprep.subr.bf16.mxu0 %v4684
    %5180 = vmatpush1.bf16.msra.mxu0 %v4683
    %5181 = vmatprep.subr.bf16.mxu0 %v4688
    %5182 = vmatpush1.bf16.msra.mxu0 %v4687
    %5183 = vmatprep.subr.bf16.mxu0 %v4692
    %5184 = vmatpush1.bf16.msra.mxu0 %v4691
    %5185 = vmatprep.subr.bf16.mxu0 %v4696
    %5186 = vmatpush1.bf16.msra.mxu0 %v4695
    %5187 = vmatprep.subr.bf16.mxu0 %v4700
    %5188 = vmatpush1.bf16.msra.mxu0 %v4699
    %5189 = vmatprep.subr.bf16.mxu0 %v4704
    %5190 = vmatpush1.bf16.msra.mxu0 %v4703
    %5191 = vmatprep.subr.bf16.mxu0 %v4708
    %5192 = vmatpush1.bf16.msra.mxu0 %v4707
    %5193 = vmatprep.subr.bf16.mxu0 %v4712
    %5194 = vmatpush1.bf16.msra.mxu0 %v4711
    %5195 = vmatprep.mubr.bf16.mxu0 %v3598
    %5196 = vmatmul.mubr.bf16.gmra.mrb[0].mxu0 %v3597
    %v5197 = vpop.f32.mrb[0].mxu0
    %v5198 = vadd.f32 %v3866, %v5197
    %v5199 = vpop.f32.mrb[0].mxu0
    %v5200 = vadd.f32 %v3870, %v5199
    %v5201 = vpop.f32.mrb[0].mxu0
    %v5202 = vpop.f32.mrb[0].mxu0
    %5203 = vdwg.mxu0
    %5204 = vmatprep.subr.bf16.mxu0 %v4716
    %5205 = vmatpush1.bf16.msra.mxu0 %v4715
    %5206 = vmatprep.subr.bf16.mxu0 %v4720
    %5207 = vmatpush1.bf16.msra.mxu0 %v4719
    %5208 = vmatprep.subr.bf16.mxu0 %v4724
    %5209 = vmatpush1.bf16.msra.mxu0 %v4723
    %5210 = vmatprep.subr.bf16.mxu0 %v4728
    %5211 = vmatpush1.bf16.msra.mxu0 %v4727
    %5212 = vmatprep.subr.bf16.mxu0 %v4732
    %5213 = vmatpush1.bf16.msra.mxu0 %v4731
    %5214 = vmatprep.subr.bf16.mxu0 %v4736
    %5215 = vmatpush1.bf16.msra.mxu0 %v4735
    %5216 = vmatprep.subr.bf16.mxu0 %v4740
    %5217 = vmatpush1.bf16.msra.mxu0 %v4739
    %5218 = vmatprep.subr.bf16.mxu0 %v4744
    %5219 = vmatpush1.bf16.msra.mxu0 %v4743
    %5220 = vmatprep.subr.bf16.mxu0 %v4748
    %5221 = vmatpush1.bf16.msra.mxu0 %v4747
    %5222 = vmatprep.subr.bf16.mxu0 %v4752
    %5223 = vmatpush1.bf16.msra.mxu0 %v4751
    %5224 = vmatprep.subr.bf16.mxu0 %v4756
    %5225 = vmatpush1.bf16.msra.mxu0 %v4755
    %5226 = vmatprep.subr.bf16.mxu0 %v4760
    %5227 = vmatpush1.bf16.msra.mxu0 %v4759
    %5228 = vmatprep.subr.bf16.mxu0 %v4764
    %5229 = vmatpush1.bf16.msra.mxu0 %v4763
    %5230 = vmatprep.subr.bf16.mxu0 %v4768
    %5231 = vmatpush1.bf16.msra.mxu0 %v4767
    %5232 = vmatprep.subr.bf16.mxu0 %v4772
    %5233 = vmatpush1.bf16.msra.mxu0 %v4771
    %5234 = vmatprep.subr.bf16.mxu0 %v4776
    %5235 = vmatpush1.bf16.msra.mxu0 %v4775
    %5236 = vmatprep.mubr.bf16.mxu0 %v3600
    %5237 = vmatmul.mubr.bf16.gmra.mrb[0].mxu0 %v3599
    %v5238 = vpop.f32.mrb[0].mxu0
    %v5239 = vadd.f32 %v5198, %v5238
    %v5240 = vpop.f32.mrb[0].mxu0
    %v5241 = vadd.f32 %v5200, %v5240
    %v5242 = vpop.f32.mrb[0].mxu0
    %v5243 = vpop.f32.mrb[0].mxu0
    %5244 = vdwg.mxu0
    %5245 = vmatprep.subr.bf16.mxu0 %v4780
    %5246 = vmatpush1.bf16.msra.mxu0 %v4779
    %5247 = vmatprep.subr.bf16.mxu0 %v4784
    %5248 = vmatpush1.bf16.msra.mxu0 %v4783
    %5249 = vmatprep.subr.bf16.mxu0 %v4788
    %5250 = vmatpush1.bf16.msra.mxu0 %v4787
    %5251 = vmatprep.subr.bf16.mxu0 %v4792
    %5252 = vmatpush1.bf16.msra.mxu0 %v4791
    %5253 = vmatprep.subr.bf16.mxu0 %v4796
    %5254 = vmatpush1.bf16.msra.mxu0 %v4795
    %5255 = vmatprep.subr.bf16.mxu0 %v4800
    %5256 = vmatpush1.bf16.msra.mxu0 %v4799
    %5257 = vmatprep.subr.bf16.mxu0 %v4804
    %5258 = vmatpush1.bf16.msra.mxu0 %v4803
    %5259 = vmatprep.subr.bf16.mxu0 %v4808
    %5260 = vmatpush1.bf16.msra.mxu0 %v4807
    %5261 = vmatprep.subr.bf16.mxu0 %v4812
    %5262 = vmatpush1.bf16.msra.mxu0 %v4811
    %5263 = vmatprep.subr.bf16.mxu0 %v4816
    %5264 = vmatpush1.bf16.msra.mxu0 %v4815
    %5265 = vmatprep.subr.bf16.mxu0 %v4820
    %5266 = vmatpush1.bf16.msra.mxu0 %v4819
    %5267 = vmatprep.subr.bf16.mxu0 %v4824
    %5268 = vmatpush1.bf16.msra.mxu0 %v4823
    %5269 = vmatprep.subr.bf16.mxu0 %v4828
    %5270 = vmatpush1.bf16.msra.mxu0 %v4827
    %5271 = vmatprep.subr.bf16.mxu0 %v4832
    %5272 = vmatpush1.bf16.msra.mxu0 %v4831
    %5273 = vmatprep.subr.bf16.mxu0 %v4836
    %5274 = vmatpush1.bf16.msra.mxu0 %v4835
    %5275 = vmatprep.subr.bf16.mxu0 %v4840
    %5276 = vmatpush1.bf16.msra.mxu0 %v4839
    %5277 = vmatprep.mubr.bf16.mxu0 %v3602
    %5278 = vmatmul.mubr.bf16.gmra.mrb[0].mxu0 %v3601
    %v5279 = vpop.f32.mrb[0].mxu0
    %v5280 = vadd.f32 %v5239, %v5279
    %v5281 = vpop.f32.mrb[0].mxu0
    %v5282 = vadd.f32 %v5241, %v5281
    %v5283 = vpop.f32.mrb[0].mxu0
    %v5284 = vpop.f32.mrb[0].mxu0
    %5285 = vdwg.mxu0
    %5286 = vmatprep.subr.bf16.mxu0 %v4844
    %5287 = vmatpush1.bf16.msra.mxu0 %v4843
    %5288 = vmatprep.subr.bf16.mxu0 %v4848
    %5289 = vmatpush1.bf16.msra.mxu0 %v4847
    %5290 = vmatprep.subr.bf16.mxu0 %v4852
    %5291 = vmatpush1.bf16.msra.mxu0 %v4851
    %5292 = vmatprep.subr.bf16.mxu0 %v4856
    %5293 = vmatpush1.bf16.msra.mxu0 %v4855
    %5294 = vmatprep.subr.bf16.mxu0 %v4860
    %5295 = vmatpush1.bf16.msra.mxu0 %v4859
    %5296 = vmatprep.subr.bf16.mxu0 %v4864
    %5297 = vmatpush1.bf16.msra.mxu0 %v4863
    %5298 = vmatprep.subr.bf16.mxu0 %v4868
    %5299 = vmatpush1.bf16.msra.mxu0 %v4867
    %5300 = vmatprep.subr.bf16.mxu0 %v4872
    %5301 = vmatpush1.bf16.msra.mxu0 %v4871
    %5302 = vmatprep.subr.bf16.mxu0 %v4876
    %5303 = vmatpush1.bf16.msra.mxu0 %v4875
    %5304 = vmatprep.subr.bf16.mxu0 %v4880
    %5305 = vmatpush1.bf16.msra.mxu0 %v4879
    %5306 = vmatprep.subr.bf16.mxu0 %v4884
    %5307 = vmatpush1.bf16.msra.mxu0 %v4883
    %5308 = vmatprep.subr.bf16.mxu0 %v4888
    %5309 = vmatpush1.bf16.msra.mxu0 %v4887
    %5310 = vmatprep.subr.bf16.mxu0 %v4892
    %5311 = vmatpush1.bf16.msra.mxu0 %v4891
    %5312 = vmatprep.subr.bf16.mxu0 %v4896
    %5313 = vmatpush1.bf16.msra.mxu0 %v4895
    %5314 = vmatprep.subr.bf16.mxu0 %v4900
    %5315 = vmatpush1.bf16.msra.mxu0 %v4899
    %5316 = vmatprep.subr.bf16.mxu0 %v4904
    %5317 = vmatpush1.bf16.msra.mxu0 %v4903
    %5318 = vmatprep.mubr.bf16.mxu0 %v3604
    %5319 = vmatmul.mubr.bf16.gmra.mrb[0].mxu0 %v3603
    %v5320 = vpop.f32.mrb[0].mxu0
    %v5321 = vadd.f32 %v5280, %v5320
    %v5322 = vpop.f32.mrb[0].mxu0
    %v5323 = vadd.f32 %v5282, %v5322
    %v5324 = vpop.f32.mrb[0].mxu0
    %v5325 = vpop.f32.mrb[0].mxu0
    %5326 = vdwg.mxu0
    %5327 = vmatprep.subr.bf16.mxu0 %v4654
    %5328 = vmatpush1.bf16.msra.mxu0 %v4653
    %5329 = vmatprep.subr.bf16.mxu0 %v4658
    %5330 = vmatpush1.bf16.msra.mxu0 %v4657
    %5331 = vmatprep.subr.bf16.mxu0 %v4662
    %5332 = vmatpush1.bf16.msra.mxu0 %v4661
    %5333 = vmatprep.subr.bf16.mxu0 %v4666
    %5334 = vmatpush1.bf16.msra.mxu0 %v4665
    %5335 = vmatprep.subr.bf16.mxu0 %v4670
    %5336 = vmatpush1.bf16.msra.mxu0 %v4669
    %5337 = vmatprep.subr.bf16.mxu0 %v4674
    %5338 = vmatpush1.bf16.msra.mxu0 %v4673
    %5339 = vmatprep.subr.bf16.mxu0 %v4678
    %5340 = vmatpush1.bf16.msra.mxu0 %v4677
    %5341 = vmatprep.subr.bf16.mxu0 %v4682
    %5342 = vmatpush1.bf16.msra.mxu0 %v4681
    %5343 = vmatprep.subr.bf16.mxu0 %v4686
    %5344 = vmatpush1.bf16.msra.mxu0 %v4685
    %5345 = vmatprep.subr.bf16.mxu0 %v4690
    %5346 = vmatpush1.bf16.msra.mxu0 %v4689
    %5347 = vmatprep.subr.bf16.mxu0 %v4694
    %5348 = vmatpush1.bf16.msra.mxu0 %v4693
    %5349 = vmatprep.subr.bf16.mxu0 %v4698
    %5350 = vmatpush1.bf16.msra.mxu0 %v4697
    %5351 = vmatprep.subr.bf16.mxu0 %v4702
    %5352 = vmatpush1.bf16.msra.mxu0 %v4701
    %5353 = vmatprep.subr.bf16.mxu0 %v4706
    %5354 = vmatpush1.bf16.msra.mxu0 %v4705
    %5355 = vmatprep.subr.bf16.mxu0 %v4710
    %5356 = vmatpush1.bf16.msra.mxu0 %v4709
    %5357 = vmatprep.subr.bf16.mxu0 %v4714
    %5358 = vmatpush1.bf16.msra.mxu0 %v4713
    %5359 = vmatprep.mubr.bf16.mxu0 %v3598
    %5360 = vmatmul.mubr.bf16.gmra.mrb[0].mxu0 %v3597
    %v5361 = vpop.f32.mrb[0].mxu0
    %v5362 = vadd.f32 %v3874, %v5361
    %v5363 = vpop.f32.mrb[0].mxu0
    %v5364 = vadd.f32 %v3878, %v5363
    %v5365 = vpop.f32.mrb[0].mxu0
    %v5366 = vpop.f32.mrb[0].mxu0
    %5367 = vdwg.mxu0
    %5368 = vmatprep.subr.bf16.mxu0 %v4718
    %5369 = vmatpush1.bf16.msra.mxu0 %v4717
    %5370 = vmatprep.subr.bf16.mxu0 %v4722
    %5371 = vmatpush1.bf16.msra.mxu0 %v4721
    %5372 = vmatprep.subr.bf16.mxu0 %v4726
    %5373 = vmatpush1.bf16.msra.mxu0 %v4725
    %5374 = vmatprep.subr.bf16.mxu0 %v4730
    %5375 = vmatpush1.bf16.msra.mxu0 %v4729
    %5376 = vmatprep.subr.bf16.mxu0 %v4734
    %5377 = vmatpush1.bf16.msra.mxu0 %v4733
    %5378 = vmatprep.subr.bf16.mxu0 %v4738
    %5379 = vmatpush1.bf16.msra.mxu0 %v4737
    %5380 = vmatprep.subr.bf16.mxu0 %v4742
    %5381 = vmatpush1.bf16.msra.mxu0 %v4741
    %5382 = vmatprep.subr.bf16.mxu0 %v4746
    %5383 = vmatpush1.bf16.msra.mxu0 %v4745
    %5384 = vmatprep.subr.bf16.mxu0 %v4750
    %5385 = vmatpush1.bf16.msra.mxu0 %v4749
    %5386 = vmatprep.subr.bf16.mxu0 %v4754
    %5387 = vmatpush1.bf16.msra.mxu0 %v4753
    %5388 = vmatprep.subr.bf16.mxu0 %v4758
    %5389 = vmatpush1.bf16.msra.mxu0 %v4757
    %5390 = vmatprep.subr.bf16.mxu0 %v4762
    %5391 = vmatpush1.bf16.msra.mxu0 %v4761
    %5392 = vmatprep.subr.bf16.mxu0 %v4766
    %5393 = vmatpush1.bf16.msra.mxu0 %v4765
    %5394 = vmatprep.subr.bf16.mxu0 %v4770
    %5395 = vmatpush1.bf16.msra.mxu0 %v4769
    %5396 = vmatprep.subr.bf16.mxu0 %v4774
    %5397 = vmatpush1.bf16.msra.mxu0 %v4773
    %5398 = vmatprep.subr.bf16.mxu0 %v4778
    %5399 = vmatpush1.bf16.msra.mxu0 %v4777
    %5400 = vmatprep.mubr.bf16.mxu0 %v3600
    %5401 = vmatmul.mubr.bf16.gmra.mrb[0].mxu0 %v3599
    %v5402 = vpop.f32.mrb[0].mxu0
    %v5403 = vadd.f32 %v5362, %v5402
    %v5404 = vpop.f32.mrb[0].mxu0
    %v5405 = vadd.f32 %v5364, %v5404
    %v5406 = vpop.f32.mrb[0].mxu0
    %v5407 = vpop.f32.mrb[0].mxu0
    %5408 = vdwg.mxu0
    %5409 = vmatprep.subr.bf16.mxu0 %v4782
    %5410 = vmatpush1.bf16.msra.mxu0 %v4781
    %5411 = vmatprep.subr.bf16.mxu0 %v4786
    %5412 = vmatpush1.bf16.msra.mxu0 %v4785
    %5413 = vmatprep.subr.bf16.mxu0 %v4790
    %5414 = vmatpush1.bf16.msra.mxu0 %v4789
    %5415 = vmatprep.subr.bf16.mxu0 %v4794
    %5416 = vmatpush1.bf16.msra.mxu0 %v4793
    %5417 = vmatprep.subr.bf16.mxu0 %v4798
    %5418 = vmatpush1.bf16.msra.mxu0 %v4797
    %5419 = vmatprep.subr.bf16.mxu0 %v4802
    %5420 = vmatpush1.bf16.msra.mxu0 %v4801
    %5421 = vmatprep.subr.bf16.mxu0 %v4806
    %5422 = vmatpush1.bf16.msra.mxu0 %v4805
    %5423 = vmatprep.subr.bf16.mxu0 %v4810
    %5424 = vmatpush1.bf16.msra.mxu0 %v4809
    %5425 = vmatprep.subr.bf16.mxu0 %v4814
    %5426 = vmatpush1.bf16.msra.mxu0 %v4813
    %5427 = vmatprep.subr.bf16.mxu0 %v4818
    %5428 = vmatpush1.bf16.msra.mxu0 %v4817
    %5429 = vmatprep.subr.bf16.mxu0 %v4822
    %5430 = vmatpush1.bf16.msra.mxu0 %v4821
    %5431 = vmatprep.subr.bf16.mxu0 %v4826
    %5432 = vmatpush1.bf16.msra.mxu0 %v4825
    %5433 = vmatprep.subr.bf16.mxu0 %v4830
    %5434 = vmatpush1.bf16.msra.mxu0 %v4829
    %5435 = vmatprep.subr.bf16.mxu0 %v4834
    %5436 = vmatpush1.bf16.msra.mxu0 %v4833
    %5437 = vmatprep.subr.bf16.mxu0 %v4838
    %5438 = vmatpush1.bf16.msra.mxu0 %v4837
    %5439 = vmatprep.subr.bf16.mxu0 %v4842
    %5440 = vmatpush1.bf16.msra.mxu0 %v4841
    %5441 = vmatprep.mubr.bf16.mxu0 %v3602
    %5442 = vmatmul.mubr.bf16.gmra.mrb[0].mxu0 %v3601
    %v5443 = vpop.f32.mrb[0].mxu0
    %v5444 = vadd.f32 %v5403, %v5443
    %v5445 = vpop.f32.mrb[0].mxu0
    %v5446 = vadd.f32 %v5405, %v5445
    %v5447 = vpop.f32.mrb[0].mxu0
    %v5448 = vpop.f32.mrb[0].mxu0
    %5449 = vdwg.mxu0
    %5450 = vmatprep.subr.bf16.mxu0 %v4846
    %5451 = vmatpush1.bf16.msra.mxu0 %v4845
    %5452 = vmatprep.subr.bf16.mxu0 %v4850
    %5453 = vmatpush1.bf16.msra.mxu0 %v4849
    %5454 = vmatprep.subr.bf16.mxu0 %v4854
    %5455 = vmatpush1.bf16.msra.mxu0 %v4853
    %5456 = vmatprep.subr.bf16.mxu0 %v4858
    %5457 = vmatpush1.bf16.msra.mxu0 %v4857
    %5458 = vmatprep.subr.bf16.mxu0 %v4862
    %5459 = vmatpush1.bf16.msra.mxu0 %v4861
    %5460 = vmatprep.subr.bf16.mxu0 %v4866
    %5461 = vmatpush1.bf16.msra.mxu0 %v4865
    %5462 = vmatprep.subr.bf16.mxu0 %v4870
    %5463 = vmatpush1.bf16.msra.mxu0 %v4869
    %5464 = vmatprep.subr.bf16.mxu0 %v4874
    %5465 = vmatpush1.bf16.msra.mxu0 %v4873
    %5466 = vmatprep.subr.bf16.mxu0 %v4878
    %5467 = vmatpush1.bf16.msra.mxu0 %v4877
    %5468 = vmatprep.subr.bf16.mxu0 %v4882
    %5469 = vmatpush1.bf16.msra.mxu0 %v4881
    %5470 = vmatprep.subr.bf16.mxu0 %v4886
    %5471 = vmatpush1.bf16.msra.mxu0 %v4885
    %5472 = vmatprep.subr.bf16.mxu0 %v4890
    %5473 = vmatpush1.bf16.msra.mxu0 %v4889
    %5474 = vmatprep.subr.bf16.mxu0 %v4894
    %5475 = vmatpush1.bf16.msra.mxu0 %v4893
    %5476 = vmatprep.subr.bf16.mxu0 %v4898
    %5477 = vmatpush1.bf16.msra.mxu0 %v4897
    %5478 = vmatprep.subr.bf16.mxu0 %v4902
    %5479 = vmatpush1.bf16.msra.mxu0 %v4901
    %5480 = vmatprep.subr.bf16.mxu0 %v4906
    %5481 = vmatpush1.bf16.msra.mxu0 %v4905
    %5482 = vmatprep.mubr.bf16.mxu0 %v3604
    %5483 = vmatmul.mubr.bf16.gmra.mrb[0].mxu0 %v3603
    %v5484 = vpop.f32.mrb[0].mxu0
    %v5485 = vadd.f32 %v5444, %v5484
    %v5486 = vpop.f32.mrb[0].mxu0
    %v5487 = vadd.f32 %v5446, %v5486
    %v5488 = vpop.f32.mrb[0].mxu0
    %v5489 = vpop.f32.mrb[0].mxu0
    %5490 = vdwg.mxu0
    %v5491 = vmax.f32 %v5321, 0.0
    %v5492 = vmax.f32 %v5323, 0.0
    %v5493 = vmax.f32 %v5485, 0.0
    %v5494 = vmax.f32 %v5487, 0.0
    %v5495 = vpack.c.bf16 %v5491, %v5491
    %v5496 = vpack.c.bf16 %v5492, %v5492
    %v5497 = vpack.c.bf16 %v5493, %v5493
    %v5498 = vpack.c.bf16 %v5494, %v5494
    %v5499 = vld [vmem:[#allocation9] sm:$0xf]
    %v5500 = vld [vmem:[#allocation9 + $0x4] sm:$0xf]
    %v5501 = vld [vmem:[#allocation9 + $0x8] sm:$0xf]
    %v5502 = vld [vmem:[#allocation9 + $0xc] sm:$0xf]
    %v5503 = vld [vmem:[#allocation9 + $0x10] sm:$0xf]
    %v5504 = vld [vmem:[#allocation9 + $0x14] sm:$0xf]
    %v5505 = vld [vmem:[#allocation9 + $0x18] sm:$0xf]
    %v5506 = vld [vmem:[#allocation9 + $0x1c] sm:$0xf]
    %v5507 = vld [vmem:[#allocation9 + $0x20] sm:$0xf]
    %v5508 = vld [vmem:[#allocation9 + $0x24] sm:$0xf]
    %v5509 = vld [vmem:[#allocation9 + $0x28] sm:$0xf]
    %v5510 = vld [vmem:[#allocation9 + $0x2c] sm:$0xf]
    %v5511 = vld [vmem:[#allocation9 + $0x30] sm:$0xf]
    %v5512 = vld [vmem:[#allocation9 + $0x34] sm:$0xf]
    %v5513 = vld [vmem:[#allocation9 + $0x38] sm:$0xf]
    %v5514 = vld [vmem:[#allocation9 + $0x3c] sm:$0xf]
    %v5515 = vld [vmem:[#allocation9 + $0x40] sm:$0xf]
    %v5516 = vld [vmem:[#allocation9 + $0x44] sm:$0xf]
    %v5517 = vld [vmem:[#allocation9 + $0x48] sm:$0xf]
    %v5518 = vld [vmem:[#allocation9 + $0x4c] sm:$0xf]
    %v5519 = vld [vmem:[#allocation9 + $0x50] sm:$0xf]
    %v5520 = vld [vmem:[#allocation9 + $0x54] sm:$0xf]
    %v5521 = vld [vmem:[#allocation9 + $0x58] sm:$0xf]
    %v5522 = vld [vmem:[#allocation9 + $0x5c] sm:$0xf]
    %v5523 = vld [vmem:[#allocation9 + $0x60] sm:$0xf]
    %v5524 = vld [vmem:[#allocation9 + $0x64] sm:$0xf]
    %v5525 = vld [vmem:[#allocation9 + $0x68] sm:$0xf]
    %v5526 = vld [vmem:[#allocation9 + $0x6c] sm:$0xf]
    %v5527 = vld [vmem:[#allocation9 + $0x70] sm:$0xf]
    %v5528 = vld [vmem:[#allocation9 + $0x74] sm:$0xf]
    %v5529 = vld [vmem:[#allocation9 + $0x78] sm:$0xf]
    %v5530 = vld [vmem:[#allocation9 + $0x7c] sm:$0xf]
    %v5531 = vld [vmem:[#allocation9 + $0x80] sm:$0xf]
    %v5532 = vld [vmem:[#allocation9 + $0x84] sm:$0xf]
    %v5533 = vld [vmem:[#allocation9 + $0x88] sm:$0xf]
    %v5534 = vld [vmem:[#allocation9 + $0x8c] sm:$0xf]
    %v5535 = vld [vmem:[#allocation9 + $0x90] sm:$0xf]
    %v5536 = vld [vmem:[#allocation9 + $0x94] sm:$0xf]
    %v5537 = vld [vmem:[#allocation9 + $0x98] sm:$0xf]
    %v5538 = vld [vmem:[#allocation9 + $0x9c] sm:$0xf]
    %v5539 = vld [vmem:[#allocation9 + $0xa0] sm:$0xf]
    %v5540 = vld [vmem:[#allocation9 + $0xa4] sm:$0xf]
    %v5541 = vld [vmem:[#allocation9 + $0xa8] sm:$0xf]
    %v5542 = vld [vmem:[#allocation9 + $0xac] sm:$0xf]
    %v5543 = vld [vmem:[#allocation9 + $0xb0] sm:$0xf]
    %v5544 = vld [vmem:[#allocation9 + $0xb4] sm:$0xf]
    %v5545 = vld [vmem:[#allocation9 + $0xb8] sm:$0xf]
    %v5546 = vld [vmem:[#allocation9 + $0xbc] sm:$0xf]
    %v5547 = vld [vmem:[#allocation9 + $0xc0] sm:$0xf]
    %v5548 = vld [vmem:[#allocation9 + $0xc4] sm:$0xf]
    %v5549 = vld [vmem:[#allocation9 + $0xc8] sm:$0xf]
    %v5550 = vld [vmem:[#allocation9 + $0xcc] sm:$0xf]
    %v5551 = vld [vmem:[#allocation9 + $0xd0] sm:$0xf]
    %v5552 = vld [vmem:[#allocation9 + $0xd4] sm:$0xf]
    %v5553 = vld [vmem:[#allocation9 + $0xd8] sm:$0xf]
    %v5554 = vld [vmem:[#allocation9 + $0xdc] sm:$0xf]
    %v5555 = vld [vmem:[#allocation9 + $0xe0] sm:$0xf]
    %v5556 = vld [vmem:[#allocation9 + $0xe4] sm:$0xf]
    %v5557 = vld [vmem:[#allocation9 + $0xe8] sm:$0xf]
    %v5558 = vld [vmem:[#allocation9 + $0xec] sm:$0xf]
    %v5559 = vld [vmem:[#allocation9 + $0xf0] sm:$0xf]
    %v5560 = vld [vmem:[#allocation9 + $0xf4] sm:$0xf]
    %v5561 = vld [vmem:[#allocation9 + $0xf8] sm:$0xf]
    %v5562 = vld [vmem:[#allocation9 + $0xfc] sm:$0xf]
    %v5563 = vld [vmem:[#allocation10] sm:$0x1]
    %v5565 = vlaneseq
    %v5566 = vshrl.u32 %v5565, 7
    %v5567 = vsub.s32 0, %v5566
    %v5568 = vrot.slane %v5563, %v5567
    %v5634 = vunpack.c.l.b16 %v5499
    %v5635 = vunpack.c.l.b16 %v5500
    %v5636 = vunpack.c.l.b16 %v5501
    %v5637 = vunpack.c.l.b16 %v5502
    %v5638 = vunpack.c.l.b16 %v5503
    %v5639 = vunpack.c.l.b16 %v5504
    %v5640 = vunpack.c.l.b16 %v5505
    %v5641 = vunpack.c.l.b16 %v5506
    %v5642 = vunpack.c.l.b16 %v5507
    %v5643 = vunpack.c.l.b16 %v5508
    %v5644 = vunpack.c.l.b16 %v5509
    %v5645 = vunpack.c.l.b16 %v5510
    %v5646 = vunpack.c.l.b16 %v5511
    %v5647 = vunpack.c.l.b16 %v5512
    %v5648 = vunpack.c.l.b16 %v5513
    %v5649 = vunpack.c.l.b16 %v5514
    %v5650 = vunpack.c.l.b16 %v5515
    %v5651 = vunpack.c.l.b16 %v5516
    %v5652 = vunpack.c.l.b16 %v5517
    %v5653 = vunpack.c.l.b16 %v5518
    %v5654 = vunpack.c.l.b16 %v5519
    %v5655 = vunpack.c.l.b16 %v5520
    %v5656 = vunpack.c.l.b16 %v5521
    %v5657 = vunpack.c.l.b16 %v5522
    %v5658 = vunpack.c.l.b16 %v5523
    %v5659 = vunpack.c.l.b16 %v5524
    %v5660 = vunpack.c.l.b16 %v5525
    %v5661 = vunpack.c.l.b16 %v5526
    %v5662 = vunpack.c.l.b16 %v5527
    %v5663 = vunpack.c.l.b16 %v5528
    %v5664 = vunpack.c.l.b16 %v5529
    %v5665 = vunpack.c.l.b16 %v5530
    %v5666 = vunpack.c.l.b16 %v5531
    %v5667 = vunpack.c.l.b16 %v5532
    %v5668 = vunpack.c.l.b16 %v5533
    %v5669 = vunpack.c.l.b16 %v5534
    %v5670 = vunpack.c.l.b16 %v5535
    %v5671 = vunpack.c.l.b16 %v5536
    %v5672 = vunpack.c.l.b16 %v5537
    %v5673 = vunpack.c.l.b16 %v5538
    %v5674 = vunpack.c.l.b16 %v5539
    %v5675 = vunpack.c.l.b16 %v5540
    %v5676 = vunpack.c.l.b16 %v5541
    %v5677 = vunpack.c.l.b16 %v5542
    %v5678 = vunpack.c.l.b16 %v5543
    %v5679 = vunpack.c.l.b16 %v5544
    %v5680 = vunpack.c.l.b16 %v5545
    %v5681 = vunpack.c.l.b16 %v5546
    %v5682 = vunpack.c.l.b16 %v5547
    %v5683 = vunpack.c.l.b16 %v5548
    %v5684 = vunpack.c.l.b16 %v5549
    %v5685 = vunpack.c.l.b16 %v5550
    %v5686 = vunpack.c.l.b16 %v5551
    %v5687 = vunpack.c.l.b16 %v5552
    %v5688 = vunpack.c.l.b16 %v5553
    %v5689 = vunpack.c.l.b16 %v5554
    %v5690 = vunpack.c.l.b16 %v5555
    %v5691 = vunpack.c.l.b16 %v5556
    %v5692 = vunpack.c.l.b16 %v5557
    %v5693 = vunpack.c.l.b16 %v5558
    %v5694 = vunpack.c.l.b16 %v5559
    %v5695 = vunpack.c.l.b16 %v5560
    %v5696 = vunpack.c.l.b16 %v5561
    %v5697 = vunpack.c.l.b16 %v5562
    %v5698 = vpack.c.b16 %v5635, %v5634
    %v5699 = vpack.c.b16 %v5637, %v5636
    %v5700 = vpack.c.b16 %v5639, %v5638
    %v5701 = vpack.c.b16 %v5641, %v5640
    %v5702 = vpack.c.b16 %v5643, %v5642
    %v5703 = vpack.c.b16 %v5645, %v5644
    %v5704 = vpack.c.b16 %v5647, %v5646
    %v5705 = vpack.c.b16 %v5649, %v5648
    %v5706 = vpack.c.b16 %v5651, %v5650
    %v5707 = vpack.c.b16 %v5653, %v5652
    %v5708 = vpack.c.b16 %v5655, %v5654
    %v5709 = vpack.c.b16 %v5657, %v5656
    %v5710 = vpack.c.b16 %v5659, %v5658
    %v5711 = vpack.c.b16 %v5661, %v5660
    %v5712 = vpack.c.b16 %v5663, %v5662
    %v5713 = vpack.c.b16 %v5665, %v5664
    %v5714 = vpack.c.b16 %v5667, %v5666
    %v5715 = vpack.c.b16 %v5669, %v5668
    %v5716 = vpack.c.b16 %v5671, %v5670
    %v5717 = vpack.c.b16 %v5673, %v5672
    %v5718 = vpack.c.b16 %v5675, %v5674
    %v5719 = vpack.c.b16 %v5677, %v5676
    %v5720 = vpack.c.b16 %v5679, %v5678
    %v5721 = vpack.c.b16 %v5681, %v5680
    %v5722 = vpack.c.b16 %v5683, %v5682
    %v5723 = vpack.c.b16 %v5685, %v5684
    %v5724 = vpack.c.b16 %v5687, %v5686
    %v5725 = vpack.c.b16 %v5689, %v5688
    %v5726 = vpack.c.b16 %v5691, %v5690
    %v5727 = vpack.c.b16 %v5693, %v5692
    %v5728 = vpack.c.b16 %v5695, %v5694
    %v5729 = vpack.c.b16 %v5697, %v5696
    %5762 = vmatprep.subr.bf16.mxu0 0
    %5763 = vmatpush1.bf16.msra.mxu0 %v5698
    %5764 = vmatprep.subr.bf16.mxu0 0
    %5765 = vmatpush1.bf16.msra.mxu0 %v5699
    %5766 = vmatprep.subr.bf16.mxu0 0
    %5767 = vmatpush1.bf16.msra.mxu0 %v5700
    %5768 = vmatprep.subr.bf16.mxu0 0
    %5769 = vmatpush1.bf16.msra.mxu0 %v5701
    %5770 = vmatprep.subr.bf16.mxu0 0
    %5771 = vmatpush1.bf16.msra.mxu0 %v5702
    %5772 = vmatprep.subr.bf16.mxu0 0
    %5773 = vmatpush1.bf16.msra.mxu0 %v5703
    %5774 = vmatprep.subr.bf16.mxu0 0
    %5775 = vmatpush1.bf16.msra.mxu0 %v5704
    %5776 = vmatprep.subr.bf16.mxu0 0
    %5777 = vmatpush1.bf16.msra.mxu0 %v5705
    %5778 = vmatprep.subr.bf16.mxu0 0
    %5779 = vmatpush1.bf16.msra.mxu0 %v5706
    %5780 = vmatprep.subr.bf16.mxu0 0
    %5781 = vmatpush1.bf16.msra.mxu0 %v5707
    %5782 = vmatprep.subr.bf16.mxu0 0
    %5783 = vmatpush1.bf16.msra.mxu0 %v5708
    %5784 = vmatprep.subr.bf16.mxu0 0
    %5785 = vmatpush1.bf16.msra.mxu0 %v5709
    %5786 = vmatprep.subr.bf16.mxu0 0
    %5787 = vmatpush1.bf16.msra.mxu0 %v5710
    %5788 = vmatprep.subr.bf16.mxu0 0
    %5789 = vmatpush1.bf16.msra.mxu0 %v5711
    %5790 = vmatprep.subr.bf16.mxu0 0
    %5791 = vmatpush1.bf16.msra.mxu0 %v5712
    %5792 = vmatprep.subr.bf16.mxu0 0
    %5793 = vmatpush1.bf16.msra.mxu0 %v5713
    %5794 = vmatprep.mubr.bf16.mxu0 %v5496
    %5795 = vmatmul.mubr.bf16.gmra.mrb[0].mxu0 %v5495
    %v5796 = vpop.f32.mrb[0].mxu0
    %v5797 = vadd.f32 %v5568, %v5796
    %v5798 = vpop.f32.mrb[0].mxu0
    %v5799 = vpop.f32.mrb[0].mxu0
    %v5800 = vpop.f32.mrb[0].mxu0
    %5801 = vdwg.mxu0
    %5802 = vmatprep.subr.bf16.mxu0 0
    %5803 = vmatpush1.bf16.msra.mxu0 %v5714
    %5804 = vmatprep.subr.bf16.mxu0 0
    %5805 = vmatpush1.bf16.msra.mxu0 %v5715
    %5806 = vmatprep.subr.bf16.mxu0 0
    %5807 = vmatpush1.bf16.msra.mxu0 %v5716
    %5808 = vmatprep.subr.bf16.mxu0 0
    %5809 = vmatpush1.bf16.msra.mxu0 %v5717
    %5810 = vmatprep.subr.bf16.mxu0 0
    %5811 = vmatpush1.bf16.msra.mxu0 %v5718
    %5812 = vmatprep.subr.bf16.mxu0 0
    %5813 = vmatpush1.bf16.msra.mxu0 %v5719
    %5814 = vmatprep.subr.bf16.mxu0 0
    %5815 = vmatpush1.bf16.msra.mxu0 %v5720
    %5816 = vmatprep.subr.bf16.mxu0 0
    %5817 = vmatpush1.bf16.msra.mxu0 %v5721
    %5818 = vmatprep.subr.bf16.mxu0 0
    %5819 = vmatpush1.bf16.msra.mxu0 %v5722
    %5820 = vmatprep.subr.bf16.mxu0 0
    %5821 = vmatpush1.bf16.msra.mxu0 %v5723
    %5822 = vmatprep.subr.bf16.mxu0 0
    %5823 = vmatpush1.bf16.msra.mxu0 %v5724
    %5824 = vmatprep.subr.bf16.mxu0 0
    %5825 = vmatpush1.bf16.msra.mxu0 %v5725
    %5826 = vmatprep.subr.bf16.mxu0 0
    %5827 = vmatpush1.bf16.msra.mxu0 %v5726
    %5828 = vmatprep.subr.bf16.mxu0 0
    %5829 = vmatpush1.bf16.msra.mxu0 %v5727
    %5830 = vmatprep.subr.bf16.mxu0 0
    %5831 = vmatpush1.bf16.msra.mxu0 %v5728
    %5832 = vmatprep.subr.bf16.mxu0 0
    %5833 = vmatpush1.bf16.msra.mxu0 %v5729
    %5834 = vmatprep.mubr.bf16.mxu0 %v5498
    %5835 = vmatmul.mubr.bf16.gmra.mrb[0].mxu0 %v5497
    %v5836 = vpop.f32.mrb[0].mxu0
    %v5837 = vadd.f32 %v5797, %v5836
    %v5838 = vpop.f32.mrb[0].mxu0
    %v5839 = vpop.f32.mrb[0].mxu0
    %v5840 = vpop.f32.mrb[0].mxu0
    %5841 = vdwg.mxu0
    %v5842 = vmax.f32 %v5837, 0.0
    %v5843 = vld [vmem:[#allocation12] sm:$0xff]
    %v5844 = vld [vmem:[#allocation12 + $0x8] sm:$0xff]
    %v5845 = vld [vmem:[#allocation12 + $0x10] sm:$0xff]
    %v5846 = vld [vmem:[#allocation12 + $0x18] sm:$0xff]
    %v5847 = vld [vmem:[#allocation12 + $0x20] sm:$0xff]
    %v5848 = vld [vmem:[#allocation12 + $0x28] sm:$0xff]
    %v5849 = vld [vmem:[#allocation12 + $0x30] sm:$0xff]
    %v5850 = vld [vmem:[#allocation12 + $0x38] sm:$0xff]
    %v5851 = vld [vmem:[#allocation12 + $0x40] sm:$0xff]
    %v5852 = vld [vmem:[#allocation12 + $0x48] sm:$0xff]
    %v5853 = vld [vmem:[#allocation12 + $0x50] sm:$0xff]
    %v5854 = vld [vmem:[#allocation12 + $0x58] sm:$0xff]
    %v5855 = vld [vmem:[#allocation12 + $0x60] sm:$0xff]
    %v5856 = vld [vmem:[#allocation12 + $0x68] sm:$0xff]
    %v5857 = vld [vmem:[#allocation12 + $0x70] sm:$0xff]
    %v5858 = vld [vmem:[#allocation12 + $0x78] sm:$0xff]
    %v5859 = vld [vmem:[#allocation13] sm:$0x1]
    %v5861 = vlaneseq
    %v5862 = vshrl.u32 %v5861, 7
    %v5863 = vsub.s32 0, %v5862
    %v5864 = vrot.slane %v5859, %v5863
    %5866 = vmatprep.subr.mxu0 0.0
    %5867 = vmatpush1.msra.mxu0 %v5843
    %5868 = vmatprep.subr.mxu0 0.0
    %5869 = vmatpush1.msra.mxu0 %v5844
    %5870 = vmatprep.subr.mxu0 0.0
    %5871 = vmatpush1.msra.mxu0 %v5845
    %5872 = vmatprep.subr.mxu0 0.0
    %5873 = vmatpush1.msra.mxu0 %v5846
    %5874 = vmatprep.subr.mxu0 0.0
    %5875 = vmatpush1.msra.mxu0 %v5847
    %5876 = vmatprep.subr.mxu0 0.0
    %5877 = vmatpush1.msra.mxu0 %v5848
    %5878 = vmatprep.subr.mxu0 0.0
    %5879 = vmatpush1.msra.mxu0 %v5849
    %5880 = vmatprep.subr.mxu0 0.0
    %5881 = vmatpush1.msra.mxu0 %v5850
    %5882 = vmatprep.subr.mxu0 0.0
    %5883 = vmatpush1.msra.mxu0 %v5851
    %5884 = vmatprep.subr.mxu0 0.0
    %5885 = vmatpush1.msra.mxu0 %v5852
    %5886 = vmatprep.subr.mxu0 0.0
    %5887 = vmatpush1.msra.mxu0 %v5853
    %5888 = vmatprep.subr.mxu0 0.0
    %5889 = vmatpush1.msra.mxu0 %v5854
    %5890 = vmatprep.subr.mxu0 0.0
    %5891 = vmatpush1.msra.mxu0 %v5855
    %5892 = vmatprep.subr.mxu0 0.0
    %5893 = vmatpush1.msra.mxu0 %v5856
    %5894 = vmatprep.subr.mxu0 0.0
    %5895 = vmatpush1.msra.mxu0 %v5857
    %5896 = vmatprep.subr.mxu0 0.0
    %5897 = vmatpush1.msra.mxu0 %v5858
    %5898 = vmatprep.subr.mxu0 0.0
    %5899 = vmatpush1.msra.mxu0 0.0
    %5900 = vmatprep.subr.mxu0 0.0
    %5901 = vmatpush1.msra.mxu0 0.0
    %5902 = vmatprep.subr.mxu0 0.0
    %5903 = vmatpush1.msra.mxu0 0.0
    %5904 = vmatprep.subr.mxu0 0.0
    %5905 = vmatpush1.msra.mxu0 0.0
    %5906 = vmatprep.subr.mxu0 0.0
    %5907 = vmatpush1.msra.mxu0 0.0
    %5908 = vmatprep.subr.mxu0 0.0
    %5909 = vmatpush1.msra.mxu0 0.0
    %5910 = vmatprep.subr.mxu0 0.0
    %5911 = vmatpush1.msra.mxu0 0.0
    %5912 = vmatprep.subr.mxu0 0.0
    %5913 = vmatpush1.msra.mxu0 0.0
    %5914 = vmatprep.subr.mxu0 0.0
    %5915 = vmatpush1.msra.mxu0 0.0
    %5916 = vmatprep.subr.mxu0 0.0
    %5917 = vmatpush1.msra.mxu0 0.0
    %5918 = vmatprep.subr.mxu0 0.0
    %5919 = vmatpush1.msra.mxu0 0.0
    %5920 = vmatprep.subr.mxu0 0.0
    %5921 = vmatpush1.msra.mxu0 0.0
    %5922 = vmatprep.subr.mxu0 0.0
    %5923 = vmatpush1.msra.mxu0 0.0
    %5924 = vmatprep.subr.mxu0 0.0
    %5925 = vmatpush1.msra.mxu0 0.0
    %5926 = vmatprep.subr.mxu0 0.0
    %5927 = vmatpush1.msra.mxu0 0.0
    %5928 = vmatprep.subr.mxu0 0.0
    %5929 = vmatpush1.msra.mxu0 0.0
    %5930 = vmatprep.mubr.f32.mxu0 0.0
    %5931 = vmatmul.mubr.f32.gmra.mrb[0].mxu0 %v5842
    %v5932 = vpop.f32.mrb[0].mxu0
    %v5933 = vadd.f32 %v5864, %v5932
    %v5934 = vpop.f32.mrb[0].mxu0
    %5935 = vdwg.mxu0
    %5936 = vst [vmem:[%s9] sm:$0xff] %v5933
    // Predicated region
    $region70: #{qcnn_noisy_net_forward.1} parent=1 // pred_check
      _
    $region71: #{qcnn_noisy_net_forward.1} parent=1 // pred_check_branch
      %5938 = sbr.rel (0) target = $region73
    $region72: #{qcnn_noisy_net_forward.1} parent=1 // pred_region
      _
    $region73: #{qcnn_noisy_net_forward.1} parent=1 // pred_fallthru
      _
    // Predicated region
    $region74: #{qcnn_noisy_net_forward.1} parent=1 // pred_check
      _
    $region75: #{qcnn_noisy_net_forward.1} parent=1 // pred_check_branch
      %5940 = sbr.rel (0) target = $region77
    $region76: #{qcnn_noisy_net_forward.1} parent=1 // pred_region
      _
    $region77: #{qcnn_noisy_net_forward.1} parent=1 // pred_fallthru
      _
    %5941 = vsyncpa [#allocation3], 1
    %5942 = vsyncpa [#allocation5], 1
    %5943 = vsyncpa [#allocation8], 1
    %5944 = vsyncpa [#allocation11], 1
    %5945 = vsyncpa [#allocation14], 1

</llo_original>
